<compile_context>
chip_gen: v6e
topology: v6e:2x2x1
jax: 0.10.0
libtpu: 0.0.40
codegen_flags: <defaults>
</compile_context>

<pallas_src>
import functools
import math

import jax
import jax.numpy as jnp
from jax.experimental import pallas as pl
from jax.experimental.pallas import tpu as pltpu

MXU_DTYPE = jnp.bfloat16          # MXU fast path on v5e/v6e/v7x


def _round_up(x: int, m: int) -> int:
    return ((x + m - 1) // m) * m


def _pick_tile_n(n: int) -> int:
    """N tile: full-extent block when small (legal, no padding); 256/128 else."""
    if n <= 256:
        return n
    if n % 256 == 0:
        return 256
    if n % 128 == 0:
        return 128
    return n


def _pick_tile_m(m: int, cap: int = 512) -> int:
    """Largest M tile <= cap that divides M exactly (no activation padding).

    Prefers >= 2 blocks so a 'parallel' grid axis can be sharded across the
    two v7x TensorCores. Returns 0 if M > cap has no multiple-of-8 divisor
    (caller then pads M).
    """
    if m <= cap:
        if m % 16 == 0 and m >= 16:
            return m // 2
        return m                     # single full-extent block (always legal)
    for t in range(cap, 7, -8):
        if m % t == 0:
            return t
    return 0


# ----------------------------------------------------------------------------
# Kernel 1: kxk stride-1 'same' conv + folded BN + activation
#           (+ optional fused DropPath * shortcut residual)
#           -- im2col happens INSIDE the kernel via static shifted row slices.
# ----------------------------------------------------------------------------
def _fused_conv_kernel(x_ref, w_ref, scale_ref, bias_ref, *rest,
                       kh, kw, row_stride, m_loc, activation, fuse_residual):
    if fuse_residual:
        keep_ref, sc_ref, o_ref = rest
    else:
        (o_ref,) = rest

    tn = o_ref.shape[-1]
    acc = jnp.zeros((m_loc, tn), jnp.float32)
    # x_ref is the whole padded image of one sample, flattened to
    # (Hp_ext*Wp, Cin_p).  For a stride-1 'same' conv, the (ky,kx) window of
    # every output pixel is the same row slice shifted by ky*Wp + kx.
    for ky in range(kh):
        for kx in range(kw):
            off = ky * row_stride + kx
            a = x_ref[off:off + m_loc, :].astype(MXU_DTYPE)
            acc = acc + jnp.dot(a, w_ref[ky, kx],
                                preferred_element_type=jnp.float32)

    y = acc * scale_ref[...] + bias_ref[...]        # folded BatchNorm (f32)
    if activation == "silu":
        y = y * jax.nn.sigmoid(y)
    if fuse_residual:                               # DropPath * keep + shortcut
        y = y * keep_ref[...] + sc_ref[...].astype(jnp.float32)
    o_ref[...] = y.astype(o_ref.dtype)


def conv_kxk_bn_act(x_nhwc, weight, bn_scale, bn_bias, *, activation="silu",
                    out_channels_pad=None, shortcut=None, keep_scale=None,
                    out_dtype=jnp.float32):
    """Fused stride-1 'same' kxk conv + folded BN + activation (+ residual).

    Returns a "pseudo-row" layout (B, H*Wp, Cout_p): output pixels indexed
    with the *padded* width stride Wp.  Columns [W, Wp) of each row are
    garbage and are dropped by the caller (or simply carried through the
    following 1x1 projection, which is cheaper than re-packing in HBM).
    """
    B, H, W, Cin = x_nhwc.shape
    Cout, Cin_w, kh, kw = weight.shape
    assert Cin_w == Cin
    assert kh % 2 == 1 and kw % 2 == 1, "odd kernels only ('same' padding)"
    pad = (kh - 1) // 2
    Hp, Wp = H + 2 * pad, W + 2 * pad
    m_loc = H * Wp                                  # pseudo-rows per sample
    cin_p = _round_up(Cin, 8)
    n_p = out_channels_pad if out_channels_pad is not None else Cout
    extra = 1 if kw > 1 else 0                      # overrun row for max shift
    lin = (Hp + extra) * Wp

    # ONE fused pad: spatial halo + bottom overrun row + channel round-up.
    xp = jnp.pad(x_nhwc, ((0, 0), (pad, pad + extra), (pad, pad),
                          (0, cin_p - Cin)))
    xp = xp.reshape(B, lin, cin_p)                  # contiguous merge, no copy

    w = jnp.transpose(weight, (2, 3, 1, 0))         # (kh, kw, Cin, Cout)
    w = jnp.pad(w, ((0, 0), (0, 0), (0, cin_p - Cin), (0, n_p - Cout)))
    w = w.astype(MXU_DTYPE)
    scale = jnp.pad(bn_scale.astype(jnp.float32), (0, n_p - Cout)).reshape(1, n_p)
    bias = jnp.pad(bn_bias.astype(jnp.float32), (0, n_p - Cout)).reshape(1, n_p)

    tn = _pick_tile_n(n_p)
    fuse_residual = shortcut is not None

    in_specs = [
        pl.BlockSpec((None, lin, cin_p), lambda b, n: (b, 0, 0)),
        pl.BlockSpec((kh, kw, cin_p, tn), lambda b, n: (0, 0, 0, n)),
        pl.BlockSpec((1, tn), lambda b, n: (0, n)),
        pl.BlockSpec((1, tn), lambda b, n: (0, n)),
    ]
    args = [xp, w, scale, bias]
    if fuse_residual:
        assert n_p == Cout and shortcut.shape == (B, H, W, Cout)
        keep = keep_scale.reshape(B, 1, 1).astype(jnp.float32)
        sc = jnp.pad(shortcut, ((0, 0), (0, 0), (0, Wp - W), (0, 0)))
        sc = sc.reshape(B, m_loc, Cout).astype(jnp.float32)
        in_specs += [
            pl.BlockSpec((None, 1, 1), lambda b, n: (b, 0, 0)),
            pl.BlockSpec((None, m_loc, tn), lambda b, n: (b, 0, n)),
        ]
        args += [keep, sc]

    kernel = functools.partial(
        _fused_conv_kernel, kh=kh, kw=kw, row_stride=Wp, m_loc=m_loc,
        activation=activation, fuse_residual=fuse_residual)

    return pl.pallas_call(
        kernel,
        out_shape=jax.ShapeDtypeStruct((B, m_loc, n_p), out_dtype),
        grid=(B, n_p // tn),
        in_specs=in_specs,
        out_specs=pl.BlockSpec((None, m_loc, tn), lambda b, n: (b, 0, n)),
        compiler_params=pltpu.CompilerParams(
            dimension_semantics=("parallel", "parallel")),
    )(*args)


# ----------------------------------------------------------------------------
# Kernel 2: single-K-block matmul + folded BN + activation
#           (+ optional fused DropPath * shortcut residual)
#           -- used for the 1x1 projection conv and the strided fallback.
# ----------------------------------------------------------------------------
def _matmul_bn_kernel(a_ref, b_ref, scale_ref, bias_ref, *rest,
                      activation, fuse_residual):
    if fuse_residual:
        keep_ref, sc_ref, o_ref = rest
    else:
        (o_ref,) = rest

    y = jnp.dot(a_ref[...], b_ref[...], preferred_element_type=jnp.float32)
    y = y * scale_ref[...] + bias_ref[...]          # folded BatchNorm (f32)
    if activation == "silu":
        y = y * jax.nn.sigmoid(y)
    if fuse_residual:                               # per-row keep scale + add
        y = y * keep_ref[...] + sc_ref[...].astype(jnp.float32)
    o_ref[...] = y.astype(o_ref.dtype)


def matmul_bn_act(a, b, bn_scale, bn_bias, *, activation="none",
                  shortcut=None, keep_rows=None, out_dtype=jnp.float32):
    """(M,K)@(K,N) with folded-BN + activation (+DropPath*residual) epilogue.

    K and N are single full-extent blocks (no padding of small channel dims to
    128); M is tiled with the largest clean divisor (no activation padding).
    TODO(synk): for very large K a K-reduction grid axis with an accumulator
    would be needed; MBConv channel widths fit in one block.
    """
    M, K = a.shape
    Kb, N = b.shape
    assert Kb == K
    a = a.astype(MXU_DTYPE)
    b = b.astype(MXU_DTYPE)
    scale = bn_scale.astype(jnp.float32).reshape(1, N)
    bias = bn_bias.astype(jnp.float32).reshape(1, N)

    fuse_residual = shortcut is not None
    tm = _pick_tile_m(M)
    if tm == 0:                                     # rare: pad M (copy)
        Mp = _round_up(M, 256)
        tm = 256
        a = jnp.pad(a, ((0, Mp - M), (0, 0)))
        if fuse_residual:
            shortcut = jnp.pad(shortcut, ((0, Mp - M), (0, 0)))
            keep_rows = jnp.pad(keep_rows, ((0, Mp - M), (0, 0)))
    else:
        Mp = M
    tn = _pick_tile_n(N)

    in_specs = [
        pl.BlockSpec((tm, K), lambda i, j: (i, 0)),
        pl.BlockSpec((K, tn), lambda i, j: (0, j)),
        pl.BlockSpec((1, tn), lambda i, j: (0, j)),
        pl.BlockSpec((1, tn), lambda i, j: (0, j)),
    ]
    args = [a, b, scale, bias]
    if fuse_residual:
        in_specs += [
            pl.BlockSpec((tm, 1), lambda i, j: (i, 0)),
            pl.BlockSpec((tm, tn), lambda i, j: (i, j)),
        ]
        args += [keep_rows.astype(jnp.float32), shortcut.astype(jnp.float32)]

    kernel = functools.partial(_matmul_bn_kernel, activation=activation,
                               fuse_residual=fuse_residual)
    out = pl.pallas_call(
        kernel,
        out_shape=jax.ShapeDtypeStruct((Mp, N), out_dtype),
        grid=(Mp // tm, N // tn),
        in_specs=in_specs,
        out_specs=pl.BlockSpec((tm, tn), lambda i, j: (i, j)),
        compiler_params=pltpu.CompilerParams(
            dimension_semantics=("parallel", "parallel")),
    )(*args)
    return out if Mp == M else out[:M]


def _conv_im2col_bn_act(x_nhwc, weight, bn_scale, bn_bias, *, stride,
                        activation):
    """Fallback for strided convs: host-side im2col + the fused matmul kernel."""
    B, H, W, Cin = x_nhwc.shape
    Cout, _, kh, kw = weight.shape
    pad = (kh - 1) // 2
    Ho = (H + 2 * pad - kh) // stride + 1
    Wo = (W + 2 * pad - kw) // stride + 1
    xp = jnp.pad(x_nhwc, ((0, 0), (pad, pad), (pad, pad), (0, 0)))
    cols = [xp[:, ky:ky + stride * Ho:stride, kx:kx + stride * Wo:stride, :]
            for ky in range(kh) for kx in range(kw)]
    a = jnp.concatenate(cols, axis=-1).reshape(B * Ho * Wo, kh * kw * Cin)
    b = jnp.transpose(weight, (2, 3, 1, 0)).reshape(kh * kw * Cin, Cout)
    out = matmul_bn_act(a, b, bn_scale, bn_bias, activation=activation,
                        out_dtype=jnp.float32)
    return out.reshape(B, Ho, Wo, Cout)


# ----------------------------------------------------------------------------
# FusedMBConv module (forward-pass mirror of the PyTorch module)
# ----------------------------------------------------------------------------
def _fold_bn(gamma, beta, mean, var, eps):
    scale = gamma * jax.lax.rsqrt(var + eps)
    bias = beta - mean * scale
    return scale, bias


class FusedMBConv:
    def __init__(self, kernel_size, input_c, out_c, expand_ratio, stride,
                 se_ratio, drop_rate, *, key, eps=1e-5):
        assert stride in (1, 2)
        assert se_ratio == 0
        self.kernel_size = kernel_size
        self.input_c = input_c
        self.out_c = out_c
        self.stride = stride
        self.has_shortcut = (stride == 1 and input_c == out_c)
        self.has_expansion = (expand_ratio != 1)
        self.expanded_c = input_c * expand_ratio
        self.drop_rate = float(drop_rate)
        self.eps = eps
        self.training = True

        keys = jax.random.split(key, 4)

        def conv_w(k, cout, cin, ksz):
            fan_out = ksz * ksz * cout
            std = math.sqrt(2.0 / fan_out)
            return std * jax.random.normal(k, (cout, cin, ksz, ksz), jnp.float32)

        def bn_params(k, c):
            k1, k2, k3 = jax.random.split(k, 3)
            gamma = 1.0 + 0.1 * jax.random.normal(k1, (c,), jnp.float32)
            beta = 0.1 * jax.random.normal(k2, (c,), jnp.float32)
            mean = 0.1 * jax.random.normal(k3, (c,), jnp.float32)
            var = jnp.ones((c,), jnp.float32)
            return gamma, beta, mean, var

        if self.has_expansion:
            self.w_expand = conv_w(keys[0], self.expanded_c, input_c, kernel_size)
            self.bn1 = bn_params(keys[1], self.expanded_c)
            self.w_project = conv_w(keys[2], out_c, self.expanded_c, 1)
            self.bn2 = bn_params(keys[3], out_c)
        else:
            self.w_project = conv_w(keys[0], out_c, input_c, kernel_size)
            self.bn2 = bn_params(keys[1], out_c)

    # TODO(synk): in a full backbone, keep activations NHWC across blocks and
    # hoist these two transposes to the network entry/exit.
    def __call__(self, x_nchw, *, rng=None):
        x = jnp.transpose(x_nchw, (0, 2, 3, 1))     # NCHW -> NHWC
        y = self.forward_nhwc(x, rng=rng)
        return jnp.transpose(y, (0, 3, 1, 2))       # NHWC -> NCHW

    def forward_nhwc(self, x, *, rng=None):
        B, H, W, _ = x.shape

        keep_scale = None
        if self.has_shortcut:
            if self.training and self.drop_rate > 0:
                keep_prob = 1.0 - self.drop_rate
                k = rng if rng is not None else jax.random.PRNGKey(0)
                u = jax.random.uniform(k, (B,), dtype=jnp.float32)
                keep_scale = jnp.floor(keep_prob + u) / keep_prob
            else:
                keep_scale = jnp.ones((B,), jnp.float32)

        s2, b2 = _fold_bn(*self.bn2, self.eps)

        if self.has_expansion:
            s1, b1 = _fold_bn(*self.bn1, self.eps)
            cexp_p = _round_up(self.expanded_c, 8)
            w_proj = jnp.pad(
                self.w_project.reshape(self.out_c, self.expanded_c).T,
                ((0, cexp_p - self.expanded_c), (0, 0)))        # (Kp, Cout)

            if self.stride == 1:
                # kxk expand conv: in-kernel im2col, bf16 pseudo-row output.
                y1 = conv_kxk_bn_act(x, self.w_expand, s1, b1,
                                     activation="silu",
                                     out_channels_pad=cexp_p,
                                     out_dtype=MXU_DTYPE)
                pad = (self.kernel_size - 1) // 2
                Wp = W + 2 * pad
                m_loc = H * Wp
                a = y1.reshape(B * m_loc, cexp_p)   # free merge of leading dims

                shortcut_rows = keep_rows = None
                if self.has_shortcut:
                    # shortcut in the same pseudo-row layout (pad W only)
                    sc = jnp.pad(x, ((0, 0), (0, 0), (0, Wp - W), (0, 0)))
                    shortcut_rows = sc.reshape(B * m_loc, self.out_c)
                    keep_rows = jnp.repeat(keep_scale, m_loc).reshape(B * m_loc, 1)

                out_rows = matmul_bn_act(a, w_proj, s2, b2, activation="none",
                                         shortcut=shortcut_rows,
                                         keep_rows=keep_rows,
                                         out_dtype=jnp.float32)
                return out_rows.reshape(B, H, Wp, self.out_c)[:, :, :W, :]
            else:
                # stride-2: host-side im2col fallback (no shortcut possible)
                y1 = _conv_im2col_bn_act(x, self.w_expand, s1, b1,
                                         stride=self.stride, activation="silu")
                Bo, Ho, Wo, _ = y1.shape
                a = jnp.pad(y1.reshape(Bo * Ho * Wo, self.expanded_c),
                            ((0, 0), (0, cexp_p - self.expanded_c)))
                out_rows = matmul_bn_act(a, w_proj, s2, b2, activation="none",
                                         out_dtype=jnp.float32)
                return out_rows.reshape(Bo, Ho, Wo, self.out_c)
        else:
            if self.stride == 1:
                y = conv_kxk_bn_act(
                    x, self.w_project, s2, b2, activation="silu",
                    shortcut=x if self.has_shortcut else None,
                    keep_scale=keep_scale, out_dtype=jnp.float32)
                pad = (self.kernel_size - 1) // 2
                Wp = W + 2 * pad
                return y.reshape(B, H, Wp, self.out_c)[:, :, :W, :]
            else:
                return _conv_im2col_bn_act(x, self.w_project, s2, b2,
                                           stride=self.stride,
                                           activation="silu")


# ----------------------------------------------------------------------------
# Pure-JAX reference (same params / same host-side drop mask, and mirroring
# the kernels' bf16-input / f32-accumulation numerical scheme).
# ----------------------------------------------------------------------------
def _reference_forward(mod, x_nchw, rng):
    x = jnp.transpose(x_nchw, (0, 2, 3, 1))

    def cba(inp, w, bn, stride, act):
        gamma, beta, mean, var = bn
        pad = (w.shape[2] - 1) // 2
        out = jax.lax.conv_general_dilated(
            inp.astype(MXU_DTYPE),
            jnp.transpose(w, (2, 3, 1, 0)).astype(MXU_DTYPE),
            window_strides=(stride, stride),
            padding=[(pad, pad), (pad, pad)],
            dimension_numbers=("NHWC", "HWIO", "NHWC"),
            preferred_element_type=jnp.float32)
        out = (out - mean) * jax.lax.rsqrt(var + mod.eps) * gamma + beta
        if act == "silu":
            out = out * jax.nn.sigmoid(out)
        return out

    if mod.has_expansion:
        y = cba(x, mod.w_expand, mod.bn1, mod.stride, "silu")
        y = y.astype(MXU_DTYPE).astype(jnp.float32)   # bf16 handoff like kernel
        y = cba(y, mod.w_project, mod.bn2, 1, "none")
    else:
        y = cba(x, mod.w_project, mod.bn2, mod.stride, "silu")

    if mod.has_shortcut:
        B = x.shape[0]
        if mod.training and mod.drop_rate > 0:
            keep_prob = 1.0 - mod.drop_rate
            u = jax.random.uniform(rng, (B,), dtype=jnp.float32)
            scale = jnp.floor(keep_prob + u) / keep_prob
        else:
            scale = jnp.ones((B,), jnp.float32)
        y = y * scale.reshape(B, 1, 1, 1) + x
    return jnp.transpose(y, (0, 3, 1, 2))


if __name__ == "__main__":
    key = jax.random.PRNGKey(0)
    k_x, k_mod, k_drop = jax.random.split(key, 3)

    x = jax.random.normal(k_x, (2, 4, 16, 16), dtype=jnp.float32)   # NCHW

    mod = FusedMBConv(kernel_size=3, input_c=4, out_c=4, expand_ratio=4,
                      stride=1, se_ratio=0, drop_rate=0.2, key=k_mod)

    # training mode (DropPath active, mask drawn host-side from k_drop)
    mod.training = True
    y = jax.block_until_ready(mod(x, rng=k_drop))
    assert y.shape == x.shape
    assert bool(jnp.all(jnp.isfinite(y)))
    y_ref = _reference_forward(mod, x, k_drop)
    assert bool(jnp.allclose(y, y_ref, atol=2e-2, rtol=2e-2)), "train mismatch"

    # eval mode (DropPath is identity; residual add still applied)
    mod.training = False
    y_eval = jax.block_until_ready(mod(x, rng=k_drop))
    y_eval_ref = _reference_forward(mod, x, k_drop)
    assert bool(jnp.allclose(y_eval, y_eval_ref, atol=2e-2, rtol=2e-2)), \
        "eval mismatch"

    print("KERNEL_OK")
</pallas_src>

<mosaic_0001>
module attributes {stable_mosaic.version = 11 : i64} {
  func.func @_fused_conv_kernel(%arg0: i32, %arg1: i32, %arg2: memref<1x342x8xf32, #tpu.memory_space<vmem>>, %arg3: memref<3x3x8x16xbf16, #tpu.memory_space<vmem>>, %arg4: memref<1x16xf32, #tpu.memory_space<vmem>>, %arg5: memref<1x16xf32, #tpu.memory_space<vmem>>, %arg6: memref<1x288x16xbf16, #tpu.memory_space<vmem>>) attributes {dimension_semantics = [#tpu.dimension_semantics<parallel>, #tpu.dimension_semantics<parallel>], iteration_bounds = array<i64: 2, 1>, scalar_prefetch = 0 : i64, scratch_operands = 0 : i64, tpu.core_type = #tpu.core_type<tc>, window_params = [{transform_indices = @transform_0, window_bounds = array<i64: 1, 342, 8>}, {transform_indices = @transform_1, window_bounds = array<i64: 3, 3, 8, 16>}, {transform_indices = @transform_2, window_bounds = array<i64: 1, 16>}, {transform_indices = @transform_3, window_bounds = array<i64: 1, 16>}, {transform_indices = @transform_4, window_bounds = array<i64: 1, 288, 16>}]} {
    %cst = arith.constant 0.000000e+00 : f32
    %0 = vector.broadcast %cst : f32 to vector<288x16xf32>
    %c0 = arith.constant 0 : index
    %c0_0 = arith.constant 0 : index
    %c0_1 = arith.constant 0 : index
    %1 = vector.load %arg2[%c0, %c0_0, %c0_1] : memref<1x342x8xf32, #tpu.memory_space<vmem>>, vector<1x288x8xf32>
    %2 = vector.shape_cast %1 : vector<1x288x8xf32> to vector<288x8xf32>
    %3 = arith.truncf %2 : vector<288x8xf32> to vector<288x8xbf16>
    %c0_2 = arith.constant 0 : index
    %c0_3 = arith.constant 0 : index
    %c0_4 = arith.constant 0 : index
    %c0_5 = arith.constant 0 : index
    %4 = vector.load %arg3[%c0_2, %c0_3, %c0_4, %c0_5] : memref<3x3x8x16xbf16, #tpu.memory_space<vmem>>, vector<1x1x8x16xbf16>
    %5 = vector.shape_cast %4 : vector<1x1x8x16xbf16> to vector<8x16xbf16>
    %cst_6 = arith.constant dense<0.000000e+00> : vector<288x16xf32>
    %6 = tpu.matmul %3, %5, %cst_6 {dimension_numbers = #tpu.dot_dimension_numbers<[1], [0], [0], [1], [0, 0, 1, 1], [], []>} : vector<288x8xbf16>, vector<8x16xbf16>, vector<288x16xf32> -> vector<288x16xf32>
    %7 = arith.addf %0, %6 : vector<288x16xf32>
    %c0_7 = arith.constant 0 : index
    %c1 = arith.constant 1 : index
    %c0_8 = arith.constant 0 : index
    %8 = vector.load %arg2[%c0_7, %c1, %c0_8] : memref<1x342x8xf32, #tpu.memory_space<vmem>>, vector<1x288x8xf32>
    %9 = vector.shape_cast %8 : vector<1x288x8xf32> to vector<288x8xf32>
    %10 = arith.truncf %9 : vector<288x8xf32> to vector<288x8xbf16>
    %c0_9 = arith.constant 0 : index
    %c1_10 = arith.constant 1 : index
    %c0_11 = arith.constant 0 : index
    %c0_12 = arith.constant 0 : index
    %11 = vector.load %arg3[%c0_9, %c1_10, %c0_11, %c0_12] : memref<3x3x8x16xbf16, #tpu.memory_space<vmem>>, vector<1x1x8x16xbf16>
    %12 = vector.shape_cast %11 : vector<1x1x8x16xbf16> to vector<8x16xbf16>
    %cst_13 = arith.constant dense<0.000000e+00> : vector<288x16xf32>
    %13 = tpu.matmul %10, %12, %cst_13 {dimension_numbers = #tpu.dot_dimension_numbers<[1], [0], [0], [1], [0, 0, 1, 1], [], []>} : vector<288x8xbf16>, vector<8x16xbf16>, vector<288x16xf32> -> vector<288x16xf32>
    %14 = arith.addf %7, %13 : vector<288x16xf32>
    %c0_14 = arith.constant 0 : index
    %c2 = arith.constant 2 : index
    %c0_15 = arith.constant 0 : index
    %15 = vector.load %arg2[%c0_14, %c2, %c0_15] : memref<1x342x8xf32, #tpu.memory_space<vmem>>, vector<1x288x8xf32>
    %16 = vector.shape_cast %15 : vector<1x288x8xf32> to vector<288x8xf32>
    %17 = arith.truncf %16 : vector<288x8xf32> to vector<288x8xbf16>
    %c0_16 = arith.constant 0 : index
    %c2_17 = arith.constant 2 : index
    %c0_18 = arith.constant 0 : index
    %c0_19 = arith.constant 0 : index
    %18 = vector.load %arg3[%c0_16, %c2_17, %c0_18, %c0_19] : memref<3x3x8x16xbf16, #tpu.memory_space<vmem>>, vector<1x1x8x16xbf16>
    %19 = vector.shape_cast %18 : vector<1x1x8x16xbf16> to vector<8x16xbf16>
    %cst_20 = arith.constant dense<0.000000e+00> : vector<288x16xf32>
    %20 = tpu.matmul %17, %19, %cst_20 {dimension_numbers = #tpu.dot_dimension_numbers<[1], [0], [0], [1], [0, 0, 1, 1], [], []>} : vector<288x8xbf16>, vector<8x16xbf16>, vector<288x16xf32> -> vector<288x16xf32>
    %21 = arith.addf %14, %20 : vector<288x16xf32>
    %c0_21 = arith.constant 0 : index
    %c18 = arith.constant 18 : index
    %c0_22 = arith.constant 0 : index
    %22 = vector.load %arg2[%c0_21, %c18, %c0_22] : memref<1x342x8xf32, #tpu.memory_space<vmem>>, vector<1x288x8xf32>
    %23 = vector.shape_cast %22 : vector<1x288x8xf32> to vector<288x8xf32>
    %24 = arith.truncf %23 : vector<288x8xf32> to vector<288x8xbf16>
    %c1_23 = arith.constant 1 : index
    %c0_24 = arith.constant 0 : index
    %c0_25 = arith.constant 0 : index
    %c0_26 = arith.constant 0 : index
    %25 = vector.load %arg3[%c1_23, %c0_24, %c0_25, %c0_26] : memref<3x3x8x16xbf16, #tpu.memory_space<vmem>>, vector<1x1x8x16xbf16>
    %26 = vector.shape_cast %25 : vector<1x1x8x16xbf16> to vector<8x16xbf16>
    %cst_27 = arith.constant dense<0.000000e+00> : vector<288x16xf32>
    %27 = tpu.matmul %24, %26, %cst_27 {dimension_numbers = #tpu.dot_dimension_numbers<[1], [0], [0], [1], [0, 0, 1, 1], [], []>} : vector<288x8xbf16>, vector<8x16xbf16>, vector<288x16xf32> -> vector<288x16xf32>
    %28 = arith.addf %21, %27 : vector<288x16xf32>
    %c0_28 = arith.constant 0 : index
    %c19 = arith.constant 19 : index
    %c0_29 = arith.constant 0 : index
    %29 = vector.load %arg2[%c0_28, %c19, %c0_29] : memref<1x342x8xf32, #tpu.memory_space<vmem>>, vector<1x288x8xf32>
    %30 = vector.shape_cast %29 : vector<1x288x8xf32> to vector<288x8xf32>
    %31 = arith.truncf %30 : vector<288x8xf32> to vector<288x8xbf16>
    %c1_30 = arith.constant 1 : index
    %c1_31 = arith.constant 1 : index
    %c0_32 = arith.constant 0 : index
    %c0_33 = arith.constant 0 : index
    %32 = vector.load %arg3[%c1_30, %c1_31, %c0_32, %c0_33] : memref<3x3x8x16xbf16, #tpu.memory_space<vmem>>, vector<1x1x8x16xbf16>
    %33 = vector.shape_cast %32 : vector<1x1x8x16xbf16> to vector<8x16xbf16>
    %cst_34 = arith.constant dense<0.000000e+00> : vector<288x16xf32>
    %34 = tpu.matmul %31, %33, %cst_34 {dimension_numbers = #tpu.dot_dimension_numbers<[1], [0], [0], [1], [0, 0, 1, 1], [], []>} : vector<288x8xbf16>, vector<8x16xbf16>, vector<288x16xf32> -> vector<288x16xf32>
    %35 = arith.addf %28, %34 : vector<288x16xf32>
    %c0_35 = arith.constant 0 : index
    %c20 = arith.constant 20 : index
    %c0_36 = arith.constant 0 : index
    %36 = vector.load %arg2[%c0_35, %c20, %c0_36] : memref<1x342x8xf32, #tpu.memory_space<vmem>>, vector<1x288x8xf32>
    %37 = vector.shape_cast %36 : vector<1x288x8xf32> to vector<288x8xf32>
    %38 = arith.truncf %37 : vector<288x8xf32> to vector<288x8xbf16>
    %c1_37 = arith.constant 1 : index
    %c2_38 = arith.constant 2 : index
    %c0_39 = arith.constant 0 : index
    %c0_40 = arith.constant 0 : index
    %39 = vector.load %arg3[%c1_37, %c2_38, %c0_39, %c0_40] : memref<3x3x8x16xbf16, #tpu.memory_space<vmem>>, vector<1x1x8x16xbf16>
    %40 = vector.shape_cast %39 : vector<1x1x8x16xbf16> to vector<8x16xbf16>
    %cst_41 = arith.constant dense<0.000000e+00> : vector<288x16xf32>
    %41 = tpu.matmul %38, %40, %cst_41 {dimension_numbers = #tpu.dot_dimension_numbers<[1], [0], [0], [1], [0, 0, 1, 1], [], []>} : vector<288x8xbf16>, vector<8x16xbf16>, vector<288x16xf32> -> vector<288x16xf32>
    %42 = arith.addf %35, %41 : vector<288x16xf32>
    %c0_42 = arith.constant 0 : index
    %c36 = arith.constant 36 : index
    %c0_43 = arith.constant 0 : index
    %43 = vector.load %arg2[%c0_42, %c36, %c0_43] : memref<1x342x8xf32, #tpu.memory_space<vmem>>, vector<1x288x8xf32>
    %44 = vector.shape_cast %43 : vector<1x288x8xf32> to vector<288x8xf32>
    %45 = arith.truncf %44 : vector<288x8xf32> to vector<288x8xbf16>
    %c2_44 = arith.constant 2 : index
    %c0_45 = arith.constant 0 : index
    %c0_46 = arith.constant 0 : index
    %c0_47 = arith.constant 0 : index
    %46 = vector.load %arg3[%c2_44, %c0_45, %c0_46, %c0_47] : memref<3x3x8x16xbf16, #tpu.memory_space<vmem>>, vector<1x1x8x16xbf16>
    %47 = vector.shape_cast %46 : vector<1x1x8x16xbf16> to vector<8x16xbf16>
    %cst_48 = arith.constant dense<0.000000e+00> : vector<288x16xf32>
    %48 = tpu.matmul %45, %47, %cst_48 {dimension_numbers = #tpu.dot_dimension_numbers<[1], [0], [0], [1], [0, 0, 1, 1], [], []>} : vector<288x8xbf16>, vector<8x16xbf16>, vector<288x16xf32> -> vector<288x16xf32>
    %49 = arith.addf %42, %48 : vector<288x16xf32>
    %c0_49 = arith.constant 0 : index
    %c37 = arith.constant 37 : index
    %c0_50 = arith.constant 0 : index
    %50 = vector.load %arg2[%c0_49, %c37, %c0_50] : memref<1x342x8xf32, #tpu.memory_space<vmem>>, vector<1x288x8xf32>
    %51 = vector.shape_cast %50 : vector<1x288x8xf32> to vector<288x8xf32>
    %52 = arith.truncf %51 : vector<288x8xf32> to vector<288x8xbf16>
    %c2_51 = arith.constant 2 : index
    %c1_52 = arith.constant 1 : index
    %c0_53 = arith.constant 0 : index
    %c0_54 = arith.constant 0 : index
    %53 = vector.load %arg3[%c2_51, %c1_52, %c0_53, %c0_54] : memref<3x3x8x16xbf16, #tpu.memory_space<vmem>>, vector<1x1x8x16xbf16>
    %54 = vector.shape_cast %53 : vector<1x1x8x16xbf16> to vector<8x16xbf16>
    %cst_55 = arith.constant dense<0.000000e+00> : vector<288x16xf32>
    %55 = tpu.matmul %52, %54, %cst_55 {dimension_numbers = #tpu.dot_dimension_numbers<[1], [0], [0], [1], [0, 0, 1, 1], [], []>} : vector<288x8xbf16>, vector<8x16xbf16>, vector<288x16xf32> -> vector<288x16xf32>
    %56 = arith.addf %49, %55 : vector<288x16xf32>
    %c0_56 = arith.constant 0 : index
    %c38 = arith.constant 38 : index
    %c0_57 = arith.constant 0 : index
    %57 = vector.load %arg2[%c0_56, %c38, %c0_57] : memref<1x342x8xf32, #tpu.memory_space<vmem>>, vector<1x288x8xf32>
    %58 = vector.shape_cast %57 : vector<1x288x8xf32> to vector<288x8xf32>
    %59 = arith.truncf %58 : vector<288x8xf32> to vector<288x8xbf16>
    %c2_58 = arith.constant 2 : index
    %c2_59 = arith.constant 2 : index
    %c0_60 = arith.constant 0 : index
    %c0_61 = arith.constant 0 : index
    %60 = vector.load %arg3[%c2_58, %c2_59, %c0_60, %c0_61] : memref<3x3x8x16xbf16, #tpu.memory_space<vmem>>, vector<1x1x8x16xbf16>
    %61 = vector.shape_cast %60 : vector<1x1x8x16xbf16> to vector<8x16xbf16>
    %cst_62 = arith.constant dense<0.000000e+00> : vector<288x16xf32>
    %62 = tpu.matmul %59, %61, %cst_62 {dimension_numbers = #tpu.dot_dimension_numbers<[1], [0], [0], [1], [0, 0, 1, 1], [], []>} : vector<288x8xbf16>, vector<8x16xbf16>, vector<288x16xf32> -> vector<288x16xf32>
    %63 = arith.addf %56, %62 : vector<288x16xf32>
    %c0_63 = arith.constant 0 : index
    %c0_64 = arith.constant 0 : index
    %64 = vector.load %arg4[%c0_63, %c0_64] : memref<1x16xf32, #tpu.memory_space<vmem>>, vector<1x16xf32>
    %65 = vector.broadcast %64 : vector<1x16xf32> to vector<288x16xf32>
    %66 = arith.mulf %63, %65 : vector<288x16xf32>
    %c0_65 = arith.constant 0 : index
    %c0_66 = arith.constant 0 : index
    %67 = vector.load %arg5[%c0_65, %c0_66] : memref<1x16xf32, #tpu.memory_space<vmem>>, vector<1x16xf32>
    %68 = vector.broadcast %67 : vector<1x16xf32> to vector<288x16xf32>
    %69 = arith.addf %66, %68 : vector<288x16xf32>
    %70 = arith.negf %69 : vector<288x16xf32>
    %71 = math.exp %70 : vector<288x16xf32>
    %cst_67 = arith.constant 1.000000e+00 : f32
    %72 = vector.broadcast %cst_67 : f32 to vector<288x16xf32>
    %73 = arith.addf %72, %71 : vector<288x16xf32>
    %74 = arith.divf %72, %73 : vector<288x16xf32>
    %75 = arith.mulf %69, %74 : vector<288x16xf32>
    %76 = arith.truncf %75 : vector<288x16xf32> to vector<288x16xbf16>
    %c0_68 = arith.constant 0 : index
    %c0_69 = arith.constant 0 : index
    %c0_70 = arith.constant 0 : index
    %77 = vector.load %arg6[%c0_68, %c0_69, %c0_70] : memref<1x288x16xbf16, #tpu.memory_space<vmem>>, vector<1x288x16xbf16>
    %78 = vector.shape_cast %77 : vector<1x288x16xbf16> to vector<288x16xbf16>
    %79 = vector.shape_cast %76 : vector<288x16xbf16> to vector<1x288x16xbf16>
    tpu.vector_store %arg6[%c0_68, %c0_69, %c0_70], %79 {strides = array<i32>} : memref<1x288x16xbf16, #tpu.memory_space<vmem>>, vector<1x288x16xbf16>,
    return
  }
  func.func @transform_0(%arg0: i32, %arg1: i32) -> (i32, i32, i32) {
    %c0_i32 = arith.constant 0 : i32
    %c0_i32_0 = arith.constant 0 : i32
    %c0_i32_1 = arith.constant 0 : i32
    return %arg0, %c0_i32, %c0_i32_0 : i32, i32, i32
  }
  func.func @transform_1(%arg0: i32, %arg1: i32) -> (i32, i32, i32, i32) {
    %c0_i32 = arith.constant 0 : i32
    %c0_i32_0 = arith.constant 0 : i32
    %c0_i32_1 = arith.constant 0 : i32
    %c0_i32_2 = arith.constant 0 : i32
    return %c0_i32, %c0_i32_0, %c0_i32_1, %arg1 : i32, i32, i32, i32
  }
  func.func @transform_2(%arg0: i32, %arg1: i32) -> (i32, i32) {
    %c0_i32 = arith.constant 0 : i32
    %c0_i32_0 = arith.constant 0 : i32
    return %c0_i32, %arg1 : i32, i32
  }
  func.func @transform_3(%arg0: i32, %arg1: i32) -> (i32, i32) {
    %c0_i32 = arith.constant 0 : i32
    %c0_i32_0 = arith.constant 0 : i32
    return %c0_i32, %arg1 : i32, i32
  }
  func.func @transform_4(%arg0: i32, %arg1: i32) -> (i32, i32, i32) {
    %c0_i32 = arith.constant 0 : i32
    %c0_i32_0 = arith.constant 0 : i32
    return %arg0, %c0_i32, %arg1 : i32, i32, i32
  }
}

</mosaic_0001>

<llo_original>
// kernel: tpu_custom_call.1
$region0: #{tpu_custom_call.1}
  #allocation0 [shape = 'u32[]', space=smem, size = 0x4, offset = 0x4, fixed_abs, tag = 'smem constant byte address 0x4 - core index']
  #allocation1 [shape = 'u32[144,128]{1,0:T(1,128)}', space=vmem, size = 0x12000, scoped, tag = 'internal scratch']
  %s0 = inlined_call_operand.vmem [shape: f32[2,342,8], index: 0, kind: input, shape index: {}]
  %s1 = inlined_call_operand.vmem [shape: bf16[3,3,8,16], index: 1, kind: input, shape index: {}]
  %s2 = inlined_call_operand.vmem [shape: f32[1,16], index: 2, kind: input, shape index: {}]
  %s3 = inlined_call_operand.vmem [shape: f32[1,16], index: 3, kind: input, shape index: {}]
  %s4 = inlined_call_operand.vmem [shape: bf16[2,288,16], index: 4, kind: output, shape index: {}]
  %s5 = sld [smem:[#allocation0]]
  $region49: #{tpu_custom_call.1} parent=0
    _
  %s7 = ssub.s32 1, %s5
  %s8 = scalar_select 0, %s7, %s5
  loop: start=0, step=1, limit=4
  $region2: #{tpu_custom_call.1} parent=0 // loop_pre_header
    _
  $region3: #{tpu_custom_call.1} parent=0 // loop_header
    %s10 = sphi 0, %s14
    %p11 = scmp.ge.s32.totalorder %s10, 4
    %s17 = sphi 0, %s29
    %s18 = sphi 0, %s25
    %s19 = sphi 0, %s17
    %s20 = sphi 0, %s18
    %s21 = sphi 0, %s19
    %s22 = sphi 0, %s20
    %s32 = sphi 0, %s34
    %s35 = sphi 0, %s32
    %s36 = sphi 0, %s35
    %s52 = sphi 0, %s36
    %s58 = sphi 0, %s60
    %s61 = sphi 0, %s58
    %s62 = sphi 0, %s61
    %s78 = sphi 0, %s62
    %s84 = sphi 0, %s86
    %s87 = sphi 0, %s84
    %s88 = sphi 0, %s87
    %s104 = sphi 0, %s88
    %s110 = sphi 0, %s112
    %s113 = sphi 0, %s110
    %s114 = sphi 0, %s113
    %s130 = sphi 0, %s114
    %s138 = sphi 0, %s140
    %s141 = sphi 0, %s138
    %s142 = sphi 0, %s141
    %s158 = sphi 0, %s142
  $region4: #{tpu_custom_call.1} parent=0 // loop_header_branch
    %13 = sbr.rel (%p11) target = $region8
  $region5: #{tpu_custom_call.1} parent=0 // loop_body
    %s15 = ssub.s32 %s10, 1
    %s16 = ssub.s32 %s10, 2
    %s23 = sadd.s32 1, %s18
    %p24 = scmp.ge.s32.totalorder %s23, 1
    %s25 = scalar_select %p24, 0, %s23
    %s26 = sadd.s32 1, %s17
    %s27 = scalar_select %p24, %s26, %s17
    %p28 = scmp.ge.s32.totalorder %s27, 2
    %s29 = scalar_select %p28, 0, %s27
    %s30 = ssub.s32 %s17, %s29
    %p31 = scmp.eq.s32.totalorder %s30, 0
    %s33 = sadd.s32 %s32, 1
    %s34 = scalar_select %p31, %s32, %s33
    %p37 = pneg %p31
    %p38 = scmp.eq.s32.totalorder %s10, 1
    %p39 = por %p37, %p38
    %p40 = scmp.ne.s32.totalorder %s32, %s35
    %p41 = scmp.eq.s32.totalorder %s10, 0
    %p42 = por %p40, %p41
    %p43 = scmp.ne.s32.totalorder %s32, %s35
    %p44 = scmp.eq.s32.totalorder %s15, 1
    %p45 = por %p43, %p44
    %p46 = scmp.ne.s32.totalorder %s35, %s36
    %p47 = scmp.eq.s32.totalorder %s15, 0
    %p48 = por %p46, %p47
    %p49 = scmp.ne.s32.totalorder %s35, %s36
    %p50 = scmp.eq.s32.totalorder %s16, 1
    %p51 = por %p49, %p50
    %p53 = scmp.ne.s32.totalorder %s36, %s52
    %p54 = scmp.eq.s32.totalorder %s16, 0
    %p55 = por %p53, %p54
    %s56 = ssub.s32 %s18, %s25
    %p57 = scmp.eq.s32.totalorder %s56, 0
    %s59 = sadd.s32 %s58, 1
    %s60 = scalar_select %p57, %s58, %s59
    %p63 = pneg %p57
    %p64 = scmp.eq.s32.totalorder %s10, 1
    %p65 = por %p63, %p64
    %p66 = scmp.ne.s32.totalorder %s58, %s61
    %p67 = scmp.eq.s32.totalorder %s10, 0
    %p68 = por %p66, %p67
    %p69 = scmp.ne.s32.totalorder %s58, %s61
    %p70 = scmp.eq.s32.totalorder %s15, 1
    %p71 = por %p69, %p70
    %p72 = scmp.ne.s32.totalorder %s61, %s62
    %p73 = scmp.eq.s32.totalorder %s15, 0
    %p74 = por %p72, %p73
    %p75 = scmp.ne.s32.totalorder %s61, %s62
    %p76 = scmp.eq.s32.totalorder %s16, 1
    %p77 = por %p75, %p76
    %p79 = scmp.ne.s32.totalorder %s62, %s78
    %p80 = scmp.eq.s32.totalorder %s16, 0
    %p81 = por %p79, %p80
    %s82 = ssub.s32 %s18, %s25
    %p83 = scmp.eq.s32.totalorder %s82, 0
    %s85 = sadd.s32 %s84, 1
    %s86 = scalar_select %p83, %s84, %s85
    %p89 = pneg %p83
    %p90 = scmp.eq.s32.totalorder %s10, 1
    %p91 = por %p89, %p90
    %p92 = scmp.ne.s32.totalorder %s84, %s87
    %p93 = scmp.eq.s32.totalorder %s10, 0
    %p94 = por %p92, %p93
    %p95 = scmp.ne.s32.totalorder %s84, %s87
    %p96 = scmp.eq.s32.totalorder %s15, 1
    %p97 = por %p95, %p96
    %p98 = scmp.ne.s32.totalorder %s87, %s88
    %p99 = scmp.eq.s32.totalorder %s15, 0
    %p100 = por %p98, %p99
    %p101 = scmp.ne.s32.totalorder %s87, %s88
    %p102 = scmp.eq.s32.totalorder %s16, 1
    %p103 = por %p101, %p102
    %p105 = scmp.ne.s32.totalorder %s88, %s104
    %p106 = scmp.eq.s32.totalorder %s16, 0
    %p107 = por %p105, %p106
    %s108 = ssub.s32 %s18, %s25
    %p109 = scmp.eq.s32.totalorder %s108, 0
    %s111 = sadd.s32 %s110, 1
    %s112 = scalar_select %p109, %s110, %s111
    %p115 = pneg %p109
    %p116 = scmp.eq.s32.totalorder %s10, 1
    %p117 = por %p115, %p116
    %p118 = scmp.ne.s32.totalorder %s110, %s113
    %p119 = scmp.eq.s32.totalorder %s10, 0
    %p120 = por %p118, %p119
    %p121 = scmp.ne.s32.totalorder %s110, %s113
    %p122 = scmp.eq.s32.totalorder %s15, 1
    %p123 = por %p121, %p122
    %p124 = scmp.ne.s32.totalorder %s113, %s114
    %p125 = scmp.eq.s32.totalorder %s15, 0
    %p126 = por %p124, %p125
    %p127 = scmp.ne.s32.totalorder %s113, %s114
    %p128 = scmp.eq.s32.totalorder %s16, 1
    %p129 = por %p127, %p128
    %p131 = scmp.ne.s32.totalorder %s114, %s130
    %p132 = scmp.eq.s32.totalorder %s16, 0
    %p133 = por %p131, %p132
    %s134 = ssub.s32 %s17, %s29
    %s135 = ssub.s32 %s18, %s25
    %s136 = sor.u32 %s134, %s135
    %p137 = scmp.eq.s32.totalorder %s136, 0
    %s139 = sadd.s32 %s138, 1
    %s140 = scalar_select %p137, %s138, %s139
    %p143 = pneg %p137
    %p144 = scmp.eq.s32.totalorder %s10, 1
    %p145 = por %p143, %p144
    %p146 = scmp.ne.s32.totalorder %s138, %s141
    %p147 = scmp.eq.s32.totalorder %s10, 0
    %p148 = por %p146, %p147
    %p149 = scmp.ne.s32.totalorder %s138, %s141
    %p150 = scmp.eq.s32.totalorder %s15, 1
    %p151 = por %p149, %p150
    %p152 = scmp.ne.s32.totalorder %s141, %s142
    %p153 = scmp.eq.s32.totalorder %s15, 0
    %p154 = por %p152, %p153
    %p155 = scmp.ne.s32.totalorder %s141, %s142
    %p156 = scmp.eq.s32.totalorder %s16, 1
    %p157 = por %p155, %p156
    %p159 = scmp.ne.s32.totalorder %s142, %s158
    %p160 = scmp.eq.s32.totalorder %s16, 0
    %p161 = por %p159, %p160
    %p162 = scmp.le.s32.totalorder 1, %s10
    %p163 = scmp.lt.s32.totalorder %s10, 3
    %p164 = pnand %p162, %p163
    %p165 = pneg %p164
    // Predicated region
    $region9: #{tpu_custom_call.1} parent=5 // pred_check
      _
    $region10: #{tpu_custom_call.1} parent=5 // pred_check_branch
      %167 = sbr.rel (%p164) target = $region12
    $region11: #{tpu_custom_call.1} parent=5 // pred_region
      %s168 = ssub.s32 %s10, 1
      // Predicated region
      $region13: #{tpu_custom_call.1} parent=11 // pred_check
        %p169 = pneg %p74
      $region14: #{tpu_custom_call.1} parent=11 // pred_check_branch
        %171 = sbr.rel (%p169) target = $region16
      $region15: #{tpu_custom_call.1} parent=11 // pred_region
        %p172 = scmp.lt.s32.totalorder %s20, 0
        %s173 = scalar_select %p172, %s20, 0
        %s174 = smul.addr %s173, 4
        %s175 = scalar_lea.vmem %s1, %s174
      $region16: #{tpu_custom_call.1} parent=11 // pred_fallthru
        _
      // Predicated region
      $region17: #{tpu_custom_call.1} parent=11 // pred_check
        %p176 = pneg %p100
      $region18: #{tpu_custom_call.1} parent=11 // pred_check_branch
        %178 = sbr.rel (%p176) target = $region20
      $region19: #{tpu_custom_call.1} parent=11 // pred_region
        %p179 = scmp.lt.s32.totalorder %s20, 0
        %s180 = scalar_select %p179, %s20, 0
        %s181 = scalar_lea.vmem %s2, %s180
      $region20: #{tpu_custom_call.1} parent=11 // pred_fallthru
        _
      // Predicated region
      $region21: #{tpu_custom_call.1} parent=11 // pred_check
        %p182 = pneg %p126
      $region22: #{tpu_custom_call.1} parent=11 // pred_check_branch
        %184 = sbr.rel (%p182) target = $region24
      $region23: #{tpu_custom_call.1} parent=11 // pred_region
        %p185 = scmp.lt.s32.totalorder %s20, 0
        %s186 = scalar_select %p185, %s20, 0
        %s187 = scalar_lea.vmem %s3, %s186
      $region24: #{tpu_custom_call.1} parent=11 // pred_fallthru
        _
    $region12: #{tpu_custom_call.1} parent=5 // pred_fallthru
      _
    %p188 = scmp.lt.s32.totalorder %s10, 2
    // Predicated region
    $region25: #{tpu_custom_call.1} parent=5 // pred_check
      %p189 = pneg %p188
    $region26: #{tpu_custom_call.1} parent=5 // pred_check_branch
      %191 = sbr.rel (%p189) target = $region28
    $region27: #{tpu_custom_call.1} parent=5 // pred_region
      // Predicated region
      $region29: #{tpu_custom_call.1} parent=27 // pred_check
        %p192 = pneg %p42
      $region30: #{tpu_custom_call.1} parent=27 // pred_check_branch
        %194 = sbr.rel (%p192) target = $region32
      $region31: #{tpu_custom_call.1} parent=27 // pred_region
        %p195 = scmp.lt.s32.totalorder %s17, 1
        %s196 = scalar_select %p195, %s17, 1
        %s197 = smul.addr %s196, 43
        %s198 = smul.addr %s197, 8
        %s199 = scalar_lea.vmem %s0, %s198
      $region32: #{tpu_custom_call.1} parent=27 // pred_fallthru
        _
    $region28: #{tpu_custom_call.1} parent=5 // pred_fallthru
      _
    %p200 = scmp.le.s32.totalorder 1, %s10
    %p201 = scmp.lt.s32.totalorder %s10, 3
    %p202 = pnand %p200, %p201
    %p203 = pneg %p202
    // Predicated region
    $region33: #{tpu_custom_call.1} parent=5 // pred_check
      _
    $region34: #{tpu_custom_call.1} parent=5 // pred_check_branch
      %205 = sbr.rel (%p202) target = $region36
    $region35: #{tpu_custom_call.1} parent=5 // pred_region
      %s206 = ssub.s32 %s10, 1
      %p207 = scmp.lt.s32.totalorder %s19, 1
      %s208 = scalar_select %p207, %s19, 1
      %s209 = smul.addr %s208, 43
      %s210 = smul.addr %s209, 8
      %s211 = scalar_lea.vmem %s0, %s210
      %p212 = pneg %p48
      %p213 = pneg %p45
      %p214 = scmp.lt.s32.totalorder %s20, 0
      %s215 = scalar_select %p214, %s20, 0
      %s216 = smul.addr %s215, 4
      %s217 = scalar_lea.vmem %s1, %s216
      %p218 = pneg %p74
      %p219 = pneg %p71
      %p220 = scmp.lt.s32.totalorder %s20, 0
      %s221 = scalar_select %p220, %s20, 0
      %s222 = scalar_lea.vmem %s2, %s221
      %p223 = pneg %p100
      %p224 = pneg %p97
      %p225 = scmp.lt.s32.totalorder %s20, 0
      %s226 = scalar_select %p225, %s20, 0
      %s227 = scalar_lea.vmem %s3, %s226
      %p228 = pneg %p126
      %p229 = pneg %p123
      %p230 = pneg %p154
      %p231 = pneg %p151
      %p232 = scmp.lt.s32.totalorder %s19, 1
      %s233 = scalar_select %p232, %s19, 1
      %p234 = scmp.lt.s32.totalorder %s20, 0
      %s235 = scalar_select %p234, %s20, 0
      %s236 = smul.addr %s233, 36
      %s237 = sadd.s32 %s235, %s236
      %s238 = smul.addr %s237, 4
      %s239 = scalar_lea.vmem %s4, %s238
      %p240 = scmp.lt.s32.totalorder %s19, 1
      %s241 = scalar_select %p240, %s19, 1
      %s242 = smul.addr %s241, 43
      %s243 = smul.addr %s242, 8
      %s244 = scalar_lea.vmem %s0, %s243
      %p245 = scmp.lt.s32.totalorder %s20, 0
      %s246 = scalar_select %p245, %s20, 0
      %s247 = smul.addr %s246, 4
      %s248 = scalar_lea.vmem %s1, %s247
      %p249 = scmp.lt.s32.totalorder %s20, 0
      %s250 = scalar_select %p249, %s20, 0
      %s251 = scalar_lea.vmem %s2, %s250
      %p252 = scmp.lt.s32.totalorder %s20, 0
      %s253 = scalar_select %p252, %s20, 0
      %s254 = scalar_lea.vmem %s3, %s253
      %p255 = scmp.lt.s32.totalorder %s19, 1
      %s256 = scalar_select %p255, %s19, 1
      %p257 = scmp.lt.s32.totalorder %s20, 0
      %s258 = scalar_select %p257, %s20, 0
      %s259 = smul.addr %s256, 36
      %s260 = sadd.s32 %s258, %s259
      %s261 = smul.addr %s260, 4
      %s262 = scalar_lea.vmem %s4, %s261
      %v264 = vld [vmem:[%s244] sm:$0xff]
      %v265 = vld [vmem:[%s244 + $0x8] sm:$0xff]
      %v266 = vld [vmem:[%s244 + $0x10] sm:$0xff]
      %v267 = vld [vmem:[%s244 + $0x18] sm:$0xff]
      %v268 = vld [vmem:[%s244 + $0x20] sm:$0xff]
      %v269 = vld [vmem:[%s244 + $0x28] sm:$0xff]
      %v270 = vld [vmem:[%s244 + $0x30] sm:$0xff]
      %v271 = vld [vmem:[%s244 + $0x38] sm:$0xff]
      %v272 = vld [vmem:[%s244 + $0x40] sm:$0xff]
      %v273 = vld [vmem:[%s244 + $0x48] sm:$0xff]
      %v274 = vld [vmem:[%s244 + $0x50] sm:$0xff]
      %v275 = vld [vmem:[%s244 + $0x58] sm:$0xff]
      %v276 = vld [vmem:[%s244 + $0x60] sm:$0xff]
      %v277 = vld [vmem:[%s244 + $0x68] sm:$0xff]
      %v278 = vld [vmem:[%s244 + $0x70] sm:$0xff]
      %v279 = vld [vmem:[%s244 + $0x78] sm:$0xff]
      %v280 = vld [vmem:[%s244 + $0x80] sm:$0xff]
      %v281 = vld [vmem:[%s244 + $0x88] sm:$0xff]
      %v282 = vld [vmem:[%s244 + $0x90] sm:$0xff]
      %v283 = vld [vmem:[%s244 + $0x98] sm:$0xff]
      %v284 = vld [vmem:[%s244 + $0xa0] sm:$0xff]
      %v285 = vld [vmem:[%s244 + $0xa8] sm:$0xff]
      %v286 = vld [vmem:[%s244 + $0xb0] sm:$0xff]
      %v287 = vld [vmem:[%s244 + $0xb8] sm:$0xff]
      %v288 = vld [vmem:[%s244 + $0xc0] sm:$0xff]
      %v289 = vld [vmem:[%s244 + $0xc8] sm:$0xff]
      %v290 = vld [vmem:[%s244 + $0xd0] sm:$0xff]
      %v291 = vld [vmem:[%s244 + $0xd8] sm:$0xff]
      %v292 = vld [vmem:[%s244 + $0xe0] sm:$0xff]
      %v293 = vld [vmem:[%s244 + $0xe8] sm:$0xff]
      %v294 = vld [vmem:[%s244 + $0xf0] sm:$0xff]
      %v295 = vld [vmem:[%s244 + $0xf8] sm:$0xff]
      %v296 = vld [vmem:[%s244 + $0x100] sm:$0xff]
      %v297 = vld [vmem:[%s244 + $0x108] sm:$0xff]
      %v298 = vld [vmem:[%s244 + $0x110] sm:$0xff]
      %v299 = vld [vmem:[%s244 + $0x118] sm:$0xff]
      %v300 = vpack.c.bf16 %v265, %v264
      %v301 = vpack.c.bf16 %v267, %v266
      %v302 = vpack.c.bf16 %v269, %v268
      %v303 = vpack.c.bf16 %v271, %v270
      %v304 = vpack.c.bf16 %v273, %v272
      %v305 = vpack.c.bf16 %v275, %v274
      %v306 = vpack.c.bf16 %v277, %v276
      %v307 = vpack.c.bf16 %v279, %v278
      %v308 = vpack.c.bf16 %v281, %v280
      %v309 = vpack.c.bf16 %v283, %v282
      %v310 = vpack.c.bf16 %v285, %v284
      %v311 = vpack.c.bf16 %v287, %v286
      %v312 = vpack.c.bf16 %v289, %v288
      %v313 = vpack.c.bf16 %v291, %v290
      %v314 = vpack.c.bf16 %v293, %v292
      %v315 = vpack.c.bf16 %v295, %v294
      %v316 = vpack.c.bf16 %v297, %v296
      %v317 = vpack.c.bf16 %v299, %v298
      %v318 = vld [vmem:[%s248] sm:$0xf]
      %v319 = vld [vmem:[%s244 + $0x1] sm:$0xff]
      %v320 = vld [vmem:[%s244 + $0x9] sm:$0xff]
      %v321 = vld [vmem:[%s244 + $0x11] sm:$0xff]
      %v322 = vld [vmem:[%s244 + $0x19] sm:$0xff]
      %v323 = vld [vmem:[%s244 + $0x21] sm:$0xff]
      %v324 = vld [vmem:[%s244 + $0x29] sm:$0xff]
      %v325 = vld [vmem:[%s244 + $0x31] sm:$0xff]
      %v326 = vld [vmem:[%s244 + $0x39] sm:$0xff]
      %v327 = vld [vmem:[%s244 + $0x41] sm:$0xff]
      %v328 = vld [vmem:[%s244 + $0x49] sm:$0xff]
      %v329 = vld [vmem:[%s244 + $0x51] sm:$0xff]
      %v330 = vld [vmem:[%s244 + $0x59] sm:$0xff]
      %v331 = vld [vmem:[%s244 + $0x61] sm:$0xff]
      %v332 = vld [vmem:[%s244 + $0x69] sm:$0xff]
      %v333 = vld [vmem:[%s244 + $0x71] sm:$0xff]
      %v334 = vld [vmem:[%s244 + $0x79] sm:$0xff]
      %v335 = vld [vmem:[%s244 + $0x81] sm:$0xff]
      %v336 = vld [vmem:[%s244 + $0x89] sm:$0xff]
      %v337 = vld [vmem:[%s244 + $0x91] sm:$0xff]
      %v338 = vld [vmem:[%s244 + $0x99] sm:$0xff]
      %v339 = vld [vmem:[%s244 + $0xa1] sm:$0xff]
      %v340 = vld [vmem:[%s244 + $0xa9] sm:$0xff]
      %v341 = vld [vmem:[%s244 + $0xb1] sm:$0xff]
      %v342 = vld [vmem:[%s244 + $0xb9] sm:$0xff]
      %v343 = vld [vmem:[%s244 + $0xc1] sm:$0xff]
      %v344 = vld [vmem:[%s244 + $0xc9] sm:$0xff]
      %v345 = vld [vmem:[%s244 + $0xd1] sm:$0xff]
      %v346 = vld [vmem:[%s244 + $0xd9] sm:$0xff]
      %v347 = vld [vmem:[%s244 + $0xe1] sm:$0xff]
      %v348 = vld [vmem:[%s244 + $0xe9] sm:$0xff]
      %v349 = vld [vmem:[%s244 + $0xf1] sm:$0xff]
      %v350 = vld [vmem:[%s244 + $0xf9] sm:$0xff]
      %v351 = vld [vmem:[%s244 + $0x101] sm:$0xff]
      %v352 = vld [vmem:[%s244 + $0x109] sm:$0xff]
      %v353 = vld [vmem:[%s244 + $0x111] sm:$0xff]
      %v354 = vld [vmem:[%s244 + $0x119] sm:$0xff]
      %v355 = vpack.c.bf16 %v320, %v319
      %v356 = vpack.c.bf16 %v322, %v321
      %v357 = vpack.c.bf16 %v324, %v323
      %v358 = vpack.c.bf16 %v326, %v325
      %v359 = vpack.c.bf16 %v328, %v327
      %v360 = vpack.c.bf16 %v330, %v329
      %v361 = vpack.c.bf16 %v332, %v331
      %v362 = vpack.c.bf16 %v334, %v333
      %v363 = vpack.c.bf16 %v336, %v335
      %v364 = vpack.c.bf16 %v338, %v337
      %v365 = vpack.c.bf16 %v340, %v339
      %v366 = vpack.c.bf16 %v342, %v341
      %v367 = vpack.c.bf16 %v344, %v343
      %v368 = vpack.c.bf16 %v346, %v345
      %v369 = vpack.c.bf16 %v348, %v347
      %v370 = vpack.c.bf16 %v350, %v349
      %v371 = vpack.c.bf16 %v352, %v351
      %v372 = vpack.c.bf16 %v354, %v353
      %s373 = scalar_lea.vmem %s248, 4
      %v374 = vld [vmem:[%s373] sm:$0xf]
      %vm375 = vcmask 64512
      %v377 = vsel %vm375, %v355, 0
      %v380 = vsel %vm375, %v356, 0
      %v383 = vsel %vm375, %v357, 0
      %v386 = vsel %vm375, %v358, 0
      %v389 = vsel %vm375, %v359, 0
      %v392 = vsel %vm375, %v360, 0
      %v395 = vsel %vm375, %v361, 0
      %v398 = vsel %vm375, %v362, 0
      %v401 = vsel %vm375, %v363, 0
      %v404 = vsel %vm375, %v364, 0
      %v407 = vsel %vm375, %v365, 0
      %v410 = vsel %vm375, %v366, 0
      %v413 = vsel %vm375, %v367, 0
      %v416 = vsel %vm375, %v368, 0
      %v419 = vsel %vm375, %v369, 0
      %v422 = vsel %vm375, %v370, 0
      %v425 = vsel %vm375, %v371, 0
      %v428 = vsel %vm375, %v372, 0
      %vm430 = vcmask 1043456
      %v432 = vsel %vm430, %v374, 0
      %434 = vmatprep.subr.bf16.mxu0 0
      %435 = vmatpush1.bf16.msra.mxu0 0
      %436 = vmatprep.subr.bf16.mxu0 0
      %437 = vmatpush1.bf16.msra.mxu0 0
      %438 = vmatprep.subr.bf16.mxu0 0
      %439 = vmatpush1.bf16.msra.mxu0 0
      %440 = vmatprep.subr.bf16.mxu0 0
      %441 = vmatpush1.bf16.msra.mxu0 0
      %442 = vmatprep.subr.bf16.mxu0 0
      %443 = vmatpush1.bf16.msra.mxu0 0
      %444 = vmatprep.subr.bf16.mxu0 0
      %445 = vmatpush1.bf16.msra.mxu0 0
      %446 = vmatprep.subr.bf16.mxu0 0
      %447 = vmatpush1.bf16.msra.mxu0 0
      %448 = vmatprep.subr.bf16.mxu0 0
      %449 = vmatpush1.bf16.msra.mxu0 %v432
      %450 = vmatprep.subr.bf16.mxu0 0
      %451 = vmatpush2.bf16.msra.mxu0 0
      %452 = vmatprep.subr.bf16.mxu0 0
      %453 = vmatpush2.bf16.msra.mxu0 0
      %454 = vmatprep.subr.bf16.mxu0 0
      %455 = vmatpush2.bf16.msra.mxu0 0
      %456 = vmatprep.subr.bf16.mxu0 0
      %457 = vmatpush2.bf16.msra.mxu0 0
      %458 = vmatprep.subr.bf16.mxu0 0
      %459 = vmatpush2.bf16.msra.mxu0 0
      %460 = vmatprep.subr.bf16.mxu0 0
      %461 = vmatpush2.bf16.msra.mxu0 0
      %462 = vmatprep.subr.bf16.mxu0 0
      %463 = vmatpush2.bf16.msra.mxu0 0
      %464 = vmatprep.subr.bf16.mxu0 0
      %465 = vmatpush2.bf16.msra.mxu0 0
      %466 = vmatprep.mubr.bf16.mxu0 0
      %467 = vmatmul.mubr.bf16.gmra.mxu0 %v377
      %v468 = vpop.f32.mrf.mxu0
      %v469 = vadd.f32 0.0, %v468
      %v470 = vpop.f32.mrf.mxu0
      %v471 = vpop.f32.mrf.mxu0
      %v472 = vadd.f32 0.0, %v471
      %v473 = vpop.f32.mrf.mxu0
      %474 = vmatprep.mubr.bf16.mxu0 0
      %475 = vmatmul.mubr.bf16.gmra.mxu0 %v380
      %v476 = vpop.f32.mrf.mxu0
      %v477 = vadd.f32 0.0, %v476
      %v478 = vpop.f32.mrf.mxu0
      %v479 = vpop.f32.mrf.mxu0
      %v480 = vadd.f32 0.0, %v479
      %v481 = vpop.f32.mrf.mxu0
      %482 = vmatprep.mubr.bf16.mxu0 0
      %483 = vmatmul.mubr.bf16.gmra.mxu0 %v383
      %v484 = vpop.f32.mrf.mxu0
      %v485 = vadd.f32 0.0, %v484
      %v486 = vpop.f32.mrf.mxu0
      %v487 = vpop.f32.mrf.mxu0
      %v488 = vadd.f32 0.0, %v487
      %v489 = vpop.f32.mrf.mxu0
      %490 = vmatprep.mubr.bf16.mxu0 0
      %491 = vmatmul.mubr.bf16.gmra.mxu0 %v386
      %v492 = vpop.f32.mrf.mxu0
      %v493 = vadd.f32 0.0, %v492
      %v494 = vpop.f32.mrf.mxu0
      %v495 = vpop.f32.mrf.mxu0
      %v496 = vadd.f32 0.0, %v495
      %v497 = vpop.f32.mrf.mxu0
      %498 = vmatprep.mubr.bf16.mxu0 0
      %499 = vmatmul.mubr.bf16.gmra.mxu0 %v389
      %v500 = vpop.f32.mrf.mxu0
      %v501 = vadd.f32 0.0, %v500
      %v502 = vpop.f32.mrf.mxu0
      %v503 = vpop.f32.mrf.mxu0
      %v504 = vadd.f32 0.0, %v503
      %v505 = vpop.f32.mrf.mxu0
      %506 = vmatprep.mubr.bf16.mxu0 0
      %507 = vmatmul.mubr.bf16.gmra.mxu0 %v392
      %v508 = vpop.f32.mrf.mxu0
      %v509 = vadd.f32 0.0, %v508
      %v510 = vpop.f32.mrf.mxu0
      %v511 = vpop.f32.mrf.mxu0
      %v512 = vadd.f32 0.0, %v511
      %v513 = vpop.f32.mrf.mxu0
      %514 = vmatprep.mubr.bf16.mxu0 0
      %515 = vmatmul.mubr.bf16.gmra.mxu0 %v395
      %v516 = vpop.f32.mrf.mxu0
      %v517 = vadd.f32 0.0, %v516
      %v518 = vpop.f32.mrf.mxu0
      %v519 = vpop.f32.mrf.mxu0
      %v520 = vadd.f32 0.0, %v519
      %v521 = vpop.f32.mrf.mxu0
      %522 = vmatprep.mubr.bf16.mxu0 0
      %523 = vmatmul.mubr.bf16.gmra.mxu0 %v398
      %v524 = vpop.f32.mrf.mxu0
      %v525 = vadd.f32 0.0, %v524
      %v526 = vpop.f32.mrf.mxu0
      %v527 = vpop.f32.mrf.mxu0
      %v528 = vadd.f32 0.0, %v527
      %v529 = vpop.f32.mrf.mxu0
      %530 = vmatprep.mubr.bf16.mxu0 0
      %531 = vmatmul.mubr.bf16.gmra.mxu0 %v401
      %v532 = vpop.f32.mrf.mxu0
      %v533 = vadd.f32 0.0, %v532
      %v534 = vpop.f32.mrf.mxu0
      %v535 = vpop.f32.mrf.mxu0
      %v536 = vadd.f32 0.0, %v535
      %v537 = vpop.f32.mrf.mxu0
      %538 = vmatprep.mubr.bf16.mxu0 0
      %539 = vmatmul.mubr.bf16.gmra.mxu0 %v404
      %v540 = vpop.f32.mrf.mxu0
      %v541 = vadd.f32 0.0, %v540
      %v542 = vpop.f32.mrf.mxu0
      %v543 = vpop.f32.mrf.mxu0
      %v544 = vadd.f32 0.0, %v543
      %v545 = vpop.f32.mrf.mxu0
      %546 = vmatprep.mubr.bf16.mxu0 0
      %547 = vmatmul.mubr.bf16.gmra.mxu0 %v407
      %v548 = vpop.f32.mrf.mxu0
      %v549 = vadd.f32 0.0, %v548
      %v550 = vpop.f32.mrf.mxu0
      %v551 = vpop.f32.mrf.mxu0
      %v552 = vadd.f32 0.0, %v551
      %v553 = vpop.f32.mrf.mxu0
      %554 = vmatprep.mubr.bf16.mxu0 0
      %555 = vmatmul.mubr.bf16.gmra.mxu0 %v410
      %v556 = vpop.f32.mrf.mxu0
      %v557 = vadd.f32 0.0, %v556
      %v558 = vpop.f32.mrf.mxu0
      %v559 = vpop.f32.mrf.mxu0
      %v560 = vadd.f32 0.0, %v559
      %v561 = vpop.f32.mrf.mxu0
      %562 = vmatprep.mubr.bf16.mxu0 0
      %563 = vmatmul.mubr.bf16.gmra.mxu0 %v413
      %v564 = vpop.f32.mrf.mxu0
      %v565 = vadd.f32 0.0, %v564
      %v566 = vpop.f32.mrf.mxu0
      %v567 = vpop.f32.mrf.mxu0
      %v568 = vadd.f32 0.0, %v567
      %v569 = vpop.f32.mrf.mxu0
      %570 = vmatprep.mubr.bf16.mxu0 0
      %571 = vmatmul.mubr.bf16.gmra.mxu0 %v416
      %v572 = vpop.f32.mrf.mxu0
      %v573 = vadd.f32 0.0, %v572
      %v574 = vpop.f32.mrf.mxu0
      %v575 = vpop.f32.mrf.mxu0
      %v576 = vadd.f32 0.0, %v575
      %v577 = vpop.f32.mrf.mxu0
      %578 = vmatprep.mubr.bf16.mxu0 0
      %579 = vmatmul.mubr.bf16.gmra.mxu0 %v419
      %v580 = vpop.f32.mrf.mxu0
      %v581 = vadd.f32 0.0, %v580
      %v582 = vpop.f32.mrf.mxu0
      %v583 = vpop.f32.mrf.mxu0
      %v584 = vadd.f32 0.0, %v583
      %v585 = vpop.f32.mrf.mxu0
      %586 = vmatprep.mubr.bf16.mxu0 0
      %587 = vmatmul.mubr.bf16.gmra.mxu0 %v422
      %v588 = vpop.f32.mrf.mxu0
      %v589 = vadd.f32 0.0, %v588
      %v590 = vpop.f32.mrf.mxu0
      %v591 = vpop.f32.mrf.mxu0
      %v592 = vadd.f32 0.0, %v591
      %v593 = vpop.f32.mrf.mxu0
      %594 = vmatprep.mubr.bf16.mxu0 0
      %595 = vmatmul.mubr.bf16.gmra.mxu0 %v425
      %v596 = vpop.f32.mrf.mxu0
      %v597 = vadd.f32 0.0, %v596
      %v598 = vpop.f32.mrf.mxu0
      %v599 = vpop.f32.mrf.mxu0
      %v600 = vadd.f32 0.0, %v599
      %v601 = vpop.f32.mrf.mxu0
      %602 = vmatprep.mubr.bf16.mxu0 0
      %603 = vmatmul.mubr.bf16.gmra.mxu0 %v428
      %v604 = vpop.f32.mrf.mxu0
      %v605 = vadd.f32 0.0, %v604
      %v606 = vpop.f32.mrf.mxu0
      %v607 = vpop.f32.mrf.mxu0
      %v608 = vadd.f32 0.0, %v607
      %v609 = vpop.f32.mrf.mxu0
      %610 = vdwg.mxu0
      %v612 = vsel %vm375, %v300, 0
      %v615 = vsel %vm375, %v301, 0
      %v618 = vsel %vm375, %v302, 0
      %v621 = vsel %vm375, %v303, 0
      %v624 = vsel %vm375, %v304, 0
      %v627 = vsel %vm375, %v305, 0
      %v630 = vsel %vm375, %v306, 0
      %v633 = vsel %vm375, %v307, 0
      %v636 = vsel %vm375, %v308, 0
      %v639 = vsel %vm375, %v309, 0
      %v642 = vsel %vm375, %v310, 0
      %v645 = vsel %vm375, %v311, 0
      %v648 = vsel %vm375, %v312, 0
      %v651 = vsel %vm375, %v313, 0
      %v654 = vsel %vm375, %v314, 0
      %v657 = vsel %vm375, %v315, 0
      %v660 = vsel %vm375, %v316, 0
      %v663 = vsel %vm375, %v317, 0
      %v666 = vsel %vm430, %v318, 0
      %668 = vmatprep.subr.bf16.mxu0 0
      %669 = vmatpush1.bf16.msra.mxu0 0
      %670 = vmatprep.subr.bf16.mxu0 0
      %671 = vmatpush1.bf16.msra.mxu0 0
      %672 = vmatprep.subr.bf16.mxu0 0
      %673 = vmatpush1.bf16.msra.mxu0 0
      %674 = vmatprep.subr.bf16.mxu0 0
      %675 = vmatpush1.bf16.msra.mxu0 0
      %676 = vmatprep.subr.bf16.mxu0 0
      %677 = vmatpush1.bf16.msra.mxu0 0
      %678 = vmatprep.subr.bf16.mxu0 0
      %679 = vmatpush1.bf16.msra.mxu0 0
      %680 = vmatprep.subr.bf16.mxu0 0
      %681 = vmatpush1.bf16.msra.mxu0 0
      %682 = vmatprep.subr.bf16.mxu0 0
      %683 = vmatpush1.bf16.msra.mxu0 %v666
      %684 = vmatprep.subr.bf16.mxu0 0
      %685 = vmatpush2.bf16.msra.mxu0 0
      %686 = vmatprep.subr.bf16.mxu0 0
      %687 = vmatpush2.bf16.msra.mxu0 0
      %688 = vmatprep.subr.bf16.mxu0 0
      %689 = vmatpush2.bf16.msra.mxu0 0
      %690 = vmatprep.subr.bf16.mxu0 0
      %691 = vmatpush2.bf16.msra.mxu0 0
      %692 = vmatprep.subr.bf16.mxu0 0
      %693 = vmatpush2.bf16.msra.mxu0 0
      %694 = vmatprep.subr.bf16.mxu0 0
      %695 = vmatpush2.bf16.msra.mxu0 0
      %696 = vmatprep.subr.bf16.mxu0 0
      %697 = vmatpush2.bf16.msra.mxu0 0
      %698 = vmatprep.subr.bf16.mxu0 0
      %699 = vmatpush2.bf16.msra.mxu0 0
      %700 = vmatprep.mubr.bf16.mxu0 0
      %701 = vmatmul.mubr.bf16.gmra.mxu0 %v612
      %v702 = vpop.f32.mrf.mxu0
      %v703 = vadd.f32 %v469, %v702
      %v704 = vpop.f32.mrf.mxu0
      %v705 = vpop.f32.mrf.mxu0
      %v706 = vadd.f32 %v472, %v705
      %v707 = vpop.f32.mrf.mxu0
      %708 = vmatprep.mubr.bf16.mxu0 0
      %709 = vmatmul.mubr.bf16.gmra.mxu0 %v615
      %v710 = vpop.f32.mrf.mxu0
      %v711 = vadd.f32 %v477, %v710
      %v712 = vpop.f32.mrf.mxu0
      %v713 = vpop.f32.mrf.mxu0
      %v714 = vadd.f32 %v480, %v713
      %v715 = vpop.f32.mrf.mxu0
      %716 = vmatprep.mubr.bf16.mxu0 0
      %717 = vmatmul.mubr.bf16.gmra.mxu0 %v618
      %v718 = vpop.f32.mrf.mxu0
      %v719 = vadd.f32 %v485, %v718
      %v720 = vpop.f32.mrf.mxu0
      %v721 = vpop.f32.mrf.mxu0
      %v722 = vadd.f32 %v488, %v721
      %v723 = vpop.f32.mrf.mxu0
      %724 = vmatprep.mubr.bf16.mxu0 0
      %725 = vmatmul.mubr.bf16.gmra.mxu0 %v621
      %v726 = vpop.f32.mrf.mxu0
      %v727 = vadd.f32 %v493, %v726
      %v728 = vpop.f32.mrf.mxu0
      %v729 = vpop.f32.mrf.mxu0
      %v730 = vadd.f32 %v496, %v729
      %v731 = vpop.f32.mrf.mxu0
      %732 = vmatprep.mubr.bf16.mxu0 0
      %733 = vmatmul.mubr.bf16.gmra.mxu0 %v624
      %v734 = vpop.f32.mrf.mxu0
      %v735 = vadd.f32 %v501, %v734
      %v736 = vpop.f32.mrf.mxu0
      %v737 = vpop.f32.mrf.mxu0
      %v738 = vadd.f32 %v504, %v737
      %v739 = vpop.f32.mrf.mxu0
      %740 = vmatprep.mubr.bf16.mxu0 0
      %741 = vmatmul.mubr.bf16.gmra.mxu0 %v627
      %v742 = vpop.f32.mrf.mxu0
      %v743 = vadd.f32 %v509, %v742
      %v744 = vpop.f32.mrf.mxu0
      %v745 = vpop.f32.mrf.mxu0
      %v746 = vadd.f32 %v512, %v745
      %v747 = vpop.f32.mrf.mxu0
      %748 = vmatprep.mubr.bf16.mxu0 0
      %749 = vmatmul.mubr.bf16.gmra.mxu0 %v630
      %v750 = vpop.f32.mrf.mxu0
      %v751 = vadd.f32 %v517, %v750
      %v752 = vpop.f32.mrf.mxu0
      %v753 = vpop.f32.mrf.mxu0
      %v754 = vadd.f32 %v520, %v753
      %v755 = vpop.f32.mrf.mxu0
      %756 = vmatprep.mubr.bf16.mxu0 0
      %757 = vmatmul.mubr.bf16.gmra.mxu0 %v633
      %v758 = vpop.f32.mrf.mxu0
      %v759 = vadd.f32 %v525, %v758
      %v760 = vpop.f32.mrf.mxu0
      %v761 = vpop.f32.mrf.mxu0
      %v762 = vadd.f32 %v528, %v761
      %v763 = vpop.f32.mrf.mxu0
      %764 = vmatprep.mubr.bf16.mxu0 0
      %765 = vmatmul.mubr.bf16.gmra.mxu0 %v636
      %v766 = vpop.f32.mrf.mxu0
      %v767 = vadd.f32 %v533, %v766
      %v768 = vpop.f32.mrf.mxu0
      %v769 = vpop.f32.mrf.mxu0
      %v770 = vadd.f32 %v536, %v769
      %v771 = vpop.f32.mrf.mxu0
      %772 = vmatprep.mubr.bf16.mxu0 0
      %773 = vmatmul.mubr.bf16.gmra.mxu0 %v639
      %v774 = vpop.f32.mrf.mxu0
      %v775 = vadd.f32 %v541, %v774
      %v776 = vpop.f32.mrf.mxu0
      %v777 = vpop.f32.mrf.mxu0
      %v778 = vadd.f32 %v544, %v777
      %v779 = vpop.f32.mrf.mxu0
      %780 = vmatprep.mubr.bf16.mxu0 0
      %781 = vmatmul.mubr.bf16.gmra.mxu0 %v642
      %v782 = vpop.f32.mrf.mxu0
      %v783 = vadd.f32 %v549, %v782
      %v784 = vpop.f32.mrf.mxu0
      %v785 = vpop.f32.mrf.mxu0
      %v786 = vadd.f32 %v552, %v785
      %v787 = vpop.f32.mrf.mxu0
      %788 = vmatprep.mubr.bf16.mxu0 0
      %789 = vmatmul.mubr.bf16.gmra.mxu0 %v645
      %v790 = vpop.f32.mrf.mxu0
      %v791 = vadd.f32 %v557, %v790
      %v792 = vpop.f32.mrf.mxu0
      %v793 = vpop.f32.mrf.mxu0
      %v794 = vadd.f32 %v560, %v793
      %v795 = vpop.f32.mrf.mxu0
      %796 = vmatprep.mubr.bf16.mxu0 0
      %797 = vmatmul.mubr.bf16.gmra.mxu0 %v648
      %v798 = vpop.f32.mrf.mxu0
      %v799 = vadd.f32 %v565, %v798
      %v800 = vpop.f32.mrf.mxu0
      %v801 = vpop.f32.mrf.mxu0
      %v802 = vadd.f32 %v568, %v801
      %v803 = vpop.f32.mrf.mxu0
      %804 = vmatprep.mubr.bf16.mxu0 0
      %805 = vmatmul.mubr.bf16.gmra.mxu0 %v651
      %v806 = vpop.f32.mrf.mxu0
      %v807 = vadd.f32 %v573, %v806
      %v808 = vpop.f32.mrf.mxu0
      %v809 = vpop.f32.mrf.mxu0
      %v810 = vadd.f32 %v576, %v809
      %v811 = vpop.f32.mrf.mxu0
      %812 = vmatprep.mubr.bf16.mxu0 0
      %813 = vmatmul.mubr.bf16.gmra.mxu0 %v654
      %v814 = vpop.f32.mrf.mxu0
      %v815 = vadd.f32 %v581, %v814
      %v816 = vpop.f32.mrf.mxu0
      %v817 = vpop.f32.mrf.mxu0
      %v818 = vadd.f32 %v584, %v817
      %v819 = vpop.f32.mrf.mxu0
      %820 = vmatprep.mubr.bf16.mxu0 0
      %821 = vmatmul.mubr.bf16.gmra.mxu0 %v657
      %v822 = vpop.f32.mrf.mxu0
      %v823 = vadd.f32 %v589, %v822
      %v824 = vpop.f32.mrf.mxu0
      %v825 = vpop.f32.mrf.mxu0
      %v826 = vadd.f32 %v592, %v825
      %v827 = vpop.f32.mrf.mxu0
      %828 = vmatprep.mubr.bf16.mxu0 0
      %829 = vmatmul.mubr.bf16.gmra.mxu0 %v660
      %v830 = vpop.f32.mrf.mxu0
      %v831 = vadd.f32 %v597, %v830
      %v832 = vpop.f32.mrf.mxu0
      %v833 = vpop.f32.mrf.mxu0
      %v834 = vadd.f32 %v600, %v833
      %v835 = vpop.f32.mrf.mxu0
      %836 = vmatprep.mubr.bf16.mxu0 0
      %837 = vmatmul.mubr.bf16.gmra.mxu0 %v663
      %v838 = vpop.f32.mrf.mxu0
      %v839 = vadd.f32 %v605, %v838
      %v840 = vpop.f32.mrf.mxu0
      %v841 = vpop.f32.mrf.mxu0
      %v842 = vadd.f32 %v608, %v841
      %v843 = vpop.f32.mrf.mxu0
      %844 = vdwg.mxu0
      %v845 = vld [vmem:[%s244 + $0x2] sm:$0xff]
      %v846 = vld [vmem:[%s244 + $0xa] sm:$0xff]
      %v847 = vld [vmem:[%s244 + $0x12] sm:$0xff]
      %v848 = vld [vmem:[%s244 + $0x1a] sm:$0xff]
      %v849 = vld [vmem:[%s244 + $0x22] sm:$0xff]
      %v850 = vld [vmem:[%s244 + $0x2a] sm:$0xff]
      %v851 = vld [vmem:[%s244 + $0x32] sm:$0xff]
      %v852 = vld [vmem:[%s244 + $0x3a] sm:$0xff]
      %v853 = vld [vmem:[%s244 + $0x42] sm:$0xff]
      %v854 = vld [vmem:[%s244 + $0x4a] sm:$0xff]
      %v855 = vld [vmem:[%s244 + $0x52] sm:$0xff]
      %v856 = vld [vmem:[%s244 + $0x5a] sm:$0xff]
      %v857 = vld [vmem:[%s244 + $0x62] sm:$0xff]
      %v858 = vld [vmem:[%s244 + $0x6a] sm:$0xff]
      %v859 = vld [vmem:[%s244 + $0x72] sm:$0xff]
      %v860 = vld [vmem:[%s244 + $0x7a] sm:$0xff]
      %v861 = vld [vmem:[%s244 + $0x82] sm:$0xff]
      %v862 = vld [vmem:[%s244 + $0x8a] sm:$0xff]
      %v863 = vld [vmem:[%s244 + $0x92] sm:$0xff]
      %v864 = vld [vmem:[%s244 + $0x9a] sm:$0xff]
      %v865 = vld [vmem:[%s244 + $0xa2] sm:$0xff]
      %v866 = vld [vmem:[%s244 + $0xaa] sm:$0xff]
      %v867 = vld [vmem:[%s244 + $0xb2] sm:$0xff]
      %v868 = vld [vmem:[%s244 + $0xba] sm:$0xff]
      %v869 = vld [vmem:[%s244 + $0xc2] sm:$0xff]
      %v870 = vld [vmem:[%s244 + $0xca] sm:$0xff]
      %v871 = vld [vmem:[%s244 + $0xd2] sm:$0xff]
      %v872 = vld [vmem:[%s244 + $0xda] sm:$0xff]
      %v873 = vld [vmem:[%s244 + $0xe2] sm:$0xff]
      %v874 = vld [vmem:[%s244 + $0xea] sm:$0xff]
      %v875 = vld [vmem:[%s244 + $0xf2] sm:$0xff]
      %v876 = vld [vmem:[%s244 + $0xfa] sm:$0xff]
      %v877 = vld [vmem:[%s244 + $0x102] sm:$0xff]
      %v878 = vld [vmem:[%s244 + $0x10a] sm:$0xff]
      %v879 = vld [vmem:[%s244 + $0x112] sm:$0xff]
      %v880 = vld [vmem:[%s244 + $0x11a] sm:$0xff]
      %v881 = vpack.c.bf16 %v846, %v845
      %v882 = vpack.c.bf16 %v848, %v847
      %v883 = vpack.c.bf16 %v850, %v849
      %v884 = vpack.c.bf16 %v852, %v851
      %v885 = vpack.c.bf16 %v854, %v853
      %v886 = vpack.c.bf16 %v856, %v855
      %v887 = vpack.c.bf16 %v858, %v857
      %v888 = vpack.c.bf16 %v860, %v859
      %v889 = vpack.c.bf16 %v862, %v861
      %v890 = vpack.c.bf16 %v864, %v863
      %v891 = vpack.c.bf16 %v866, %v865
      %v892 = vpack.c.bf16 %v868, %v867
      %v893 = vpack.c.bf16 %v870, %v869
      %v894 = vpack.c.bf16 %v872, %v871
      %v895 = vpack.c.bf16 %v874, %v873
      %v896 = vpack.c.bf16 %v876, %v875
      %v897 = vpack.c.bf16 %v878, %v877
      %v898 = vpack.c.bf16 %v880, %v879
      %s899 = scalar_lea.vmem %s248, 8
      %v900 = vld [vmem:[%s899] sm:$0xf]
      %v902 = vsel %vm375, %v881, 0
      %v905 = vsel %vm375, %v882, 0
      %v908 = vsel %vm375, %v883, 0
      %v911 = vsel %vm375, %v884, 0
      %v914 = vsel %vm375, %v885, 0
      %v917 = vsel %vm375, %v886, 0
      %v920 = vsel %vm375, %v887, 0
      %v923 = vsel %vm375, %v888, 0
      %v926 = vsel %vm375, %v889, 0
      %v929 = vsel %vm375, %v890, 0
      %v932 = vsel %vm375, %v891, 0
      %v935 = vsel %vm375, %v892, 0
      %v938 = vsel %vm375, %v893, 0
      %v941 = vsel %vm375, %v894, 0
      %v944 = vsel %vm375, %v895, 0
      %v947 = vsel %vm375, %v896, 0
      %v950 = vsel %vm375, %v897, 0
      %v953 = vsel %vm375, %v898, 0
      %v956 = vsel %vm430, %v900, 0
      %958 = vmatprep.subr.bf16.mxu0 0
      %959 = vmatpush1.bf16.msra.mxu0 0
      %960 = vmatprep.subr.bf16.mxu0 0
      %961 = vmatpush1.bf16.msra.mxu0 0
      %962 = vmatprep.subr.bf16.mxu0 0
      %963 = vmatpush1.bf16.msra.mxu0 0
      %964 = vmatprep.subr.bf16.mxu0 0
      %965 = vmatpush1.bf16.msra.mxu0 0
      %966 = vmatprep.subr.bf16.mxu0 0
      %967 = vmatpush1.bf16.msra.mxu0 0
      %968 = vmatprep.subr.bf16.mxu0 0
      %969 = vmatpush1.bf16.msra.mxu0 0
      %970 = vmatprep.subr.bf16.mxu0 0
      %971 = vmatpush1.bf16.msra.mxu0 0
      %972 = vmatprep.subr.bf16.mxu0 0
      %973 = vmatpush1.bf16.msra.mxu0 %v956
      %974 = vmatprep.subr.bf16.mxu0 0
      %975 = vmatpush2.bf16.msra.mxu0 0
      %976 = vmatprep.subr.bf16.mxu0 0
      %977 = vmatpush2.bf16.msra.mxu0 0
      %978 = vmatprep.subr.bf16.mxu0 0
      %979 = vmatpush2.bf16.msra.mxu0 0
      %980 = vmatprep.subr.bf16.mxu0 0
      %981 = vmatpush2.bf16.msra.mxu0 0
      %982 = vmatprep.subr.bf16.mxu0 0
      %983 = vmatpush2.bf16.msra.mxu0 0
      %984 = vmatprep.subr.bf16.mxu0 0
      %985 = vmatpush2.bf16.msra.mxu0 0
      %986 = vmatprep.subr.bf16.mxu0 0
      %987 = vmatpush2.bf16.msra.mxu0 0
      %988 = vmatprep.subr.bf16.mxu0 0
      %989 = vmatpush2.bf16.msra.mxu0 0
      %990 = vmatprep.mubr.bf16.mxu0 0
      %991 = vmatmul.mubr.bf16.gmra.mxu0 %v902
      %v992 = vpop.f32.mrf.mxu0
      %v993 = vadd.f32 0.0, %v992
      %v994 = vpop.f32.mrf.mxu0
      %v995 = vpop.f32.mrf.mxu0
      %v996 = vadd.f32 0.0, %v995
      %v997 = vpop.f32.mrf.mxu0
      %998 = vmatprep.mubr.bf16.mxu0 0
      %999 = vmatmul.mubr.bf16.gmra.mxu0 %v905
      %v1000 = vpop.f32.mrf.mxu0
      %v1001 = vadd.f32 0.0, %v1000
      %v1002 = vpop.f32.mrf.mxu0
      %v1003 = vpop.f32.mrf.mxu0
      %v1004 = vadd.f32 0.0, %v1003
      %v1005 = vpop.f32.mrf.mxu0
      %1006 = vmatprep.mubr.bf16.mxu0 0
      %1007 = vmatmul.mubr.bf16.gmra.mxu0 %v908
      %v1008 = vpop.f32.mrf.mxu0
      %v1009 = vadd.f32 0.0, %v1008
      %v1010 = vpop.f32.mrf.mxu0
      %v1011 = vpop.f32.mrf.mxu0
      %v1012 = vadd.f32 0.0, %v1011
      %v1013 = vpop.f32.mrf.mxu0
      %1014 = vmatprep.mubr.bf16.mxu0 0
      %1015 = vmatmul.mubr.bf16.gmra.mxu0 %v911
      %v1016 = vpop.f32.mrf.mxu0
      %v1017 = vadd.f32 0.0, %v1016
      %v1018 = vpop.f32.mrf.mxu0
      %v1019 = vpop.f32.mrf.mxu0
      %v1020 = vadd.f32 0.0, %v1019
      %v1021 = vpop.f32.mrf.mxu0
      %1022 = vmatprep.mubr.bf16.mxu0 0
      %1023 = vmatmul.mubr.bf16.gmra.mxu0 %v914
      %v1024 = vpop.f32.mrf.mxu0
      %v1025 = vadd.f32 0.0, %v1024
      %v1026 = vpop.f32.mrf.mxu0
      %v1027 = vpop.f32.mrf.mxu0
      %v1028 = vadd.f32 0.0, %v1027
      %v1029 = vpop.f32.mrf.mxu0
      %1030 = vmatprep.mubr.bf16.mxu0 0
      %1031 = vmatmul.mubr.bf16.gmra.mxu0 %v917
      %v1032 = vpop.f32.mrf.mxu0
      %v1033 = vadd.f32 0.0, %v1032
      %v1034 = vpop.f32.mrf.mxu0
      %v1035 = vpop.f32.mrf.mxu0
      %v1036 = vadd.f32 0.0, %v1035
      %v1037 = vpop.f32.mrf.mxu0
      %1038 = vmatprep.mubr.bf16.mxu0 0
      %1039 = vmatmul.mubr.bf16.gmra.mxu0 %v920
      %v1040 = vpop.f32.mrf.mxu0
      %v1041 = vadd.f32 0.0, %v1040
      %v1042 = vpop.f32.mrf.mxu0
      %v1043 = vpop.f32.mrf.mxu0
      %v1044 = vadd.f32 0.0, %v1043
      %v1045 = vpop.f32.mrf.mxu0
      %1046 = vmatprep.mubr.bf16.mxu0 0
      %1047 = vmatmul.mubr.bf16.gmra.mxu0 %v923
      %v1048 = vpop.f32.mrf.mxu0
      %v1049 = vadd.f32 0.0, %v1048
      %v1050 = vpop.f32.mrf.mxu0
      %v1051 = vpop.f32.mrf.mxu0
      %v1052 = vadd.f32 0.0, %v1051
      %v1053 = vpop.f32.mrf.mxu0
      %1054 = vmatprep.mubr.bf16.mxu0 0
      %1055 = vmatmul.mubr.bf16.gmra.mxu0 %v926
      %v1056 = vpop.f32.mrf.mxu0
      %v1057 = vadd.f32 0.0, %v1056
      %v1058 = vpop.f32.mrf.mxu0
      %v1059 = vpop.f32.mrf.mxu0
      %v1060 = vadd.f32 0.0, %v1059
      %v1061 = vpop.f32.mrf.mxu0
      %1062 = vmatprep.mubr.bf16.mxu0 0
      %1063 = vmatmul.mubr.bf16.gmra.mxu0 %v929
      %v1064 = vpop.f32.mrf.mxu0
      %v1065 = vadd.f32 0.0, %v1064
      %v1066 = vpop.f32.mrf.mxu0
      %v1067 = vpop.f32.mrf.mxu0
      %v1068 = vadd.f32 0.0, %v1067
      %v1069 = vpop.f32.mrf.mxu0
      %1070 = vmatprep.mubr.bf16.mxu0 0
      %1071 = vmatmul.mubr.bf16.gmra.mxu0 %v932
      %v1072 = vpop.f32.mrf.mxu0
      %v1073 = vadd.f32 0.0, %v1072
      %v1074 = vpop.f32.mrf.mxu0
      %v1075 = vpop.f32.mrf.mxu0
      %v1076 = vadd.f32 0.0, %v1075
      %v1077 = vpop.f32.mrf.mxu0
      %1078 = vmatprep.mubr.bf16.mxu0 0
      %1079 = vmatmul.mubr.bf16.gmra.mxu0 %v935
      %v1080 = vpop.f32.mrf.mxu0
      %v1081 = vadd.f32 0.0, %v1080
      %v1082 = vpop.f32.mrf.mxu0
      %v1083 = vpop.f32.mrf.mxu0
      %v1084 = vadd.f32 0.0, %v1083
      %v1085 = vpop.f32.mrf.mxu0
      %1086 = vmatprep.mubr.bf16.mxu0 0
      %1087 = vmatmul.mubr.bf16.gmra.mxu0 %v938
      %v1088 = vpop.f32.mrf.mxu0
      %v1089 = vadd.f32 0.0, %v1088
      %v1090 = vpop.f32.mrf.mxu0
      %v1091 = vpop.f32.mrf.mxu0
      %v1092 = vadd.f32 0.0, %v1091
      %v1093 = vpop.f32.mrf.mxu0
      %1094 = vmatprep.mubr.bf16.mxu0 0
      %1095 = vmatmul.mubr.bf16.gmra.mxu0 %v941
      %v1096 = vpop.f32.mrf.mxu0
      %v1097 = vadd.f32 0.0, %v1096
      %v1098 = vpop.f32.mrf.mxu0
      %v1099 = vpop.f32.mrf.mxu0
      %v1100 = vadd.f32 0.0, %v1099
      %v1101 = vpop.f32.mrf.mxu0
      %1102 = vmatprep.mubr.bf16.mxu0 0
      %1103 = vmatmul.mubr.bf16.gmra.mxu0 %v944
      %v1104 = vpop.f32.mrf.mxu0
      %v1105 = vadd.f32 0.0, %v1104
      %v1106 = vpop.f32.mrf.mxu0
      %v1107 = vpop.f32.mrf.mxu0
      %v1108 = vadd.f32 0.0, %v1107
      %v1109 = vpop.f32.mrf.mxu0
      %1110 = vmatprep.mubr.bf16.mxu0 0
      %1111 = vmatmul.mubr.bf16.gmra.mxu0 %v947
      %v1112 = vpop.f32.mrf.mxu0
      %v1113 = vadd.f32 0.0, %v1112
      %v1114 = vpop.f32.mrf.mxu0
      %v1115 = vpop.f32.mrf.mxu0
      %v1116 = vadd.f32 0.0, %v1115
      %v1117 = vpop.f32.mrf.mxu0
      %1118 = vmatprep.mubr.bf16.mxu0 0
      %1119 = vmatmul.mubr.bf16.gmra.mxu0 %v950
      %v1120 = vpop.f32.mrf.mxu0
      %v1121 = vadd.f32 0.0, %v1120
      %v1122 = vpop.f32.mrf.mxu0
      %v1123 = vpop.f32.mrf.mxu0
      %v1124 = vadd.f32 0.0, %v1123
      %v1125 = vpop.f32.mrf.mxu0
      %1126 = vmatprep.mubr.bf16.mxu0 0
      %1127 = vmatmul.mubr.bf16.gmra.mxu0 %v953
      %v1128 = vpop.f32.mrf.mxu0
      %v1129 = vadd.f32 0.0, %v1128
      %v1130 = vpop.f32.mrf.mxu0
      %v1131 = vpop.f32.mrf.mxu0
      %v1132 = vadd.f32 0.0, %v1131
      %v1133 = vpop.f32.mrf.mxu0
      %1134 = vdwg.mxu0
      %v1135 = vadd.f32 %v703, %v993
      %v1136 = vadd.f32 %v706, %v996
      %v1137 = vadd.f32 %v711, %v1001
      %v1138 = vadd.f32 %v714, %v1004
      %v1139 = vadd.f32 %v719, %v1009
      %v1140 = vadd.f32 %v722, %v1012
      %v1141 = vadd.f32 %v727, %v1017
      %v1142 = vadd.f32 %v730, %v1020
      %v1143 = vadd.f32 %v735, %v1025
      %v1144 = vadd.f32 %v738, %v1028
      %v1145 = vadd.f32 %v743, %v1033
      %v1146 = vadd.f32 %v746, %v1036
      %v1147 = vadd.f32 %v751, %v1041
      %v1148 = vadd.f32 %v754, %v1044
      %v1149 = vadd.f32 %v759, %v1049
      %v1150 = vadd.f32 %v762, %v1052
      %v1151 = vadd.f32 %v767, %v1057
      %v1152 = vadd.f32 %v770, %v1060
      %v1153 = vadd.f32 %v775, %v1065
      %v1154 = vadd.f32 %v778, %v1068
      %v1155 = vadd.f32 %v783, %v1073
      %v1156 = vadd.f32 %v786, %v1076
      %v1157 = vadd.f32 %v791, %v1081
      %v1158 = vadd.f32 %v794, %v1084
      %v1159 = vadd.f32 %v799, %v1089
      %v1160 = vadd.f32 %v802, %v1092
      %v1161 = vadd.f32 %v807, %v1097
      %v1162 = vadd.f32 %v810, %v1100
      %v1163 = vadd.f32 %v815, %v1105
      %v1164 = vadd.f32 %v818, %v1108
      %v1165 = vadd.f32 %v823, %v1113
      %v1166 = vadd.f32 %v826, %v1116
      %v1167 = vadd.f32 %v831, %v1121
      %v1168 = vadd.f32 %v834, %v1124
      %v1169 = vadd.f32 %v839, %v1129
      %v1170 = vadd.f32 %v842, %v1132
      %v1171 = vld [vmem:[%s244 + $0x12] sm:$0xff]
      %v1172 = vld [vmem:[%s244 + $0x1a] sm:$0xff]
      %v1173 = vld [vmem:[%s244 + $0x22] sm:$0xff]
      %v1174 = vld [vmem:[%s244 + $0x2a] sm:$0xff]
      %v1175 = vld [vmem:[%s244 + $0x32] sm:$0xff]
      %v1176 = vld [vmem:[%s244 + $0x3a] sm:$0xff]
      %v1177 = vld [vmem:[%s244 + $0x42] sm:$0xff]
      %v1178 = vld [vmem:[%s244 + $0x4a] sm:$0xff]
      %v1179 = vld [vmem:[%s244 + $0x52] sm:$0xff]
      %v1180 = vld [vmem:[%s244 + $0x5a] sm:$0xff]
      %v1181 = vld [vmem:[%s244 + $0x62] sm:$0xff]
      %v1182 = vld [vmem:[%s244 + $0x6a] sm:$0xff]
      %v1183 = vld [vmem:[%s244 + $0x72] sm:$0xff]
      %v1184 = vld [vmem:[%s244 + $0x7a] sm:$0xff]
      %v1185 = vld [vmem:[%s244 + $0x82] sm:$0xff]
      %v1186 = vld [vmem:[%s244 + $0x8a] sm:$0xff]
      %v1187 = vld [vmem:[%s244 + $0x92] sm:$0xff]
      %v1188 = vld [vmem:[%s244 + $0x9a] sm:$0xff]
      %v1189 = vld [vmem:[%s244 + $0xa2] sm:$0xff]
      %v1190 = vld [vmem:[%s244 + $0xaa] sm:$0xff]
      %v1191 = vld [vmem:[%s244 + $0xb2] sm:$0xff]
      %v1192 = vld [vmem:[%s244 + $0xba] sm:$0xff]
      %v1193 = vld [vmem:[%s244 + $0xc2] sm:$0xff]
      %v1194 = vld [vmem:[%s244 + $0xca] sm:$0xff]
      %v1195 = vld [vmem:[%s244 + $0xd2] sm:$0xff]
      %v1196 = vld [vmem:[%s244 + $0xda] sm:$0xff]
      %v1197 = vld [vmem:[%s244 + $0xe2] sm:$0xff]
      %v1198 = vld [vmem:[%s244 + $0xea] sm:$0xff]
      %v1199 = vld [vmem:[%s244 + $0xf2] sm:$0xff]
      %v1200 = vld [vmem:[%s244 + $0xfa] sm:$0xff]
      %v1201 = vld [vmem:[%s244 + $0x102] sm:$0xff]
      %v1202 = vld [vmem:[%s244 + $0x10a] sm:$0xff]
      %v1203 = vld [vmem:[%s244 + $0x112] sm:$0xff]
      %v1204 = vld [vmem:[%s244 + $0x11a] sm:$0xff]
      %v1205 = vld [vmem:[%s244 + $0x122] sm:$0xff]
      %v1206 = vld [vmem:[%s244 + $0x12a] sm:$0xff]
      %v1207 = vpack.c.bf16 %v1172, %v1171
      %v1208 = vpack.c.bf16 %v1174, %v1173
      %v1209 = vpack.c.bf16 %v1176, %v1175
      %v1210 = vpack.c.bf16 %v1178, %v1177
      %v1211 = vpack.c.bf16 %v1180, %v1179
      %v1212 = vpack.c.bf16 %v1182, %v1181
      %v1213 = vpack.c.bf16 %v1184, %v1183
      %v1214 = vpack.c.bf16 %v1186, %v1185
      %v1215 = vpack.c.bf16 %v1188, %v1187
      %v1216 = vpack.c.bf16 %v1190, %v1189
      %v1217 = vpack.c.bf16 %v1192, %v1191
      %v1218 = vpack.c.bf16 %v1194, %v1193
      %v1219 = vpack.c.bf16 %v1196, %v1195
      %v1220 = vpack.c.bf16 %v1198, %v1197
      %v1221 = vpack.c.bf16 %v1200, %v1199
      %v1222 = vpack.c.bf16 %v1202, %v1201
      %v1223 = vpack.c.bf16 %v1204, %v1203
      %v1224 = vpack.c.bf16 %v1206, %v1205
      %s1225 = scalar_lea.vmem %s248, 12
      %v1226 = vld [vmem:[%s1225] sm:$0xf]
      %v1228 = vsel %vm375, %v1207, 0
      %v1231 = vsel %vm375, %v1208, 0
      %v1234 = vsel %vm375, %v1209, 0
      %v1237 = vsel %vm375, %v1210, 0
      %v1240 = vsel %vm375, %v1211, 0
      %v1243 = vsel %vm375, %v1212, 0
      %v1246 = vsel %vm375, %v1213, 0
      %v1249 = vsel %vm375, %v1214, 0
      %v1252 = vsel %vm375, %v1215, 0
      %v1255 = vsel %vm375, %v1216, 0
      %v1258 = vsel %vm375, %v1217, 0
      %v1261 = vsel %vm375, %v1218, 0
      %v1264 = vsel %vm375, %v1219, 0
      %v1267 = vsel %vm375, %v1220, 0
      %v1270 = vsel %vm375, %v1221, 0
      %v1273 = vsel %vm375, %v1222, 0
      %v1276 = vsel %vm375, %v1223, 0
      %v1279 = vsel %vm375, %v1224, 0
      %v1282 = vsel %vm430, %v1226, 0
      %1284 = vmatprep.subr.bf16.mxu0 0
      %1285 = vmatpush1.bf16.msra.mxu0 0
      %1286 = vmatprep.subr.bf16.mxu0 0
      %1287 = vmatpush1.bf16.msra.mxu0 0
      %1288 = vmatprep.subr.bf16.mxu0 0
      %1289 = vmatpush1.bf16.msra.mxu0 0
      %1290 = vmatprep.subr.bf16.mxu0 0
      %1291 = vmatpush1.bf16.msra.mxu0 0
      %1292 = vmatprep.subr.bf16.mxu0 0
      %1293 = vmatpush1.bf16.msra.mxu0 0
      %1294 = vmatprep.subr.bf16.mxu0 0
      %1295 = vmatpush1.bf16.msra.mxu0 0
      %1296 = vmatprep.subr.bf16.mxu0 0
      %1297 = vmatpush1.bf16.msra.mxu0 0
      %1298 = vmatprep.subr.bf16.mxu0 0
      %1299 = vmatpush1.bf16.msra.mxu0 %v1282
      %1300 = vmatprep.subr.bf16.mxu0 0
      %1301 = vmatpush2.bf16.msra.mxu0 0
      %1302 = vmatprep.subr.bf16.mxu0 0
      %1303 = vmatpush2.bf16.msra.mxu0 0
      %1304 = vmatprep.subr.bf16.mxu0 0
      %1305 = vmatpush2.bf16.msra.mxu0 0
      %1306 = vmatprep.subr.bf16.mxu0 0
      %1307 = vmatpush2.bf16.msra.mxu0 0
      %1308 = vmatprep.subr.bf16.mxu0 0
      %1309 = vmatpush2.bf16.msra.mxu0 0
      %1310 = vmatprep.subr.bf16.mxu0 0
      %1311 = vmatpush2.bf16.msra.mxu0 0
      %1312 = vmatprep.subr.bf16.mxu0 0
      %1313 = vmatpush2.bf16.msra.mxu0 0
      %1314 = vmatprep.subr.bf16.mxu0 0
      %1315 = vmatpush2.bf16.msra.mxu0 0
      %1316 = vmatprep.mubr.bf16.mxu0 0
      %1317 = vmatmul.mubr.bf16.gmra.mxu0 %v1228
      %v1318 = vpop.f32.mrf.mxu0
      %v1319 = vadd.f32 0.0, %v1318
      %v1320 = vpop.f32.mrf.mxu0
      %v1321 = vpop.f32.mrf.mxu0
      %v1322 = vadd.f32 0.0, %v1321
      %v1323 = vpop.f32.mrf.mxu0
      %1324 = vmatprep.mubr.bf16.mxu0 0
      %1325 = vmatmul.mubr.bf16.gmra.mxu0 %v1231
      %v1326 = vpop.f32.mrf.mxu0
      %v1327 = vadd.f32 0.0, %v1326
      %v1328 = vpop.f32.mrf.mxu0
      %v1329 = vpop.f32.mrf.mxu0
      %v1330 = vadd.f32 0.0, %v1329
      %v1331 = vpop.f32.mrf.mxu0
      %1332 = vmatprep.mubr.bf16.mxu0 0
      %1333 = vmatmul.mubr.bf16.gmra.mxu0 %v1234
      %v1334 = vpop.f32.mrf.mxu0
      %v1335 = vadd.f32 0.0, %v1334
      %v1336 = vpop.f32.mrf.mxu0
      %v1337 = vpop.f32.mrf.mxu0
      %v1338 = vadd.f32 0.0, %v1337
      %v1339 = vpop.f32.mrf.mxu0
      %1340 = vmatprep.mubr.bf16.mxu0 0
      %1341 = vmatmul.mubr.bf16.gmra.mxu0 %v1237
      %v1342 = vpop.f32.mrf.mxu0
      %v1343 = vadd.f32 0.0, %v1342
      %v1344 = vpop.f32.mrf.mxu0
      %v1345 = vpop.f32.mrf.mxu0
      %v1346 = vadd.f32 0.0, %v1345
      %v1347 = vpop.f32.mrf.mxu0
      %1348 = vmatprep.mubr.bf16.mxu0 0
      %1349 = vmatmul.mubr.bf16.gmra.mxu0 %v1240
      %v1350 = vpop.f32.mrf.mxu0
      %v1351 = vadd.f32 0.0, %v1350
      %v1352 = vpop.f32.mrf.mxu0
      %v1353 = vpop.f32.mrf.mxu0
      %v1354 = vadd.f32 0.0, %v1353
      %v1355 = vpop.f32.mrf.mxu0
      %1356 = vmatprep.mubr.bf16.mxu0 0
      %1357 = vmatmul.mubr.bf16.gmra.mxu0 %v1243
      %v1358 = vpop.f32.mrf.mxu0
      %v1359 = vadd.f32 0.0, %v1358
      %v1360 = vpop.f32.mrf.mxu0
      %v1361 = vpop.f32.mrf.mxu0
      %v1362 = vadd.f32 0.0, %v1361
      %v1363 = vpop.f32.mrf.mxu0
      %1364 = vmatprep.mubr.bf16.mxu0 0
      %1365 = vmatmul.mubr.bf16.gmra.mxu0 %v1246
      %v1366 = vpop.f32.mrf.mxu0
      %v1367 = vadd.f32 0.0, %v1366
      %v1368 = vpop.f32.mrf.mxu0
      %v1369 = vpop.f32.mrf.mxu0
      %v1370 = vadd.f32 0.0, %v1369
      %v1371 = vpop.f32.mrf.mxu0
      %1372 = vmatprep.mubr.bf16.mxu0 0
      %1373 = vmatmul.mubr.bf16.gmra.mxu0 %v1249
      %v1374 = vpop.f32.mrf.mxu0
      %v1375 = vadd.f32 0.0, %v1374
      %v1376 = vpop.f32.mrf.mxu0
      %v1377 = vpop.f32.mrf.mxu0
      %v1378 = vadd.f32 0.0, %v1377
      %v1379 = vpop.f32.mrf.mxu0
      %1380 = vmatprep.mubr.bf16.mxu0 0
      %1381 = vmatmul.mubr.bf16.gmra.mxu0 %v1252
      %v1382 = vpop.f32.mrf.mxu0
      %v1383 = vadd.f32 0.0, %v1382
      %v1384 = vpop.f32.mrf.mxu0
      %v1385 = vpop.f32.mrf.mxu0
      %v1386 = vadd.f32 0.0, %v1385
      %v1387 = vpop.f32.mrf.mxu0
      %1388 = vmatprep.mubr.bf16.mxu0 0
      %1389 = vmatmul.mubr.bf16.gmra.mxu0 %v1255
      %v1390 = vpop.f32.mrf.mxu0
      %v1391 = vadd.f32 0.0, %v1390
      %v1392 = vpop.f32.mrf.mxu0
      %v1393 = vpop.f32.mrf.mxu0
      %v1394 = vadd.f32 0.0, %v1393
      %v1395 = vpop.f32.mrf.mxu0
      %1396 = vmatprep.mubr.bf16.mxu0 0
      %1397 = vmatmul.mubr.bf16.gmra.mxu0 %v1258
      %v1398 = vpop.f32.mrf.mxu0
      %v1399 = vadd.f32 0.0, %v1398
      %v1400 = vpop.f32.mrf.mxu0
      %v1401 = vpop.f32.mrf.mxu0
      %v1402 = vadd.f32 0.0, %v1401
      %v1403 = vpop.f32.mrf.mxu0
      %1404 = vmatprep.mubr.bf16.mxu0 0
      %1405 = vmatmul.mubr.bf16.gmra.mxu0 %v1261
      %v1406 = vpop.f32.mrf.mxu0
      %v1407 = vadd.f32 0.0, %v1406
      %v1408 = vpop.f32.mrf.mxu0
      %v1409 = vpop.f32.mrf.mxu0
      %v1410 = vadd.f32 0.0, %v1409
      %v1411 = vpop.f32.mrf.mxu0
      %1412 = vmatprep.mubr.bf16.mxu0 0
      %1413 = vmatmul.mubr.bf16.gmra.mxu0 %v1264
      %v1414 = vpop.f32.mrf.mxu0
      %v1415 = vadd.f32 0.0, %v1414
      %v1416 = vpop.f32.mrf.mxu0
      %v1417 = vpop.f32.mrf.mxu0
      %v1418 = vadd.f32 0.0, %v1417
      %v1419 = vpop.f32.mrf.mxu0
      %1420 = vmatprep.mubr.bf16.mxu0 0
      %1421 = vmatmul.mubr.bf16.gmra.mxu0 %v1267
      %v1422 = vpop.f32.mrf.mxu0
      %v1423 = vadd.f32 0.0, %v1422
      %v1424 = vpop.f32.mrf.mxu0
      %v1425 = vpop.f32.mrf.mxu0
      %v1426 = vadd.f32 0.0, %v1425
      %v1427 = vpop.f32.mrf.mxu0
      %1428 = vmatprep.mubr.bf16.mxu0 0
      %1429 = vmatmul.mubr.bf16.gmra.mxu0 %v1270
      %v1430 = vpop.f32.mrf.mxu0
      %v1431 = vadd.f32 0.0, %v1430
      %v1432 = vpop.f32.mrf.mxu0
      %v1433 = vpop.f32.mrf.mxu0
      %v1434 = vadd.f32 0.0, %v1433
      %v1435 = vpop.f32.mrf.mxu0
      %1436 = vmatprep.mubr.bf16.mxu0 0
      %1437 = vmatmul.mubr.bf16.gmra.mxu0 %v1273
      %v1438 = vpop.f32.mrf.mxu0
      %v1439 = vadd.f32 0.0, %v1438
      %v1440 = vpop.f32.mrf.mxu0
      %v1441 = vpop.f32.mrf.mxu0
      %v1442 = vadd.f32 0.0, %v1441
      %v1443 = vpop.f32.mrf.mxu0
      %1444 = vmatprep.mubr.bf16.mxu0 0
      %1445 = vmatmul.mubr.bf16.gmra.mxu0 %v1276
      %v1446 = vpop.f32.mrf.mxu0
      %v1447 = vadd.f32 0.0, %v1446
      %v1448 = vpop.f32.mrf.mxu0
      %v1449 = vpop.f32.mrf.mxu0
      %v1450 = vadd.f32 0.0, %v1449
      %v1451 = vpop.f32.mrf.mxu0
      %1452 = vmatprep.mubr.bf16.mxu0 0
      %1453 = vmatmul.mubr.bf16.gmra.mxu0 %v1279
      %v1454 = vpop.f32.mrf.mxu0
      %v1455 = vadd.f32 0.0, %v1454
      %v1456 = vpop.f32.mrf.mxu0
      %v1457 = vpop.f32.mrf.mxu0
      %v1458 = vadd.f32 0.0, %v1457
      %v1459 = vpop.f32.mrf.mxu0
      %1460 = vdwg.mxu0
      %v1461 = vadd.f32 %v1135, %v1319
      %v1462 = vadd.f32 %v1136, %v1322
      %v1463 = vadd.f32 %v1137, %v1327
      %v1464 = vadd.f32 %v1138, %v1330
      %v1465 = vadd.f32 %v1139, %v1335
      %v1466 = vadd.f32 %v1140, %v1338
      %v1467 = vadd.f32 %v1141, %v1343
      %v1468 = vadd.f32 %v1142, %v1346
      %v1469 = vadd.f32 %v1143, %v1351
      %v1470 = vadd.f32 %v1144, %v1354
      %v1471 = vadd.f32 %v1145, %v1359
      %v1472 = vadd.f32 %v1146, %v1362
      %v1473 = vadd.f32 %v1147, %v1367
      %v1474 = vadd.f32 %v1148, %v1370
      %v1475 = vadd.f32 %v1149, %v1375
      %v1476 = vadd.f32 %v1150, %v1378
      %v1477 = vadd.f32 %v1151, %v1383
      %v1478 = vadd.f32 %v1152, %v1386
      %v1479 = vadd.f32 %v1153, %v1391
      %v1480 = vadd.f32 %v1154, %v1394
      %v1481 = vadd.f32 %v1155, %v1399
      %v1482 = vadd.f32 %v1156, %v1402
      %v1483 = vadd.f32 %v1157, %v1407
      %v1484 = vadd.f32 %v1158, %v1410
      %v1485 = vadd.f32 %v1159, %v1415
      %v1486 = vadd.f32 %v1160, %v1418
      %v1487 = vadd.f32 %v1161, %v1423
      %v1488 = vadd.f32 %v1162, %v1426
      %v1489 = vadd.f32 %v1163, %v1431
      %v1490 = vadd.f32 %v1164, %v1434
      %v1491 = vadd.f32 %v1165, %v1439
      %v1492 = vadd.f32 %v1166, %v1442
      %v1493 = vadd.f32 %v1167, %v1447
      %v1494 = vadd.f32 %v1168, %v1450
      %v1495 = vadd.f32 %v1169, %v1455
      %v1496 = vadd.f32 %v1170, %v1458
      %v1497 = vld [vmem:[%s244 + $0x13] sm:$0xff]
      %v1498 = vld [vmem:[%s244 + $0x1b] sm:$0xff]
      %v1499 = vld [vmem:[%s244 + $0x23] sm:$0xff]
      %v1500 = vld [vmem:[%s244 + $0x2b] sm:$0xff]
      %v1501 = vld [vmem:[%s244 + $0x33] sm:$0xff]
      %v1502 = vld [vmem:[%s244 + $0x3b] sm:$0xff]
      %v1503 = vld [vmem:[%s244 + $0x43] sm:$0xff]
      %v1504 = vld [vmem:[%s244 + $0x4b] sm:$0xff]
      %v1505 = vld [vmem:[%s244 + $0x53] sm:$0xff]
      %v1506 = vld [vmem:[%s244 + $0x5b] sm:$0xff]
      %v1507 = vld [vmem:[%s244 + $0x63] sm:$0xff]
      %v1508 = vld [vmem:[%s244 + $0x6b] sm:$0xff]
      %v1509 = vld [vmem:[%s244 + $0x73] sm:$0xff]
      %v1510 = vld [vmem:[%s244 + $0x7b] sm:$0xff]
      %v1511 = vld [vmem:[%s244 + $0x83] sm:$0xff]
      %v1512 = vld [vmem:[%s244 + $0x8b] sm:$0xff]
      %v1513 = vld [vmem:[%s244 + $0x93] sm:$0xff]
      %v1514 = vld [vmem:[%s244 + $0x9b] sm:$0xff]
      %v1515 = vld [vmem:[%s244 + $0xa3] sm:$0xff]
      %v1516 = vld [vmem:[%s244 + $0xab] sm:$0xff]
      %v1517 = vld [vmem:[%s244 + $0xb3] sm:$0xff]
      %v1518 = vld [vmem:[%s244 + $0xbb] sm:$0xff]
      %v1519 = vld [vmem:[%s244 + $0xc3] sm:$0xff]
      %v1520 = vld [vmem:[%s244 + $0xcb] sm:$0xff]
      %v1521 = vld [vmem:[%s244 + $0xd3] sm:$0xff]
      %v1522 = vld [vmem:[%s244 + $0xdb] sm:$0xff]
      %v1523 = vld [vmem:[%s244 + $0xe3] sm:$0xff]
      %v1524 = vld [vmem:[%s244 + $0xeb] sm:$0xff]
      %v1525 = vld [vmem:[%s244 + $0xf3] sm:$0xff]
      %v1526 = vld [vmem:[%s244 + $0xfb] sm:$0xff]
      %v1527 = vld [vmem:[%s244 + $0x103] sm:$0xff]
      %v1528 = vld [vmem:[%s244 + $0x10b] sm:$0xff]
      %v1529 = vld [vmem:[%s244 + $0x113] sm:$0xff]
      %v1530 = vld [vmem:[%s244 + $0x11b] sm:$0xff]
      %v1531 = vld [vmem:[%s244 + $0x123] sm:$0xff]
      %v1532 = vld [vmem:[%s244 + $0x12b] sm:$0xff]
      %v1533 = vpack.c.bf16 %v1498, %v1497
      %v1534 = vpack.c.bf16 %v1500, %v1499
      %v1535 = vpack.c.bf16 %v1502, %v1501
      %v1536 = vpack.c.bf16 %v1504, %v1503
      %v1537 = vpack.c.bf16 %v1506, %v1505
      %v1538 = vpack.c.bf16 %v1508, %v1507
      %v1539 = vpack.c.bf16 %v1510, %v1509
      %v1540 = vpack.c.bf16 %v1512, %v1511
      %v1541 = vpack.c.bf16 %v1514, %v1513
      %v1542 = vpack.c.bf16 %v1516, %v1515
      %v1543 = vpack.c.bf16 %v1518, %v1517
      %v1544 = vpack.c.bf16 %v1520, %v1519
      %v1545 = vpack.c.bf16 %v1522, %v1521
      %v1546 = vpack.c.bf16 %v1524, %v1523
      %v1547 = vpack.c.bf16 %v1526, %v1525
      %v1548 = vpack.c.bf16 %v1528, %v1527
      %v1549 = vpack.c.bf16 %v1530, %v1529
      %v1550 = vpack.c.bf16 %v1532, %v1531
      %s1551 = scalar_lea.vmem %s248, 16
      %v1552 = vld [vmem:[%s1551] sm:$0xf]
      %v1554 = vsel %vm375, %v1533, 0
      %v1557 = vsel %vm375, %v1534, 0
      %v1560 = vsel %vm375, %v1535, 0
      %v1563 = vsel %vm375, %v1536, 0
      %v1566 = vsel %vm375, %v1537, 0
      %v1569 = vsel %vm375, %v1538, 0
      %v1572 = vsel %vm375, %v1539, 0
      %v1575 = vsel %vm375, %v1540, 0
      %v1578 = vsel %vm375, %v1541, 0
      %v1581 = vsel %vm375, %v1542, 0
      %v1584 = vsel %vm375, %v1543, 0
      %v1587 = vsel %vm375, %v1544, 0
      %v1590 = vsel %vm375, %v1545, 0
      %v1593 = vsel %vm375, %v1546, 0
      %v1596 = vsel %vm375, %v1547, 0
      %v1599 = vsel %vm375, %v1548, 0
      %v1602 = vsel %vm375, %v1549, 0
      %v1605 = vsel %vm375, %v1550, 0
      %v1608 = vsel %vm430, %v1552, 0
      %1610 = vmatprep.subr.bf16.mxu0 0
      %1611 = vmatpush1.bf16.msra.mxu0 0
      %1612 = vmatprep.subr.bf16.mxu0 0
      %1613 = vmatpush1.bf16.msra.mxu0 0
      %1614 = vmatprep.subr.bf16.mxu0 0
      %1615 = vmatpush1.bf16.msra.mxu0 0
      %1616 = vmatprep.subr.bf16.mxu0 0
      %1617 = vmatpush1.bf16.msra.mxu0 0
      %1618 = vmatprep.subr.bf16.mxu0 0
      %1619 = vmatpush1.bf16.msra.mxu0 0
      %1620 = vmatprep.subr.bf16.mxu0 0
      %1621 = vmatpush1.bf16.msra.mxu0 0
      %1622 = vmatprep.subr.bf16.mxu0 0
      %1623 = vmatpush1.bf16.msra.mxu0 0
      %1624 = vmatprep.subr.bf16.mxu0 0
      %1625 = vmatpush1.bf16.msra.mxu0 %v1608
      %1626 = vmatprep.subr.bf16.mxu0 0
      %1627 = vmatpush2.bf16.msra.mxu0 0
      %1628 = vmatprep.subr.bf16.mxu0 0
      %1629 = vmatpush2.bf16.msra.mxu0 0
      %1630 = vmatprep.subr.bf16.mxu0 0
      %1631 = vmatpush2.bf16.msra.mxu0 0
      %1632 = vmatprep.subr.bf16.mxu0 0
      %1633 = vmatpush2.bf16.msra.mxu0 0
      %1634 = vmatprep.subr.bf16.mxu0 0
      %1635 = vmatpush2.bf16.msra.mxu0 0
      %1636 = vmatprep.subr.bf16.mxu0 0
      %1637 = vmatpush2.bf16.msra.mxu0 0
      %1638 = vmatprep.subr.bf16.mxu0 0
      %1639 = vmatpush2.bf16.msra.mxu0 0
      %1640 = vmatprep.subr.bf16.mxu0 0
      %1641 = vmatpush2.bf16.msra.mxu0 0
      %1642 = vmatprep.mubr.bf16.mxu0 0
      %1643 = vmatmul.mubr.bf16.gmra.mxu0 %v1554
      %v1644 = vpop.f32.mrf.mxu0
      %v1645 = vadd.f32 0.0, %v1644
      %v1646 = vpop.f32.mrf.mxu0
      %v1647 = vpop.f32.mrf.mxu0
      %v1648 = vadd.f32 0.0, %v1647
      %v1649 = vpop.f32.mrf.mxu0
      %1650 = vmatprep.mubr.bf16.mxu0 0
      %1651 = vmatmul.mubr.bf16.gmra.mxu0 %v1557
      %v1652 = vpop.f32.mrf.mxu0
      %v1653 = vadd.f32 0.0, %v1652
      %v1654 = vpop.f32.mrf.mxu0
      %v1655 = vpop.f32.mrf.mxu0
      %v1656 = vadd.f32 0.0, %v1655
      %v1657 = vpop.f32.mrf.mxu0
      %1658 = vmatprep.mubr.bf16.mxu0 0
      %1659 = vmatmul.mubr.bf16.gmra.mxu0 %v1560
      %v1660 = vpop.f32.mrf.mxu0
      %v1661 = vadd.f32 0.0, %v1660
      %v1662 = vpop.f32.mrf.mxu0
      %v1663 = vpop.f32.mrf.mxu0
      %v1664 = vadd.f32 0.0, %v1663
      %v1665 = vpop.f32.mrf.mxu0
      %1666 = vmatprep.mubr.bf16.mxu0 0
      %1667 = vmatmul.mubr.bf16.gmra.mxu0 %v1563
      %v1668 = vpop.f32.mrf.mxu0
      %v1669 = vadd.f32 0.0, %v1668
      %v1670 = vpop.f32.mrf.mxu0
      %v1671 = vpop.f32.mrf.mxu0
      %v1672 = vadd.f32 0.0, %v1671
      %v1673 = vpop.f32.mrf.mxu0
      %1674 = vmatprep.mubr.bf16.mxu0 0
      %1675 = vmatmul.mubr.bf16.gmra.mxu0 %v1566
      %v1676 = vpop.f32.mrf.mxu0
      %v1677 = vadd.f32 0.0, %v1676
      %v1678 = vpop.f32.mrf.mxu0
      %v1679 = vpop.f32.mrf.mxu0
      %v1680 = vadd.f32 0.0, %v1679
      %v1681 = vpop.f32.mrf.mxu0
      %1682 = vmatprep.mubr.bf16.mxu0 0
      %1683 = vmatmul.mubr.bf16.gmra.mxu0 %v1569
      %v1684 = vpop.f32.mrf.mxu0
      %v1685 = vadd.f32 0.0, %v1684
      %v1686 = vpop.f32.mrf.mxu0
      %v1687 = vpop.f32.mrf.mxu0
      %v1688 = vadd.f32 0.0, %v1687
      %v1689 = vpop.f32.mrf.mxu0
      %1690 = vmatprep.mubr.bf16.mxu0 0
      %1691 = vmatmul.mubr.bf16.gmra.mxu0 %v1572
      %v1692 = vpop.f32.mrf.mxu0
      %v1693 = vadd.f32 0.0, %v1692
      %v1694 = vpop.f32.mrf.mxu0
      %v1695 = vpop.f32.mrf.mxu0
      %v1696 = vadd.f32 0.0, %v1695
      %v1697 = vpop.f32.mrf.mxu0
      %1698 = vmatprep.mubr.bf16.mxu0 0
      %1699 = vmatmul.mubr.bf16.gmra.mxu0 %v1575
      %v1700 = vpop.f32.mrf.mxu0
      %v1701 = vadd.f32 0.0, %v1700
      %v1702 = vpop.f32.mrf.mxu0
      %v1703 = vpop.f32.mrf.mxu0
      %v1704 = vadd.f32 0.0, %v1703
      %v1705 = vpop.f32.mrf.mxu0
      %1706 = vmatprep.mubr.bf16.mxu0 0
      %1707 = vmatmul.mubr.bf16.gmra.mxu0 %v1578
      %v1708 = vpop.f32.mrf.mxu0
      %v1709 = vadd.f32 0.0, %v1708
      %v1710 = vpop.f32.mrf.mxu0
      %v1711 = vpop.f32.mrf.mxu0
      %v1712 = vadd.f32 0.0, %v1711
      %v1713 = vpop.f32.mrf.mxu0
      %1714 = vmatprep.mubr.bf16.mxu0 0
      %1715 = vmatmul.mubr.bf16.gmra.mxu0 %v1581
      %v1716 = vpop.f32.mrf.mxu0
      %v1717 = vadd.f32 0.0, %v1716
      %v1718 = vpop.f32.mrf.mxu0
      %v1719 = vpop.f32.mrf.mxu0
      %v1720 = vadd.f32 0.0, %v1719
      %v1721 = vpop.f32.mrf.mxu0
      %1722 = vmatprep.mubr.bf16.mxu0 0
      %1723 = vmatmul.mubr.bf16.gmra.mxu0 %v1584
      %v1724 = vpop.f32.mrf.mxu0
      %v1725 = vadd.f32 0.0, %v1724
      %v1726 = vpop.f32.mrf.mxu0
      %v1727 = vpop.f32.mrf.mxu0
      %v1728 = vadd.f32 0.0, %v1727
      %v1729 = vpop.f32.mrf.mxu0
      %1730 = vmatprep.mubr.bf16.mxu0 0
      %1731 = vmatmul.mubr.bf16.gmra.mxu0 %v1587
      %v1732 = vpop.f32.mrf.mxu0
      %v1733 = vadd.f32 0.0, %v1732
      %v1734 = vpop.f32.mrf.mxu0
      %v1735 = vpop.f32.mrf.mxu0
      %v1736 = vadd.f32 0.0, %v1735
      %v1737 = vpop.f32.mrf.mxu0
      %1738 = vmatprep.mubr.bf16.mxu0 0
      %1739 = vmatmul.mubr.bf16.gmra.mxu0 %v1590
      %v1740 = vpop.f32.mrf.mxu0
      %v1741 = vadd.f32 0.0, %v1740
      %v1742 = vpop.f32.mrf.mxu0
      %v1743 = vpop.f32.mrf.mxu0
      %v1744 = vadd.f32 0.0, %v1743
      %v1745 = vpop.f32.mrf.mxu0
      %1746 = vmatprep.mubr.bf16.mxu0 0
      %1747 = vmatmul.mubr.bf16.gmra.mxu0 %v1593
      %v1748 = vpop.f32.mrf.mxu0
      %v1749 = vadd.f32 0.0, %v1748
      %v1750 = vpop.f32.mrf.mxu0
      %v1751 = vpop.f32.mrf.mxu0
      %v1752 = vadd.f32 0.0, %v1751
      %v1753 = vpop.f32.mrf.mxu0
      %1754 = vmatprep.mubr.bf16.mxu0 0
      %1755 = vmatmul.mubr.bf16.gmra.mxu0 %v1596
      %v1756 = vpop.f32.mrf.mxu0
      %v1757 = vadd.f32 0.0, %v1756
      %v1758 = vpop.f32.mrf.mxu0
      %v1759 = vpop.f32.mrf.mxu0
      %v1760 = vadd.f32 0.0, %v1759
      %v1761 = vpop.f32.mrf.mxu0
      %1762 = vmatprep.mubr.bf16.mxu0 0
      %1763 = vmatmul.mubr.bf16.gmra.mxu0 %v1599
      %v1764 = vpop.f32.mrf.mxu0
      %v1765 = vadd.f32 0.0, %v1764
      %v1766 = vpop.f32.mrf.mxu0
      %v1767 = vpop.f32.mrf.mxu0
      %v1768 = vadd.f32 0.0, %v1767
      %v1769 = vpop.f32.mrf.mxu0
      %1770 = vmatprep.mubr.bf16.mxu0 0
      %1771 = vmatmul.mubr.bf16.gmra.mxu0 %v1602
      %v1772 = vpop.f32.mrf.mxu0
      %v1773 = vadd.f32 0.0, %v1772
      %v1774 = vpop.f32.mrf.mxu0
      %v1775 = vpop.f32.mrf.mxu0
      %v1776 = vadd.f32 0.0, %v1775
      %v1777 = vpop.f32.mrf.mxu0
      %1778 = vmatprep.mubr.bf16.mxu0 0
      %1779 = vmatmul.mubr.bf16.gmra.mxu0 %v1605
      %v1780 = vpop.f32.mrf.mxu0
      %v1781 = vadd.f32 0.0, %v1780
      %v1782 = vpop.f32.mrf.mxu0
      %v1783 = vpop.f32.mrf.mxu0
      %v1784 = vadd.f32 0.0, %v1783
      %v1785 = vpop.f32.mrf.mxu0
      %1786 = vdwg.mxu0
      %v1787 = vadd.f32 %v1461, %v1645
      %v1788 = vadd.f32 %v1462, %v1648
      %v1789 = vadd.f32 %v1463, %v1653
      %v1790 = vadd.f32 %v1464, %v1656
      %v1791 = vadd.f32 %v1465, %v1661
      %v1792 = vadd.f32 %v1466, %v1664
      %v1793 = vadd.f32 %v1467, %v1669
      %v1794 = vadd.f32 %v1468, %v1672
      %v1795 = vadd.f32 %v1469, %v1677
      %v1796 = vadd.f32 %v1470, %v1680
      %v1797 = vadd.f32 %v1471, %v1685
      %v1798 = vadd.f32 %v1472, %v1688
      %v1799 = vadd.f32 %v1473, %v1693
      %v1800 = vadd.f32 %v1474, %v1696
      %v1801 = vadd.f32 %v1475, %v1701
      %v1802 = vadd.f32 %v1476, %v1704
      %v1803 = vadd.f32 %v1477, %v1709
      %v1804 = vadd.f32 %v1478, %v1712
      %v1805 = vadd.f32 %v1479, %v1717
      %v1806 = vadd.f32 %v1480, %v1720
      %v1807 = vadd.f32 %v1481, %v1725
      %v1808 = vadd.f32 %v1482, %v1728
      %v1809 = vadd.f32 %v1483, %v1733
      %v1810 = vadd.f32 %v1484, %v1736
      %v1811 = vadd.f32 %v1485, %v1741
      %v1812 = vadd.f32 %v1486, %v1744
      %v1813 = vadd.f32 %v1487, %v1749
      %v1814 = vadd.f32 %v1488, %v1752
      %v1815 = vadd.f32 %v1489, %v1757
      %v1816 = vadd.f32 %v1490, %v1760
      %v1817 = vadd.f32 %v1491, %v1765
      %v1818 = vadd.f32 %v1492, %v1768
      %v1819 = vadd.f32 %v1493, %v1773
      %v1820 = vadd.f32 %v1494, %v1776
      %v1821 = vadd.f32 %v1495, %v1781
      %v1822 = vadd.f32 %v1496, %v1784
      %v1823 = vld [vmem:[%s244 + $0x14] sm:$0xff]
      %v1824 = vld [vmem:[%s244 + $0x1c] sm:$0xff]
      %v1825 = vld [vmem:[%s244 + $0x24] sm:$0xff]
      %v1826 = vld [vmem:[%s244 + $0x2c] sm:$0xff]
      %v1827 = vld [vmem:[%s244 + $0x34] sm:$0xff]
      %v1828 = vld [vmem:[%s244 + $0x3c] sm:$0xff]
      %v1829 = vld [vmem:[%s244 + $0x44] sm:$0xff]
      %v1830 = vld [vmem:[%s244 + $0x4c] sm:$0xff]
      %v1831 = vld [vmem:[%s244 + $0x54] sm:$0xff]
      %v1832 = vld [vmem:[%s244 + $0x5c] sm:$0xff]
      %v1833 = vld [vmem:[%s244 + $0x64] sm:$0xff]
      %v1834 = vld [vmem:[%s244 + $0x6c] sm:$0xff]
      %v1835 = vld [vmem:[%s244 + $0x74] sm:$0xff]
      %v1836 = vld [vmem:[%s244 + $0x7c] sm:$0xff]
      %v1837 = vld [vmem:[%s244 + $0x84] sm:$0xff]
      %v1838 = vld [vmem:[%s244 + $0x8c] sm:$0xff]
      %v1839 = vld [vmem:[%s244 + $0x94] sm:$0xff]
      %v1840 = vld [vmem:[%s244 + $0x9c] sm:$0xff]
      %v1841 = vld [vmem:[%s244 + $0xa4] sm:$0xff]
      %v1842 = vld [vmem:[%s244 + $0xac] sm:$0xff]
      %v1843 = vld [vmem:[%s244 + $0xb4] sm:$0xff]
      %v1844 = vld [vmem:[%s244 + $0xbc] sm:$0xff]
      %v1845 = vld [vmem:[%s244 + $0xc4] sm:$0xff]
      %v1846 = vld [vmem:[%s244 + $0xcc] sm:$0xff]
      %v1847 = vld [vmem:[%s244 + $0xd4] sm:$0xff]
      %v1848 = vld [vmem:[%s244 + $0xdc] sm:$0xff]
      %v1849 = vld [vmem:[%s244 + $0xe4] sm:$0xff]
      %v1850 = vld [vmem:[%s244 + $0xec] sm:$0xff]
      %v1851 = vld [vmem:[%s244 + $0xf4] sm:$0xff]
      %v1852 = vld [vmem:[%s244 + $0xfc] sm:$0xff]
      %v1853 = vld [vmem:[%s244 + $0x104] sm:$0xff]
      %v1854 = vld [vmem:[%s244 + $0x10c] sm:$0xff]
      %v1855 = vld [vmem:[%s244 + $0x114] sm:$0xff]
      %v1856 = vld [vmem:[%s244 + $0x11c] sm:$0xff]
      %v1857 = vld [vmem:[%s244 + $0x124] sm:$0xff]
      %v1858 = vld [vmem:[%s244 + $0x12c] sm:$0xff]
      %v1859 = vpack.c.bf16 %v1824, %v1823
      %v1860 = vpack.c.bf16 %v1826, %v1825
      %v1861 = vpack.c.bf16 %v1828, %v1827
      %v1862 = vpack.c.bf16 %v1830, %v1829
      %v1863 = vpack.c.bf16 %v1832, %v1831
      %v1864 = vpack.c.bf16 %v1834, %v1833
      %v1865 = vpack.c.bf16 %v1836, %v1835
      %v1866 = vpack.c.bf16 %v1838, %v1837
      %v1867 = vpack.c.bf16 %v1840, %v1839
      %v1868 = vpack.c.bf16 %v1842, %v1841
      %v1869 = vpack.c.bf16 %v1844, %v1843
      %v1870 = vpack.c.bf16 %v1846, %v1845
      %v1871 = vpack.c.bf16 %v1848, %v1847
      %v1872 = vpack.c.bf16 %v1850, %v1849
      %v1873 = vpack.c.bf16 %v1852, %v1851
      %v1874 = vpack.c.bf16 %v1854, %v1853
      %v1875 = vpack.c.bf16 %v1856, %v1855
      %v1876 = vpack.c.bf16 %v1858, %v1857
      %s1877 = scalar_lea.vmem %s248, 20
      %v1878 = vld [vmem:[%s1877] sm:$0xf]
      %v1880 = vsel %vm375, %v1859, 0
      %v1883 = vsel %vm375, %v1860, 0
      %v1886 = vsel %vm375, %v1861, 0
      %v1889 = vsel %vm375, %v1862, 0
      %v1892 = vsel %vm375, %v1863, 0
      %v1895 = vsel %vm375, %v1864, 0
      %v1898 = vsel %vm375, %v1865, 0
      %v1901 = vsel %vm375, %v1866, 0
      %v1904 = vsel %vm375, %v1867, 0
      %v1907 = vsel %vm375, %v1868, 0
      %v1910 = vsel %vm375, %v1869, 0
      %v1913 = vsel %vm375, %v1870, 0
      %v1916 = vsel %vm375, %v1871, 0
      %v1919 = vsel %vm375, %v1872, 0
      %v1922 = vsel %vm375, %v1873, 0
      %v1925 = vsel %vm375, %v1874, 0
      %v1928 = vsel %vm375, %v1875, 0
      %v1931 = vsel %vm375, %v1876, 0
      %v1934 = vsel %vm430, %v1878, 0
      %1936 = vmatprep.subr.bf16.mxu0 0
      %1937 = vmatpush1.bf16.msra.mxu0 0
      %1938 = vmatprep.subr.bf16.mxu0 0
      %1939 = vmatpush1.bf16.msra.mxu0 0
      %1940 = vmatprep.subr.bf16.mxu0 0
      %1941 = vmatpush1.bf16.msra.mxu0 0
      %1942 = vmatprep.subr.bf16.mxu0 0
      %1943 = vmatpush1.bf16.msra.mxu0 0
      %1944 = vmatprep.subr.bf16.mxu0 0
      %1945 = vmatpush1.bf16.msra.mxu0 0
      %1946 = vmatprep.subr.bf16.mxu0 0
      %1947 = vmatpush1.bf16.msra.mxu0 0
      %1948 = vmatprep.subr.bf16.mxu0 0
      %1949 = vmatpush1.bf16.msra.mxu0 0
      %1950 = vmatprep.subr.bf16.mxu0 0
      %1951 = vmatpush1.bf16.msra.mxu0 %v1934
      %1952 = vmatprep.subr.bf16.mxu0 0
      %1953 = vmatpush2.bf16.msra.mxu0 0
      %1954 = vmatprep.subr.bf16.mxu0 0
      %1955 = vmatpush2.bf16.msra.mxu0 0
      %1956 = vmatprep.subr.bf16.mxu0 0
      %1957 = vmatpush2.bf16.msra.mxu0 0
      %1958 = vmatprep.subr.bf16.mxu0 0
      %1959 = vmatpush2.bf16.msra.mxu0 0
      %1960 = vmatprep.subr.bf16.mxu0 0
      %1961 = vmatpush2.bf16.msra.mxu0 0
      %1962 = vmatprep.subr.bf16.mxu0 0
      %1963 = vmatpush2.bf16.msra.mxu0 0
      %1964 = vmatprep.subr.bf16.mxu0 0
      %1965 = vmatpush2.bf16.msra.mxu0 0
      %1966 = vmatprep.subr.bf16.mxu0 0
      %1967 = vmatpush2.bf16.msra.mxu0 0
      %1968 = vmatprep.mubr.bf16.mxu0 0
      %1969 = vmatmul.mubr.bf16.gmra.mxu0 %v1880
      %v1970 = vpop.f32.mrf.mxu0
      %v1971 = vadd.f32 0.0, %v1970
      %v1972 = vpop.f32.mrf.mxu0
      %v1973 = vpop.f32.mrf.mxu0
      %v1974 = vadd.f32 0.0, %v1973
      %v1975 = vpop.f32.mrf.mxu0
      %1976 = vmatprep.mubr.bf16.mxu0 0
      %1977 = vmatmul.mubr.bf16.gmra.mxu0 %v1883
      %v1978 = vpop.f32.mrf.mxu0
      %v1979 = vadd.f32 0.0, %v1978
      %v1980 = vpop.f32.mrf.mxu0
      %v1981 = vpop.f32.mrf.mxu0
      %v1982 = vadd.f32 0.0, %v1981
      %v1983 = vpop.f32.mrf.mxu0
      %1984 = vmatprep.mubr.bf16.mxu0 0
      %1985 = vmatmul.mubr.bf16.gmra.mxu0 %v1886
      %v1986 = vpop.f32.mrf.mxu0
      %v1987 = vadd.f32 0.0, %v1986
      %v1988 = vpop.f32.mrf.mxu0
      %v1989 = vpop.f32.mrf.mxu0
      %v1990 = vadd.f32 0.0, %v1989
      %v1991 = vpop.f32.mrf.mxu0
      %1992 = vmatprep.mubr.bf16.mxu0 0
      %1993 = vmatmul.mubr.bf16.gmra.mxu0 %v1889
      %v1994 = vpop.f32.mrf.mxu0
      %v1995 = vadd.f32 0.0, %v1994
      %v1996 = vpop.f32.mrf.mxu0
      %v1997 = vpop.f32.mrf.mxu0
      %v1998 = vadd.f32 0.0, %v1997
      %v1999 = vpop.f32.mrf.mxu0
      %2000 = vmatprep.mubr.bf16.mxu0 0
      %2001 = vmatmul.mubr.bf16.gmra.mxu0 %v1892
      %v2002 = vpop.f32.mrf.mxu0
      %v2003 = vadd.f32 0.0, %v2002
      %v2004 = vpop.f32.mrf.mxu0
      %v2005 = vpop.f32.mrf.mxu0
      %v2006 = vadd.f32 0.0, %v2005
      %v2007 = vpop.f32.mrf.mxu0
      %2008 = vmatprep.mubr.bf16.mxu0 0
      %2009 = vmatmul.mubr.bf16.gmra.mxu0 %v1895
      %v2010 = vpop.f32.mrf.mxu0
      %v2011 = vadd.f32 0.0, %v2010
      %v2012 = vpop.f32.mrf.mxu0
      %v2013 = vpop.f32.mrf.mxu0
      %v2014 = vadd.f32 0.0, %v2013
      %v2015 = vpop.f32.mrf.mxu0
      %2016 = vmatprep.mubr.bf16.mxu0 0
      %2017 = vmatmul.mubr.bf16.gmra.mxu0 %v1898
      %v2018 = vpop.f32.mrf.mxu0
      %v2019 = vadd.f32 0.0, %v2018
      %v2020 = vpop.f32.mrf.mxu0
      %v2021 = vpop.f32.mrf.mxu0
      %v2022 = vadd.f32 0.0, %v2021
      %v2023 = vpop.f32.mrf.mxu0
      %2024 = vmatprep.mubr.bf16.mxu0 0
      %2025 = vmatmul.mubr.bf16.gmra.mxu0 %v1901
      %v2026 = vpop.f32.mrf.mxu0
      %v2027 = vadd.f32 0.0, %v2026
      %v2028 = vpop.f32.mrf.mxu0
      %v2029 = vpop.f32.mrf.mxu0
      %v2030 = vadd.f32 0.0, %v2029
      %v2031 = vpop.f32.mrf.mxu0
      %2032 = vmatprep.mubr.bf16.mxu0 0
      %2033 = vmatmul.mubr.bf16.gmra.mxu0 %v1904
      %v2034 = vpop.f32.mrf.mxu0
      %v2035 = vadd.f32 0.0, %v2034
      %v2036 = vpop.f32.mrf.mxu0
      %v2037 = vpop.f32.mrf.mxu0
      %v2038 = vadd.f32 0.0, %v2037
      %v2039 = vpop.f32.mrf.mxu0
      %2040 = vmatprep.mubr.bf16.mxu0 0
      %2041 = vmatmul.mubr.bf16.gmra.mxu0 %v1907
      %v2042 = vpop.f32.mrf.mxu0
      %v2043 = vadd.f32 0.0, %v2042
      %v2044 = vpop.f32.mrf.mxu0
      %v2045 = vpop.f32.mrf.mxu0
      %v2046 = vadd.f32 0.0, %v2045
      %v2047 = vpop.f32.mrf.mxu0
      %2048 = vmatprep.mubr.bf16.mxu0 0
      %2049 = vmatmul.mubr.bf16.gmra.mxu0 %v1910
      %v2050 = vpop.f32.mrf.mxu0
      %v2051 = vadd.f32 0.0, %v2050
      %v2052 = vpop.f32.mrf.mxu0
      %v2053 = vpop.f32.mrf.mxu0
      %v2054 = vadd.f32 0.0, %v2053
      %v2055 = vpop.f32.mrf.mxu0
      %2056 = vmatprep.mubr.bf16.mxu0 0
      %2057 = vmatmul.mubr.bf16.gmra.mxu0 %v1913
      %v2058 = vpop.f32.mrf.mxu0
      %v2059 = vadd.f32 0.0, %v2058
      %v2060 = vpop.f32.mrf.mxu0
      %v2061 = vpop.f32.mrf.mxu0
      %v2062 = vadd.f32 0.0, %v2061
      %v2063 = vpop.f32.mrf.mxu0
      %2064 = vmatprep.mubr.bf16.mxu0 0
      %2065 = vmatmul.mubr.bf16.gmra.mxu0 %v1916
      %v2066 = vpop.f32.mrf.mxu0
      %v2067 = vadd.f32 0.0, %v2066
      %v2068 = vpop.f32.mrf.mxu0
      %v2069 = vpop.f32.mrf.mxu0
      %v2070 = vadd.f32 0.0, %v2069
      %v2071 = vpop.f32.mrf.mxu0
      %2072 = vmatprep.mubr.bf16.mxu0 0
      %2073 = vmatmul.mubr.bf16.gmra.mxu0 %v1919
      %v2074 = vpop.f32.mrf.mxu0
      %v2075 = vadd.f32 0.0, %v2074
      %v2076 = vpop.f32.mrf.mxu0
      %v2077 = vpop.f32.mrf.mxu0
      %v2078 = vadd.f32 0.0, %v2077
      %v2079 = vpop.f32.mrf.mxu0
      %2080 = vmatprep.mubr.bf16.mxu0 0
      %2081 = vmatmul.mubr.bf16.gmra.mxu0 %v1922
      %v2082 = vpop.f32.mrf.mxu0
      %v2083 = vadd.f32 0.0, %v2082
      %v2084 = vpop.f32.mrf.mxu0
      %v2085 = vpop.f32.mrf.mxu0
      %v2086 = vadd.f32 0.0, %v2085
      %v2087 = vpop.f32.mrf.mxu0
      %2088 = vmatprep.mubr.bf16.mxu0 0
      %2089 = vmatmul.mubr.bf16.gmra.mxu0 %v1925
      %v2090 = vpop.f32.mrf.mxu0
      %v2091 = vadd.f32 0.0, %v2090
      %v2092 = vpop.f32.mrf.mxu0
      %v2093 = vpop.f32.mrf.mxu0
      %v2094 = vadd.f32 0.0, %v2093
      %v2095 = vpop.f32.mrf.mxu0
      %2096 = vmatprep.mubr.bf16.mxu0 0
      %2097 = vmatmul.mubr.bf16.gmra.mxu0 %v1928
      %v2098 = vpop.f32.mrf.mxu0
      %v2099 = vadd.f32 0.0, %v2098
      %v2100 = vpop.f32.mrf.mxu0
      %v2101 = vpop.f32.mrf.mxu0
      %v2102 = vadd.f32 0.0, %v2101
      %v2103 = vpop.f32.mrf.mxu0
      %2104 = vmatprep.mubr.bf16.mxu0 0
      %2105 = vmatmul.mubr.bf16.gmra.mxu0 %v1931
      %v2106 = vpop.f32.mrf.mxu0
      %v2107 = vadd.f32 0.0, %v2106
      %v2108 = vpop.f32.mrf.mxu0
      %v2109 = vpop.f32.mrf.mxu0
      %v2110 = vadd.f32 0.0, %v2109
      %v2111 = vpop.f32.mrf.mxu0
      %2112 = vdwg.mxu0
      %v2113 = vadd.f32 %v1787, %v1971
      %v2114 = vadd.f32 %v1788, %v1974
      %v2115 = vadd.f32 %v1789, %v1979
      %v2116 = vadd.f32 %v1790, %v1982
      %v2117 = vadd.f32 %v1791, %v1987
      %v2118 = vadd.f32 %v1792, %v1990
      %v2119 = vadd.f32 %v1793, %v1995
      %v2120 = vadd.f32 %v1794, %v1998
      %v2121 = vadd.f32 %v1795, %v2003
      %v2122 = vadd.f32 %v1796, %v2006
      %v2123 = vadd.f32 %v1797, %v2011
      %v2124 = vadd.f32 %v1798, %v2014
      %v2125 = vadd.f32 %v1799, %v2019
      %v2126 = vadd.f32 %v1800, %v2022
      %v2127 = vadd.f32 %v1801, %v2027
      %v2128 = vadd.f32 %v1802, %v2030
      %v2129 = vadd.f32 %v1803, %v2035
      %v2130 = vadd.f32 %v1804, %v2038
      %v2131 = vadd.f32 %v1805, %v2043
      %v2132 = vadd.f32 %v1806, %v2046
      %v2133 = vadd.f32 %v1807, %v2051
      %v2134 = vadd.f32 %v1808, %v2054
      %v2135 = vadd.f32 %v1809, %v2059
      %v2136 = vadd.f32 %v1810, %v2062
      %v2137 = vadd.f32 %v1811, %v2067
      %v2138 = vadd.f32 %v1812, %v2070
      %v2139 = vadd.f32 %v1813, %v2075
      %v2140 = vadd.f32 %v1814, %v2078
      %v2141 = vadd.f32 %v1815, %v2083
      %v2142 = vadd.f32 %v1816, %v2086
      %v2143 = vadd.f32 %v1817, %v2091
      %v2144 = vadd.f32 %v1818, %v2094
      %v2145 = vadd.f32 %v1819, %v2099
      %v2146 = vadd.f32 %v1820, %v2102
      %v2147 = vadd.f32 %v1821, %v2107
      %v2148 = vadd.f32 %v1822, %v2110
      %v2149 = vld [vmem:[%s244 + $0x24] sm:$0xff]
      %v2150 = vld [vmem:[%s244 + $0x2c] sm:$0xff]
      %v2151 = vld [vmem:[%s244 + $0x34] sm:$0xff]
      %v2152 = vld [vmem:[%s244 + $0x3c] sm:$0xff]
      %v2153 = vld [vmem:[%s244 + $0x44] sm:$0xff]
      %v2154 = vld [vmem:[%s244 + $0x4c] sm:$0xff]
      %v2155 = vld [vmem:[%s244 + $0x54] sm:$0xff]
      %v2156 = vld [vmem:[%s244 + $0x5c] sm:$0xff]
      %v2157 = vld [vmem:[%s244 + $0x64] sm:$0xff]
      %v2158 = vld [vmem:[%s244 + $0x6c] sm:$0xff]
      %v2159 = vld [vmem:[%s244 + $0x74] sm:$0xff]
      %v2160 = vld [vmem:[%s244 + $0x7c] sm:$0xff]
      %v2161 = vld [vmem:[%s244 + $0x84] sm:$0xff]
      %v2162 = vld [vmem:[%s244 + $0x8c] sm:$0xff]
      %v2163 = vld [vmem:[%s244 + $0x94] sm:$0xff]
      %v2164 = vld [vmem:[%s244 + $0x9c] sm:$0xff]
      %v2165 = vld [vmem:[%s244 + $0xa4] sm:$0xff]
      %v2166 = vld [vmem:[%s244 + $0xac] sm:$0xff]
      %v2167 = vld [vmem:[%s244 + $0xb4] sm:$0xff]
      %v2168 = vld [vmem:[%s244 + $0xbc] sm:$0xff]
      %v2169 = vld [vmem:[%s244 + $0xc4] sm:$0xff]
      %v2170 = vld [vmem:[%s244 + $0xcc] sm:$0xff]
      %v2171 = vld [vmem:[%s244 + $0xd4] sm:$0xff]
      %v2172 = vld [vmem:[%s244 + $0xdc] sm:$0xff]
      %v2173 = vld [vmem:[%s244 + $0xe4] sm:$0xff]
      %v2174 = vld [vmem:[%s244 + $0xec] sm:$0xff]
      %v2175 = vld [vmem:[%s244 + $0xf4] sm:$0xff]
      %v2176 = vld [vmem:[%s244 + $0xfc] sm:$0xff]
      %v2177 = vld [vmem:[%s244 + $0x104] sm:$0xff]
      %v2178 = vld [vmem:[%s244 + $0x10c] sm:$0xff]
      %v2179 = vld [vmem:[%s244 + $0x114] sm:$0xff]
      %v2180 = vld [vmem:[%s244 + $0x11c] sm:$0xff]
      %v2181 = vld [vmem:[%s244 + $0x124] sm:$0xff]
      %v2182 = vld [vmem:[%s244 + $0x12c] sm:$0xff]
      %v2183 = vld [vmem:[%s244 + $0x134] sm:$0xff]
      %v2184 = vld [vmem:[%s244 + $0x13c] sm:$0xff]
      %v2185 = vpack.c.bf16 %v2150, %v2149
      %v2186 = vpack.c.bf16 %v2152, %v2151
      %v2187 = vpack.c.bf16 %v2154, %v2153
      %v2188 = vpack.c.bf16 %v2156, %v2155
      %v2189 = vpack.c.bf16 %v2158, %v2157
      %v2190 = vpack.c.bf16 %v2160, %v2159
      %v2191 = vpack.c.bf16 %v2162, %v2161
      %v2192 = vpack.c.bf16 %v2164, %v2163
      %v2193 = vpack.c.bf16 %v2166, %v2165
      %v2194 = vpack.c.bf16 %v2168, %v2167
      %v2195 = vpack.c.bf16 %v2170, %v2169
      %v2196 = vpack.c.bf16 %v2172, %v2171
      %v2197 = vpack.c.bf16 %v2174, %v2173
      %v2198 = vpack.c.bf16 %v2176, %v2175
      %v2199 = vpack.c.bf16 %v2178, %v2177
      %v2200 = vpack.c.bf16 %v2180, %v2179
      %v2201 = vpack.c.bf16 %v2182, %v2181
      %v2202 = vpack.c.bf16 %v2184, %v2183
      %s2203 = scalar_lea.vmem %s248, 24
      %v2204 = vld [vmem:[%s2203] sm:$0xf]
      %v2206 = vsel %vm375, %v2185, 0
      %v2209 = vsel %vm375, %v2186, 0
      %v2212 = vsel %vm375, %v2187, 0
      %v2215 = vsel %vm375, %v2188, 0
      %v2218 = vsel %vm375, %v2189, 0
      %v2221 = vsel %vm375, %v2190, 0
      %v2224 = vsel %vm375, %v2191, 0
      %v2227 = vsel %vm375, %v2192, 0
      %v2230 = vsel %vm375, %v2193, 0
      %v2233 = vsel %vm375, %v2194, 0
      %v2236 = vsel %vm375, %v2195, 0
      %v2239 = vsel %vm375, %v2196, 0
      %v2242 = vsel %vm375, %v2197, 0
      %v2245 = vsel %vm375, %v2198, 0
      %v2248 = vsel %vm375, %v2199, 0
      %v2251 = vsel %vm375, %v2200, 0
      %v2254 = vsel %vm375, %v2201, 0
      %v2257 = vsel %vm375, %v2202, 0
      %v2260 = vsel %vm430, %v2204, 0
      %2262 = vmatprep.subr.bf16.mxu0 0
      %2263 = vmatpush1.bf16.msra.mxu0 0
      %2264 = vmatprep.subr.bf16.mxu0 0
      %2265 = vmatpush1.bf16.msra.mxu0 0
      %2266 = vmatprep.subr.bf16.mxu0 0
      %2267 = vmatpush1.bf16.msra.mxu0 0
      %2268 = vmatprep.subr.bf16.mxu0 0
      %2269 = vmatpush1.bf16.msra.mxu0 0
      %2270 = vmatprep.subr.bf16.mxu0 0
      %2271 = vmatpush1.bf16.msra.mxu0 0
      %2272 = vmatprep.subr.bf16.mxu0 0
      %2273 = vmatpush1.bf16.msra.mxu0 0
      %2274 = vmatprep.subr.bf16.mxu0 0
      %2275 = vmatpush1.bf16.msra.mxu0 0
      %2276 = vmatprep.subr.bf16.mxu0 0
      %2277 = vmatpush1.bf16.msra.mxu0 %v2260
      %2278 = vmatprep.subr.bf16.mxu0 0
      %2279 = vmatpush2.bf16.msra.mxu0 0
      %2280 = vmatprep.subr.bf16.mxu0 0
      %2281 = vmatpush2.bf16.msra.mxu0 0
      %2282 = vmatprep.subr.bf16.mxu0 0
      %2283 = vmatpush2.bf16.msra.mxu0 0
      %2284 = vmatprep.subr.bf16.mxu0 0
      %2285 = vmatpush2.bf16.msra.mxu0 0
      %2286 = vmatprep.subr.bf16.mxu0 0
      %2287 = vmatpush2.bf16.msra.mxu0 0
      %2288 = vmatprep.subr.bf16.mxu0 0
      %2289 = vmatpush2.bf16.msra.mxu0 0
      %2290 = vmatprep.subr.bf16.mxu0 0
      %2291 = vmatpush2.bf16.msra.mxu0 0
      %2292 = vmatprep.subr.bf16.mxu0 0
      %2293 = vmatpush2.bf16.msra.mxu0 0
      %2294 = vmatprep.mubr.bf16.mxu0 0
      %2295 = vmatmul.mubr.bf16.gmra.mxu0 %v2206
      %v2296 = vpop.f32.mrf.mxu0
      %v2297 = vadd.f32 0.0, %v2296
      %v2298 = vpop.f32.mrf.mxu0
      %v2299 = vpop.f32.mrf.mxu0
      %v2300 = vadd.f32 0.0, %v2299
      %v2301 = vpop.f32.mrf.mxu0
      %2302 = vmatprep.mubr.bf16.mxu0 0
      %2303 = vmatmul.mubr.bf16.gmra.mxu0 %v2209
      %v2304 = vpop.f32.mrf.mxu0
      %v2305 = vadd.f32 0.0, %v2304
      %v2306 = vpop.f32.mrf.mxu0
      %v2307 = vpop.f32.mrf.mxu0
      %v2308 = vadd.f32 0.0, %v2307
      %v2309 = vpop.f32.mrf.mxu0
      %2310 = vmatprep.mubr.bf16.mxu0 0
      %2311 = vmatmul.mubr.bf16.gmra.mxu0 %v2212
      %v2312 = vpop.f32.mrf.mxu0
      %v2313 = vadd.f32 0.0, %v2312
      %v2314 = vpop.f32.mrf.mxu0
      %v2315 = vpop.f32.mrf.mxu0
      %v2316 = vadd.f32 0.0, %v2315
      %v2317 = vpop.f32.mrf.mxu0
      %2318 = vmatprep.mubr.bf16.mxu0 0
      %2319 = vmatmul.mubr.bf16.gmra.mxu0 %v2215
      %v2320 = vpop.f32.mrf.mxu0
      %v2321 = vadd.f32 0.0, %v2320
      %v2322 = vpop.f32.mrf.mxu0
      %v2323 = vpop.f32.mrf.mxu0
      %v2324 = vadd.f32 0.0, %v2323
      %v2325 = vpop.f32.mrf.mxu0
      %2326 = vmatprep.mubr.bf16.mxu0 0
      %2327 = vmatmul.mubr.bf16.gmra.mxu0 %v2218
      %v2328 = vpop.f32.mrf.mxu0
      %v2329 = vadd.f32 0.0, %v2328
      %v2330 = vpop.f32.mrf.mxu0
      %v2331 = vpop.f32.mrf.mxu0
      %v2332 = vadd.f32 0.0, %v2331
      %v2333 = vpop.f32.mrf.mxu0
      %2334 = vmatprep.mubr.bf16.mxu0 0
      %2335 = vmatmul.mubr.bf16.gmra.mxu0 %v2221
      %v2336 = vpop.f32.mrf.mxu0
      %v2337 = vadd.f32 0.0, %v2336
      %v2338 = vpop.f32.mrf.mxu0
      %v2339 = vpop.f32.mrf.mxu0
      %v2340 = vadd.f32 0.0, %v2339
      %v2341 = vpop.f32.mrf.mxu0
      %2342 = vmatprep.mubr.bf16.mxu0 0
      %2343 = vmatmul.mubr.bf16.gmra.mxu0 %v2224
      %v2344 = vpop.f32.mrf.mxu0
      %v2345 = vadd.f32 0.0, %v2344
      %v2346 = vpop.f32.mrf.mxu0
      %v2347 = vpop.f32.mrf.mxu0
      %v2348 = vadd.f32 0.0, %v2347
      %v2349 = vpop.f32.mrf.mxu0
      %2350 = vmatprep.mubr.bf16.mxu0 0
      %2351 = vmatmul.mubr.bf16.gmra.mxu0 %v2227
      %v2352 = vpop.f32.mrf.mxu0
      %v2353 = vadd.f32 0.0, %v2352
      %v2354 = vpop.f32.mrf.mxu0
      %v2355 = vpop.f32.mrf.mxu0
      %v2356 = vadd.f32 0.0, %v2355
      %v2357 = vpop.f32.mrf.mxu0
      %2358 = vmatprep.mubr.bf16.mxu0 0
      %2359 = vmatmul.mubr.bf16.gmra.mxu0 %v2230
      %v2360 = vpop.f32.mrf.mxu0
      %v2361 = vadd.f32 0.0, %v2360
      %v2362 = vpop.f32.mrf.mxu0
      %v2363 = vpop.f32.mrf.mxu0
      %v2364 = vadd.f32 0.0, %v2363
      %v2365 = vpop.f32.mrf.mxu0
      %2366 = vmatprep.mubr.bf16.mxu0 0
      %2367 = vmatmul.mubr.bf16.gmra.mxu0 %v2233
      %v2368 = vpop.f32.mrf.mxu0
      %v2369 = vadd.f32 0.0, %v2368
      %v2370 = vpop.f32.mrf.mxu0
      %v2371 = vpop.f32.mrf.mxu0
      %v2372 = vadd.f32 0.0, %v2371
      %v2373 = vpop.f32.mrf.mxu0
      %2374 = vmatprep.mubr.bf16.mxu0 0
      %2375 = vmatmul.mubr.bf16.gmra.mxu0 %v2236
      %v2376 = vpop.f32.mrf.mxu0
      %v2377 = vadd.f32 0.0, %v2376
      %v2378 = vpop.f32.mrf.mxu0
      %v2379 = vpop.f32.mrf.mxu0
      %v2380 = vadd.f32 0.0, %v2379
      %v2381 = vpop.f32.mrf.mxu0
      %2382 = vmatprep.mubr.bf16.mxu0 0
      %2383 = vmatmul.mubr.bf16.gmra.mxu0 %v2239
      %v2384 = vpop.f32.mrf.mxu0
      %v2385 = vadd.f32 0.0, %v2384
      %v2386 = vpop.f32.mrf.mxu0
      %v2387 = vpop.f32.mrf.mxu0
      %v2388 = vadd.f32 0.0, %v2387
      %v2389 = vpop.f32.mrf.mxu0
      %2390 = vmatprep.mubr.bf16.mxu0 0
      %2391 = vmatmul.mubr.bf16.gmra.mxu0 %v2242
      %v2392 = vpop.f32.mrf.mxu0
      %v2393 = vadd.f32 0.0, %v2392
      %v2394 = vpop.f32.mrf.mxu0
      %v2395 = vpop.f32.mrf.mxu0
      %v2396 = vadd.f32 0.0, %v2395
      %v2397 = vpop.f32.mrf.mxu0
      %2398 = vmatprep.mubr.bf16.mxu0 0
      %2399 = vmatmul.mubr.bf16.gmra.mxu0 %v2245
      %v2400 = vpop.f32.mrf.mxu0
      %v2401 = vadd.f32 0.0, %v2400
      %v2402 = vpop.f32.mrf.mxu0
      %v2403 = vpop.f32.mrf.mxu0
      %v2404 = vadd.f32 0.0, %v2403
      %v2405 = vpop.f32.mrf.mxu0
      %2406 = vmatprep.mubr.bf16.mxu0 0
      %2407 = vmatmul.mubr.bf16.gmra.mxu0 %v2248
      %v2408 = vpop.f32.mrf.mxu0
      %v2409 = vadd.f32 0.0, %v2408
      %v2410 = vpop.f32.mrf.mxu0
      %v2411 = vpop.f32.mrf.mxu0
      %v2412 = vadd.f32 0.0, %v2411
      %v2413 = vpop.f32.mrf.mxu0
      %2414 = vmatprep.mubr.bf16.mxu0 0
      %2415 = vmatmul.mubr.bf16.gmra.mxu0 %v2251
      %v2416 = vpop.f32.mrf.mxu0
      %v2417 = vadd.f32 0.0, %v2416
      %v2418 = vpop.f32.mrf.mxu0
      %v2419 = vpop.f32.mrf.mxu0
      %v2420 = vadd.f32 0.0, %v2419
      %v2421 = vpop.f32.mrf.mxu0
      %2422 = vmatprep.mubr.bf16.mxu0 0
      %2423 = vmatmul.mubr.bf16.gmra.mxu0 %v2254
      %v2424 = vpop.f32.mrf.mxu0
      %v2425 = vadd.f32 0.0, %v2424
      %v2426 = vpop.f32.mrf.mxu0
      %v2427 = vpop.f32.mrf.mxu0
      %v2428 = vadd.f32 0.0, %v2427
      %v2429 = vpop.f32.mrf.mxu0
      %2430 = vmatprep.mubr.bf16.mxu0 0
      %2431 = vmatmul.mubr.bf16.gmra.mxu0 %v2257
      %v2432 = vpop.f32.mrf.mxu0
      %v2433 = vadd.f32 0.0, %v2432
      %v2434 = vpop.f32.mrf.mxu0
      %v2435 = vpop.f32.mrf.mxu0
      %v2436 = vadd.f32 0.0, %v2435
      %v2437 = vpop.f32.mrf.mxu0
      %2438 = vdwg.mxu0
      %v2439 = vadd.f32 %v2113, %v2297
      %v2440 = vadd.f32 %v2114, %v2300
      %v2441 = vadd.f32 %v2115, %v2305
      %v2442 = vadd.f32 %v2116, %v2308
      %v2443 = vadd.f32 %v2117, %v2313
      %v2444 = vadd.f32 %v2118, %v2316
      %v2445 = vadd.f32 %v2119, %v2321
      %v2446 = vadd.f32 %v2120, %v2324
      %v2447 = vadd.f32 %v2121, %v2329
      %v2448 = vadd.f32 %v2122, %v2332
      %v2449 = vadd.f32 %v2123, %v2337
      %v2450 = vadd.f32 %v2124, %v2340
      %v2451 = vadd.f32 %v2125, %v2345
      %v2452 = vadd.f32 %v2126, %v2348
      %v2453 = vadd.f32 %v2127, %v2353
      %v2454 = vadd.f32 %v2128, %v2356
      %v2455 = vadd.f32 %v2129, %v2361
      %v2456 = vadd.f32 %v2130, %v2364
      %v2457 = vadd.f32 %v2131, %v2369
      %v2458 = vadd.f32 %v2132, %v2372
      %v2459 = vadd.f32 %v2133, %v2377
      %v2460 = vadd.f32 %v2134, %v2380
      %v2461 = vadd.f32 %v2135, %v2385
      %v2462 = vadd.f32 %v2136, %v2388
      %v2463 = vadd.f32 %v2137, %v2393
      %v2464 = vadd.f32 %v2138, %v2396
      %v2465 = vadd.f32 %v2139, %v2401
      %v2466 = vadd.f32 %v2140, %v2404
      %v2467 = vadd.f32 %v2141, %v2409
      %v2468 = vadd.f32 %v2142, %v2412
      %v2469 = vadd.f32 %v2143, %v2417
      %v2470 = vadd.f32 %v2144, %v2420
      %v2471 = vadd.f32 %v2145, %v2425
      %v2472 = vadd.f32 %v2146, %v2428
      %v2473 = vadd.f32 %v2147, %v2433
      %v2474 = vadd.f32 %v2148, %v2436
      %v2475 = vld [vmem:[%s244 + $0x25] sm:$0xff]
      %v2476 = vld [vmem:[%s244 + $0x2d] sm:$0xff]
      %v2477 = vld [vmem:[%s244 + $0x35] sm:$0xff]
      %v2478 = vld [vmem:[%s244 + $0x3d] sm:$0xff]
      %v2479 = vld [vmem:[%s244 + $0x45] sm:$0xff]
      %v2480 = vld [vmem:[%s244 + $0x4d] sm:$0xff]
      %v2481 = vld [vmem:[%s244 + $0x55] sm:$0xff]
      %v2482 = vld [vmem:[%s244 + $0x5d] sm:$0xff]
      %v2483 = vld [vmem:[%s244 + $0x65] sm:$0xff]
      %v2484 = vld [vmem:[%s244 + $0x6d] sm:$0xff]
      %v2485 = vld [vmem:[%s244 + $0x75] sm:$0xff]
      %v2486 = vld [vmem:[%s244 + $0x7d] sm:$0xff]
      %v2487 = vld [vmem:[%s244 + $0x85] sm:$0xff]
      %v2488 = vld [vmem:[%s244 + $0x8d] sm:$0xff]
      %v2489 = vld [vmem:[%s244 + $0x95] sm:$0xff]
      %v2490 = vld [vmem:[%s244 + $0x9d] sm:$0xff]
      %v2491 = vld [vmem:[%s244 + $0xa5] sm:$0xff]
      %v2492 = vld [vmem:[%s244 + $0xad] sm:$0xff]
      %v2493 = vld [vmem:[%s244 + $0xb5] sm:$0xff]
      %v2494 = vld [vmem:[%s244 + $0xbd] sm:$0xff]
      %v2495 = vld [vmem:[%s244 + $0xc5] sm:$0xff]
      %v2496 = vld [vmem:[%s244 + $0xcd] sm:$0xff]
      %v2497 = vld [vmem:[%s244 + $0xd5] sm:$0xff]
      %v2498 = vld [vmem:[%s244 + $0xdd] sm:$0xff]
      %v2499 = vld [vmem:[%s244 + $0xe5] sm:$0xff]
      %v2500 = vld [vmem:[%s244 + $0xed] sm:$0xff]
      %v2501 = vld [vmem:[%s244 + $0xf5] sm:$0xff]
      %v2502 = vld [vmem:[%s244 + $0xfd] sm:$0xff]
      %v2503 = vld [vmem:[%s244 + $0x105] sm:$0xff]
      %v2504 = vld [vmem:[%s244 + $0x10d] sm:$0xff]
      %v2505 = vld [vmem:[%s244 + $0x115] sm:$0xff]
      %v2506 = vld [vmem:[%s244 + $0x11d] sm:$0xff]
      %v2507 = vld [vmem:[%s244 + $0x125] sm:$0xff]
      %v2508 = vld [vmem:[%s244 + $0x12d] sm:$0xff]
      %v2509 = vld [vmem:[%s244 + $0x135] sm:$0xff]
      %v2510 = vld [vmem:[%s244 + $0x13d] sm:$0xff]
      %v2511 = vpack.c.bf16 %v2476, %v2475
      %v2512 = vpack.c.bf16 %v2478, %v2477
      %v2513 = vpack.c.bf16 %v2480, %v2479
      %v2514 = vpack.c.bf16 %v2482, %v2481
      %v2515 = vpack.c.bf16 %v2484, %v2483
      %v2516 = vpack.c.bf16 %v2486, %v2485
      %v2517 = vpack.c.bf16 %v2488, %v2487
      %v2518 = vpack.c.bf16 %v2490, %v2489
      %v2519 = vpack.c.bf16 %v2492, %v2491
      %v2520 = vpack.c.bf16 %v2494, %v2493
      %v2521 = vpack.c.bf16 %v2496, %v2495
      %v2522 = vpack.c.bf16 %v2498, %v2497
      %v2523 = vpack.c.bf16 %v2500, %v2499
      %v2524 = vpack.c.bf16 %v2502, %v2501
      %v2525 = vpack.c.bf16 %v2504, %v2503
      %v2526 = vpack.c.bf16 %v2506, %v2505
      %v2527 = vpack.c.bf16 %v2508, %v2507
      %v2528 = vpack.c.bf16 %v2510, %v2509
      %s2529 = scalar_lea.vmem %s248, 28
      %v2530 = vld [vmem:[%s2529] sm:$0xf]
      %v2532 = vsel %vm375, %v2511, 0
      %v2535 = vsel %vm375, %v2512, 0
      %v2538 = vsel %vm375, %v2513, 0
      %v2541 = vsel %vm375, %v2514, 0
      %v2544 = vsel %vm375, %v2515, 0
      %v2547 = vsel %vm375, %v2516, 0
      %v2550 = vsel %vm375, %v2517, 0
      %v2553 = vsel %vm375, %v2518, 0
      %v2556 = vsel %vm375, %v2519, 0
      %v2559 = vsel %vm375, %v2520, 0
      %v2562 = vsel %vm375, %v2521, 0
      %v2565 = vsel %vm375, %v2522, 0
      %v2568 = vsel %vm375, %v2523, 0
      %v2571 = vsel %vm375, %v2524, 0
      %v2574 = vsel %vm375, %v2525, 0
      %v2577 = vsel %vm375, %v2526, 0
      %v2580 = vsel %vm375, %v2527, 0
      %v2583 = vsel %vm375, %v2528, 0
      %v2586 = vsel %vm430, %v2530, 0
      %2588 = vmatprep.subr.bf16.mxu0 0
      %2589 = vmatpush1.bf16.msra.mxu0 0
      %2590 = vmatprep.subr.bf16.mxu0 0
      %2591 = vmatpush1.bf16.msra.mxu0 0
      %2592 = vmatprep.subr.bf16.mxu0 0
      %2593 = vmatpush1.bf16.msra.mxu0 0
      %2594 = vmatprep.subr.bf16.mxu0 0
      %2595 = vmatpush1.bf16.msra.mxu0 0
      %2596 = vmatprep.subr.bf16.mxu0 0
      %2597 = vmatpush1.bf16.msra.mxu0 0
      %2598 = vmatprep.subr.bf16.mxu0 0
      %2599 = vmatpush1.bf16.msra.mxu0 0
      %2600 = vmatprep.subr.bf16.mxu0 0
      %2601 = vmatpush1.bf16.msra.mxu0 0
      %2602 = vmatprep.subr.bf16.mxu0 0
      %2603 = vmatpush1.bf16.msra.mxu0 %v2586
      %2604 = vmatprep.subr.bf16.mxu0 0
      %2605 = vmatpush2.bf16.msra.mxu0 0
      %2606 = vmatprep.subr.bf16.mxu0 0
      %2607 = vmatpush2.bf16.msra.mxu0 0
      %2608 = vmatprep.subr.bf16.mxu0 0
      %2609 = vmatpush2.bf16.msra.mxu0 0
      %2610 = vmatprep.subr.bf16.mxu0 0
      %2611 = vmatpush2.bf16.msra.mxu0 0
      %2612 = vmatprep.subr.bf16.mxu0 0
      %2613 = vmatpush2.bf16.msra.mxu0 0
      %2614 = vmatprep.subr.bf16.mxu0 0
      %2615 = vmatpush2.bf16.msra.mxu0 0
      %2616 = vmatprep.subr.bf16.mxu0 0
      %2617 = vmatpush2.bf16.msra.mxu0 0
      %2618 = vmatprep.subr.bf16.mxu0 0
      %2619 = vmatpush2.bf16.msra.mxu0 0
      %2620 = vmatprep.mubr.bf16.mxu0 0
      %2621 = vmatmul.mubr.bf16.gmra.mxu0 %v2532
      %v2622 = vpop.f32.mrf.mxu0
      %v2623 = vadd.f32 0.0, %v2622
      %v2624 = vpop.f32.mrf.mxu0
      %v2625 = vpop.f32.mrf.mxu0
      %v2626 = vadd.f32 0.0, %v2625
      %v2627 = vpop.f32.mrf.mxu0
      %2628 = vmatprep.mubr.bf16.mxu0 0
      %2629 = vmatmul.mubr.bf16.gmra.mxu0 %v2535
      %v2630 = vpop.f32.mrf.mxu0
      %v2631 = vadd.f32 0.0, %v2630
      %v2632 = vpop.f32.mrf.mxu0
      %v2633 = vpop.f32.mrf.mxu0
      %v2634 = vadd.f32 0.0, %v2633
      %v2635 = vpop.f32.mrf.mxu0
      %2636 = vmatprep.mubr.bf16.mxu0 0
      %2637 = vmatmul.mubr.bf16.gmra.mxu0 %v2538
      %v2638 = vpop.f32.mrf.mxu0
      %v2639 = vadd.f32 0.0, %v2638
      %v2640 = vpop.f32.mrf.mxu0
      %v2641 = vpop.f32.mrf.mxu0
      %v2642 = vadd.f32 0.0, %v2641
      %v2643 = vpop.f32.mrf.mxu0
      %2644 = vmatprep.mubr.bf16.mxu0 0
      %2645 = vmatmul.mubr.bf16.gmra.mxu0 %v2541
      %v2646 = vpop.f32.mrf.mxu0
      %v2647 = vadd.f32 0.0, %v2646
      %v2648 = vpop.f32.mrf.mxu0
      %v2649 = vpop.f32.mrf.mxu0
      %v2650 = vadd.f32 0.0, %v2649
      %v2651 = vpop.f32.mrf.mxu0
      %2652 = vmatprep.mubr.bf16.mxu0 0
      %2653 = vmatmul.mubr.bf16.gmra.mxu0 %v2544
      %v2654 = vpop.f32.mrf.mxu0
      %v2655 = vadd.f32 0.0, %v2654
      %v2656 = vpop.f32.mrf.mxu0
      %v2657 = vpop.f32.mrf.mxu0
      %v2658 = vadd.f32 0.0, %v2657
      %v2659 = vpop.f32.mrf.mxu0
      %2660 = vmatprep.mubr.bf16.mxu0 0
      %2661 = vmatmul.mubr.bf16.gmra.mxu0 %v2547
      %v2662 = vpop.f32.mrf.mxu0
      %v2663 = vadd.f32 0.0, %v2662
      %v2664 = vpop.f32.mrf.mxu0
      %v2665 = vpop.f32.mrf.mxu0
      %v2666 = vadd.f32 0.0, %v2665
      %v2667 = vpop.f32.mrf.mxu0
      %2668 = vmatprep.mubr.bf16.mxu0 0
      %2669 = vmatmul.mubr.bf16.gmra.mxu0 %v2550
      %v2670 = vpop.f32.mrf.mxu0
      %v2671 = vadd.f32 0.0, %v2670
      %v2672 = vpop.f32.mrf.mxu0
      %v2673 = vpop.f32.mrf.mxu0
      %v2674 = vadd.f32 0.0, %v2673
      %v2675 = vpop.f32.mrf.mxu0
      %2676 = vmatprep.mubr.bf16.mxu0 0
      %2677 = vmatmul.mubr.bf16.gmra.mxu0 %v2553
      %v2678 = vpop.f32.mrf.mxu0
      %v2679 = vadd.f32 0.0, %v2678
      %v2680 = vpop.f32.mrf.mxu0
      %v2681 = vpop.f32.mrf.mxu0
      %v2682 = vadd.f32 0.0, %v2681
      %v2683 = vpop.f32.mrf.mxu0
      %2684 = vmatprep.mubr.bf16.mxu0 0
      %2685 = vmatmul.mubr.bf16.gmra.mxu0 %v2556
      %v2686 = vpop.f32.mrf.mxu0
      %v2687 = vadd.f32 0.0, %v2686
      %v2688 = vpop.f32.mrf.mxu0
      %v2689 = vpop.f32.mrf.mxu0
      %v2690 = vadd.f32 0.0, %v2689
      %v2691 = vpop.f32.mrf.mxu0
      %2692 = vmatprep.mubr.bf16.mxu0 0
      %2693 = vmatmul.mubr.bf16.gmra.mxu0 %v2559
      %v2694 = vpop.f32.mrf.mxu0
      %v2695 = vadd.f32 0.0, %v2694
      %v2696 = vpop.f32.mrf.mxu0
      %v2697 = vpop.f32.mrf.mxu0
      %v2698 = vadd.f32 0.0, %v2697
      %v2699 = vpop.f32.mrf.mxu0
      %2700 = vmatprep.mubr.bf16.mxu0 0
      %2701 = vmatmul.mubr.bf16.gmra.mxu0 %v2562
      %v2702 = vpop.f32.mrf.mxu0
      %v2703 = vadd.f32 0.0, %v2702
      %v2704 = vpop.f32.mrf.mxu0
      %v2705 = vpop.f32.mrf.mxu0
      %v2706 = vadd.f32 0.0, %v2705
      %v2707 = vpop.f32.mrf.mxu0
      %2708 = vmatprep.mubr.bf16.mxu0 0
      %2709 = vmatmul.mubr.bf16.gmra.mxu0 %v2565
      %v2710 = vpop.f32.mrf.mxu0
      %v2711 = vadd.f32 0.0, %v2710
      %v2712 = vpop.f32.mrf.mxu0
      %v2713 = vpop.f32.mrf.mxu0
      %v2714 = vadd.f32 0.0, %v2713
      %v2715 = vpop.f32.mrf.mxu0
      %2716 = vmatprep.mubr.bf16.mxu0 0
      %2717 = vmatmul.mubr.bf16.gmra.mxu0 %v2568
      %v2718 = vpop.f32.mrf.mxu0
      %v2719 = vadd.f32 0.0, %v2718
      %v2720 = vpop.f32.mrf.mxu0
      %v2721 = vpop.f32.mrf.mxu0
      %v2722 = vadd.f32 0.0, %v2721
      %v2723 = vpop.f32.mrf.mxu0
      %2724 = vmatprep.mubr.bf16.mxu0 0
      %2725 = vmatmul.mubr.bf16.gmra.mxu0 %v2571
      %v2726 = vpop.f32.mrf.mxu0
      %v2727 = vadd.f32 0.0, %v2726
      %v2728 = vpop.f32.mrf.mxu0
      %v2729 = vpop.f32.mrf.mxu0
      %v2730 = vadd.f32 0.0, %v2729
      %v2731 = vpop.f32.mrf.mxu0
      %2732 = vmatprep.mubr.bf16.mxu0 0
      %2733 = vmatmul.mubr.bf16.gmra.mxu0 %v2574
      %v2734 = vpop.f32.mrf.mxu0
      %v2735 = vadd.f32 0.0, %v2734
      %v2736 = vpop.f32.mrf.mxu0
      %v2737 = vpop.f32.mrf.mxu0
      %v2738 = vadd.f32 0.0, %v2737
      %v2739 = vpop.f32.mrf.mxu0
      %2740 = vmatprep.mubr.bf16.mxu0 0
      %2741 = vmatmul.mubr.bf16.gmra.mxu0 %v2577
      %v2742 = vpop.f32.mrf.mxu0
      %v2743 = vadd.f32 0.0, %v2742
      %v2744 = vpop.f32.mrf.mxu0
      %v2745 = vpop.f32.mrf.mxu0
      %v2746 = vadd.f32 0.0, %v2745
      %v2747 = vpop.f32.mrf.mxu0
      %2748 = vmatprep.mubr.bf16.mxu0 0
      %2749 = vmatmul.mubr.bf16.gmra.mxu0 %v2580
      %v2750 = vpop.f32.mrf.mxu0
      %v2751 = vadd.f32 0.0, %v2750
      %v2752 = vpop.f32.mrf.mxu0
      %v2753 = vpop.f32.mrf.mxu0
      %v2754 = vadd.f32 0.0, %v2753
      %v2755 = vpop.f32.mrf.mxu0
      %2756 = vmatprep.mubr.bf16.mxu0 0
      %2757 = vmatmul.mubr.bf16.gmra.mxu0 %v2583
      %v2758 = vpop.f32.mrf.mxu0
      %v2759 = vadd.f32 0.0, %v2758
      %v2760 = vpop.f32.mrf.mxu0
      %v2761 = vpop.f32.mrf.mxu0
      %v2762 = vadd.f32 0.0, %v2761
      %v2763 = vpop.f32.mrf.mxu0
      %2764 = vdwg.mxu0
      %v2765 = vadd.f32 %v2439, %v2623
      %v2766 = vadd.f32 %v2440, %v2626
      %v2767 = vadd.f32 %v2441, %v2631
      %v2768 = vadd.f32 %v2442, %v2634
      %v2769 = vadd.f32 %v2443, %v2639
      %v2770 = vadd.f32 %v2444, %v2642
      %v2771 = vadd.f32 %v2445, %v2647
      %v2772 = vadd.f32 %v2446, %v2650
      %v2773 = vadd.f32 %v2447, %v2655
      %v2774 = vadd.f32 %v2448, %v2658
      %v2775 = vadd.f32 %v2449, %v2663
      %v2776 = vadd.f32 %v2450, %v2666
      %v2777 = vadd.f32 %v2451, %v2671
      %v2778 = vadd.f32 %v2452, %v2674
      %v2779 = vadd.f32 %v2453, %v2679
      %v2780 = vadd.f32 %v2454, %v2682
      %v2781 = vadd.f32 %v2455, %v2687
      %v2782 = vadd.f32 %v2456, %v2690
      %v2783 = vadd.f32 %v2457, %v2695
      %v2784 = vadd.f32 %v2458, %v2698
      %v2785 = vadd.f32 %v2459, %v2703
      %v2786 = vadd.f32 %v2460, %v2706
      %v2787 = vadd.f32 %v2461, %v2711
      %v2788 = vadd.f32 %v2462, %v2714
      %v2789 = vadd.f32 %v2463, %v2719
      %v2790 = vadd.f32 %v2464, %v2722
      %v2791 = vadd.f32 %v2465, %v2727
      %v2792 = vadd.f32 %v2466, %v2730
      %v2793 = vadd.f32 %v2467, %v2735
      %v2794 = vadd.f32 %v2468, %v2738
      %v2795 = vadd.f32 %v2469, %v2743
      %v2796 = vadd.f32 %v2470, %v2746
      %v2797 = vadd.f32 %v2471, %v2751
      %v2798 = vadd.f32 %v2472, %v2754
      %v2799 = vadd.f32 %v2473, %v2759
      %v2800 = vadd.f32 %v2474, %v2762
      %v2801 = vld [vmem:[%s244 + $0x26] sm:$0xff]
      %v2802 = vld [vmem:[%s244 + $0x2e] sm:$0xff]
      %v2803 = vld [vmem:[%s244 + $0x36] sm:$0xff]
      %v2804 = vld [vmem:[%s244 + $0x3e] sm:$0xff]
      %v2805 = vld [vmem:[%s244 + $0x46] sm:$0xff]
      %v2806 = vld [vmem:[%s244 + $0x4e] sm:$0xff]
      %v2807 = vld [vmem:[%s244 + $0x56] sm:$0xff]
      %v2808 = vld [vmem:[%s244 + $0x5e] sm:$0xff]
      %v2809 = vld [vmem:[%s244 + $0x66] sm:$0xff]
      %v2810 = vld [vmem:[%s244 + $0x6e] sm:$0xff]
      %v2811 = vld [vmem:[%s244 + $0x76] sm:$0xff]
      %v2812 = vld [vmem:[%s244 + $0x7e] sm:$0xff]
      %v2813 = vld [vmem:[%s244 + $0x86] sm:$0xff]
      %v2814 = vld [vmem:[%s244 + $0x8e] sm:$0xff]
      %v2815 = vld [vmem:[%s244 + $0x96] sm:$0xff]
      %v2816 = vld [vmem:[%s244 + $0x9e] sm:$0xff]
      %v2817 = vld [vmem:[%s244 + $0xa6] sm:$0xff]
      %v2818 = vld [vmem:[%s244 + $0xae] sm:$0xff]
      %v2819 = vld [vmem:[%s244 + $0xb6] sm:$0xff]
      %v2820 = vld [vmem:[%s244 + $0xbe] sm:$0xff]
      %v2821 = vld [vmem:[%s244 + $0xc6] sm:$0xff]
      %v2822 = vld [vmem:[%s244 + $0xce] sm:$0xff]
      %v2823 = vld [vmem:[%s244 + $0xd6] sm:$0xff]
      %v2824 = vld [vmem:[%s244 + $0xde] sm:$0xff]
      %v2825 = vld [vmem:[%s244 + $0xe6] sm:$0xff]
      %v2826 = vld [vmem:[%s244 + $0xee] sm:$0xff]
      %v2827 = vld [vmem:[%s244 + $0xf6] sm:$0xff]
      %v2828 = vld [vmem:[%s244 + $0xfe] sm:$0xff]
      %v2829 = vld [vmem:[%s244 + $0x106] sm:$0xff]
      %v2830 = vld [vmem:[%s244 + $0x10e] sm:$0xff]
      %v2831 = vld [vmem:[%s244 + $0x116] sm:$0xff]
      %v2832 = vld [vmem:[%s244 + $0x11e] sm:$0xff]
      %v2833 = vld [vmem:[%s244 + $0x126] sm:$0xff]
      %v2834 = vld [vmem:[%s244 + $0x12e] sm:$0xff]
      %v2835 = vld [vmem:[%s244 + $0x136] sm:$0xff]
      %v2836 = vld [vmem:[%s244 + $0x13e] sm:$0xff]
      %v2837 = vpack.c.bf16 %v2802, %v2801
      %v2838 = vpack.c.bf16 %v2804, %v2803
      %v2839 = vpack.c.bf16 %v2806, %v2805
      %v2840 = vpack.c.bf16 %v2808, %v2807
      %v2841 = vpack.c.bf16 %v2810, %v2809
      %v2842 = vpack.c.bf16 %v2812, %v2811
      %v2843 = vpack.c.bf16 %v2814, %v2813
      %v2844 = vpack.c.bf16 %v2816, %v2815
      %v2845 = vpack.c.bf16 %v2818, %v2817
      %v2846 = vpack.c.bf16 %v2820, %v2819
      %v2847 = vpack.c.bf16 %v2822, %v2821
      %v2848 = vpack.c.bf16 %v2824, %v2823
      %v2849 = vpack.c.bf16 %v2826, %v2825
      %v2850 = vpack.c.bf16 %v2828, %v2827
      %v2851 = vpack.c.bf16 %v2830, %v2829
      %v2852 = vpack.c.bf16 %v2832, %v2831
      %v2853 = vpack.c.bf16 %v2834, %v2833
      %v2854 = vpack.c.bf16 %v2836, %v2835
      %s2855 = scalar_lea.vmem %s248, 32
      %v2856 = vld [vmem:[%s2855] sm:$0xf]
      %v2858 = vsel %vm375, %v2837, 0
      %v2861 = vsel %vm375, %v2838, 0
      %v2864 = vsel %vm375, %v2839, 0
      %v2867 = vsel %vm375, %v2840, 0
      %v2870 = vsel %vm375, %v2841, 0
      %v2873 = vsel %vm375, %v2842, 0
      %v2876 = vsel %vm375, %v2843, 0
      %v2879 = vsel %vm375, %v2844, 0
      %v2882 = vsel %vm375, %v2845, 0
      %v2885 = vsel %vm375, %v2846, 0
      %v2888 = vsel %vm375, %v2847, 0
      %v2891 = vsel %vm375, %v2848, 0
      %v2894 = vsel %vm375, %v2849, 0
      %v2897 = vsel %vm375, %v2850, 0
      %v2900 = vsel %vm375, %v2851, 0
      %v2903 = vsel %vm375, %v2852, 0
      %v2906 = vsel %vm375, %v2853, 0
      %v2909 = vsel %vm375, %v2854, 0
      %v2912 = vsel %vm430, %v2856, 0
      %2914 = vmatprep.subr.bf16.mxu0 0
      %2915 = vmatpush1.bf16.msra.mxu0 0
      %2916 = vmatprep.subr.bf16.mxu0 0
      %2917 = vmatpush1.bf16.msra.mxu0 0
      %2918 = vmatprep.subr.bf16.mxu0 0
      %2919 = vmatpush1.bf16.msra.mxu0 0
      %2920 = vmatprep.subr.bf16.mxu0 0
      %2921 = vmatpush1.bf16.msra.mxu0 0
      %2922 = vmatprep.subr.bf16.mxu0 0
      %2923 = vmatpush1.bf16.msra.mxu0 0
      %2924 = vmatprep.subr.bf16.mxu0 0
      %2925 = vmatpush1.bf16.msra.mxu0 0
      %2926 = vmatprep.subr.bf16.mxu0 0
      %2927 = vmatpush1.bf16.msra.mxu0 0
      %2928 = vmatprep.subr.bf16.mxu0 0
      %2929 = vmatpush1.bf16.msra.mxu0 %v2912
      %2930 = vmatprep.subr.bf16.mxu0 0
      %2931 = vmatpush2.bf16.msra.mxu0 0
      %2932 = vmatprep.subr.bf16.mxu0 0
      %2933 = vmatpush2.bf16.msra.mxu0 0
      %2934 = vmatprep.subr.bf16.mxu0 0
      %2935 = vmatpush2.bf16.msra.mxu0 0
      %2936 = vmatprep.subr.bf16.mxu0 0
      %2937 = vmatpush2.bf16.msra.mxu0 0
      %2938 = vmatprep.subr.bf16.mxu0 0
      %2939 = vmatpush2.bf16.msra.mxu0 0
      %2940 = vmatprep.subr.bf16.mxu0 0
      %2941 = vmatpush2.bf16.msra.mxu0 0
      %2942 = vmatprep.subr.bf16.mxu0 0
      %2943 = vmatpush2.bf16.msra.mxu0 0
      %2944 = vmatprep.subr.bf16.mxu0 0
      %2945 = vmatpush2.bf16.msra.mxu0 0
      %2946 = vmatprep.mubr.bf16.mxu0 0
      %2947 = vmatmul.mubr.bf16.gmra.mxu0 %v2858
      %v2948 = vpop.f32.mrf.mxu0
      %v2949 = vadd.f32 0.0, %v2948
      %v2950 = vpop.f32.mrf.mxu0
      %v2951 = vpop.f32.mrf.mxu0
      %v2952 = vadd.f32 0.0, %v2951
      %v2953 = vpop.f32.mrf.mxu0
      %2954 = vmatprep.mubr.bf16.mxu0 0
      %2955 = vmatmul.mubr.bf16.gmra.mxu0 %v2861
      %v2956 = vpop.f32.mrf.mxu0
      %v2957 = vadd.f32 0.0, %v2956
      %v2958 = vpop.f32.mrf.mxu0
      %v2959 = vpop.f32.mrf.mxu0
      %v2960 = vadd.f32 0.0, %v2959
      %v2961 = vpop.f32.mrf.mxu0
      %2962 = vmatprep.mubr.bf16.mxu0 0
      %2963 = vmatmul.mubr.bf16.gmra.mxu0 %v2864
      %v2964 = vpop.f32.mrf.mxu0
      %v2965 = vadd.f32 0.0, %v2964
      %v2966 = vpop.f32.mrf.mxu0
      %v2967 = vpop.f32.mrf.mxu0
      %v2968 = vadd.f32 0.0, %v2967
      %v2969 = vpop.f32.mrf.mxu0
      %2970 = vmatprep.mubr.bf16.mxu0 0
      %2971 = vmatmul.mubr.bf16.gmra.mxu0 %v2867
      %v2972 = vpop.f32.mrf.mxu0
      %v2973 = vadd.f32 0.0, %v2972
      %v2974 = vpop.f32.mrf.mxu0
      %v2975 = vpop.f32.mrf.mxu0
      %v2976 = vadd.f32 0.0, %v2975
      %v2977 = vpop.f32.mrf.mxu0
      %2978 = vmatprep.mubr.bf16.mxu0 0
      %2979 = vmatmul.mubr.bf16.gmra.mxu0 %v2870
      %v2980 = vpop.f32.mrf.mxu0
      %v2981 = vadd.f32 0.0, %v2980
      %v2982 = vpop.f32.mrf.mxu0
      %v2983 = vpop.f32.mrf.mxu0
      %v2984 = vadd.f32 0.0, %v2983
      %v2985 = vpop.f32.mrf.mxu0
      %2986 = vmatprep.mubr.bf16.mxu0 0
      %2987 = vmatmul.mubr.bf16.gmra.mxu0 %v2873
      %v2988 = vpop.f32.mrf.mxu0
      %v2989 = vadd.f32 0.0, %v2988
      %v2990 = vpop.f32.mrf.mxu0
      %v2991 = vpop.f32.mrf.mxu0
      %v2992 = vadd.f32 0.0, %v2991
      %v2993 = vpop.f32.mrf.mxu0
      %2994 = vmatprep.mubr.bf16.mxu0 0
      %2995 = vmatmul.mubr.bf16.gmra.mxu0 %v2876
      %v2996 = vpop.f32.mrf.mxu0
      %v2997 = vadd.f32 0.0, %v2996
      %v2998 = vpop.f32.mrf.mxu0
      %v2999 = vpop.f32.mrf.mxu0
      %v3000 = vadd.f32 0.0, %v2999
      %v3001 = vpop.f32.mrf.mxu0
      %3002 = vmatprep.mubr.bf16.mxu0 0
      %3003 = vmatmul.mubr.bf16.gmra.mxu0 %v2879
      %v3004 = vpop.f32.mrf.mxu0
      %v3005 = vadd.f32 0.0, %v3004
      %v3006 = vpop.f32.mrf.mxu0
      %v3007 = vpop.f32.mrf.mxu0
      %v3008 = vadd.f32 0.0, %v3007
      %v3009 = vpop.f32.mrf.mxu0
      %3010 = vmatprep.mubr.bf16.mxu0 0
      %3011 = vmatmul.mubr.bf16.gmra.mxu0 %v2882
      %v3012 = vpop.f32.mrf.mxu0
      %v3013 = vadd.f32 0.0, %v3012
      %v3014 = vpop.f32.mrf.mxu0
      %v3015 = vpop.f32.mrf.mxu0
      %v3016 = vadd.f32 0.0, %v3015
      %v3017 = vpop.f32.mrf.mxu0
      %3018 = vmatprep.mubr.bf16.mxu0 0
      %3019 = vmatmul.mubr.bf16.gmra.mxu0 %v2885
      %v3020 = vpop.f32.mrf.mxu0
      %v3021 = vadd.f32 0.0, %v3020
      %v3022 = vpop.f32.mrf.mxu0
      %v3023 = vpop.f32.mrf.mxu0
      %v3024 = vadd.f32 0.0, %v3023
      %v3025 = vpop.f32.mrf.mxu0
      %3026 = vmatprep.mubr.bf16.mxu0 0
      %3027 = vmatmul.mubr.bf16.gmra.mxu0 %v2888
      %v3028 = vpop.f32.mrf.mxu0
      %v3029 = vadd.f32 0.0, %v3028
      %v3030 = vpop.f32.mrf.mxu0
      %v3031 = vpop.f32.mrf.mxu0
      %v3032 = vadd.f32 0.0, %v3031
      %v3033 = vpop.f32.mrf.mxu0
      %3034 = vmatprep.mubr.bf16.mxu0 0
      %3035 = vmatmul.mubr.bf16.gmra.mxu0 %v2891
      %v3036 = vpop.f32.mrf.mxu0
      %v3037 = vadd.f32 0.0, %v3036
      %v3038 = vpop.f32.mrf.mxu0
      %v3039 = vpop.f32.mrf.mxu0
      %v3040 = vadd.f32 0.0, %v3039
      %v3041 = vpop.f32.mrf.mxu0
      %3042 = vmatprep.mubr.bf16.mxu0 0
      %3043 = vmatmul.mubr.bf16.gmra.mxu0 %v2894
      %v3044 = vpop.f32.mrf.mxu0
      %v3045 = vadd.f32 0.0, %v3044
      %v3046 = vpop.f32.mrf.mxu0
      %v3047 = vpop.f32.mrf.mxu0
      %v3048 = vadd.f32 0.0, %v3047
      %v3049 = vpop.f32.mrf.mxu0
      %3050 = vmatprep.mubr.bf16.mxu0 0
      %3051 = vmatmul.mubr.bf16.gmra.mxu0 %v2897
      %v3052 = vpop.f32.mrf.mxu0
      %v3053 = vadd.f32 0.0, %v3052
      %v3054 = vpop.f32.mrf.mxu0
      %v3055 = vpop.f32.mrf.mxu0
      %v3056 = vadd.f32 0.0, %v3055
      %v3057 = vpop.f32.mrf.mxu0
      %3058 = vmatprep.mubr.bf16.mxu0 0
      %3059 = vmatmul.mubr.bf16.gmra.mxu0 %v2900
      %v3060 = vpop.f32.mrf.mxu0
      %v3061 = vadd.f32 0.0, %v3060
      %v3062 = vpop.f32.mrf.mxu0
      %v3063 = vpop.f32.mrf.mxu0
      %v3064 = vadd.f32 0.0, %v3063
      %v3065 = vpop.f32.mrf.mxu0
      %3066 = vmatprep.mubr.bf16.mxu0 0
      %3067 = vmatmul.mubr.bf16.gmra.mxu0 %v2903
      %v3068 = vpop.f32.mrf.mxu0
      %v3069 = vadd.f32 0.0, %v3068
      %v3070 = vpop.f32.mrf.mxu0
      %v3071 = vpop.f32.mrf.mxu0
      %v3072 = vadd.f32 0.0, %v3071
      %v3073 = vpop.f32.mrf.mxu0
      %3074 = vmatprep.mubr.bf16.mxu0 0
      %3075 = vmatmul.mubr.bf16.gmra.mxu0 %v2906
      %v3076 = vpop.f32.mrf.mxu0
      %v3077 = vadd.f32 0.0, %v3076
      %v3078 = vpop.f32.mrf.mxu0
      %v3079 = vpop.f32.mrf.mxu0
      %v3080 = vadd.f32 0.0, %v3079
      %v3081 = vpop.f32.mrf.mxu0
      %3082 = vmatprep.mubr.bf16.mxu0 0
      %3083 = vmatmul.mubr.bf16.gmra.mxu0 %v2909
      %v3084 = vpop.f32.mrf.mxu0
      %v3085 = vadd.f32 0.0, %v3084
      %v3086 = vpop.f32.mrf.mxu0
      %v3087 = vpop.f32.mrf.mxu0
      %v3088 = vadd.f32 0.0, %v3087
      %v3089 = vpop.f32.mrf.mxu0
      %3090 = vdwg.mxu0
      %v3091 = vadd.f32 %v2765, %v2949
      %v3092 = vadd.f32 %v2766, %v2952
      %v3093 = vadd.f32 %v2767, %v2957
      %v3094 = vadd.f32 %v2768, %v2960
      %v3095 = vadd.f32 %v2769, %v2965
      %v3096 = vadd.f32 %v2770, %v2968
      %v3097 = vadd.f32 %v2771, %v2973
      %v3098 = vadd.f32 %v2772, %v2976
      %v3099 = vadd.f32 %v2773, %v2981
      %v3100 = vadd.f32 %v2774, %v2984
      %v3101 = vadd.f32 %v2775, %v2989
      %v3102 = vadd.f32 %v2776, %v2992
      %v3103 = vadd.f32 %v2777, %v2997
      %v3104 = vadd.f32 %v2778, %v3000
      %v3105 = vadd.f32 %v2779, %v3005
      %v3106 = vadd.f32 %v2780, %v3008
      %v3107 = vadd.f32 %v2781, %v3013
      %v3108 = vadd.f32 %v2782, %v3016
      %v3109 = vadd.f32 %v2783, %v3021
      %v3110 = vadd.f32 %v2784, %v3024
      %v3111 = vadd.f32 %v2785, %v3029
      %v3112 = vadd.f32 %v2786, %v3032
      %v3113 = vadd.f32 %v2787, %v3037
      %v3114 = vadd.f32 %v2788, %v3040
      %v3115 = vadd.f32 %v2789, %v3045
      %v3116 = vadd.f32 %v2790, %v3048
      %v3117 = vadd.f32 %v2791, %v3053
      %v3118 = vadd.f32 %v2792, %v3056
      %v3119 = vadd.f32 %v2793, %v3061
      %v3120 = vadd.f32 %v2794, %v3064
      %v3121 = vadd.f32 %v2795, %v3069
      %v3122 = vadd.f32 %v2796, %v3072
      %v3123 = vadd.f32 %v2797, %v3077
      %v3124 = vadd.f32 %v2798, %v3080
      %v3125 = vadd.f32 %v2799, %v3085
      %v3126 = vadd.f32 %v2800, %v3088
      %v3127 = vld [vmem:[%s251] sm:$0x1]
      %v3129 = vlaneseq
      %v3130 = vshrl.u32 %v3129, 7
      %v3131 = vsub.s32 0, %v3130
      %v3132 = vrot.slane %v3127, %v3131
      %v3134 = vmul.f32 %v3091, %v3132
      %v3135 = vmul.f32 %v3092, %v3132
      %v3136 = vmul.f32 %v3093, %v3132
      %v3137 = vmul.f32 %v3094, %v3132
      %v3138 = vmul.f32 %v3095, %v3132
      %v3139 = vmul.f32 %v3096, %v3132
      %v3140 = vmul.f32 %v3097, %v3132
      %v3141 = vmul.f32 %v3098, %v3132
      %v3142 = vmul.f32 %v3099, %v3132
      %v3143 = vmul.f32 %v3100, %v3132
      %v3144 = vmul.f32 %v3101, %v3132
      %v3145 = vmul.f32 %v3102, %v3132
      %v3146 = vmul.f32 %v3103, %v3132
      %v3147 = vmul.f32 %v3104, %v3132
      %v3148 = vmul.f32 %v3105, %v3132
      %v3149 = vmul.f32 %v3106, %v3132
      %v3150 = vmul.f32 %v3107, %v3132
      %v3151 = vmul.f32 %v3108, %v3132
      %v3152 = vmul.f32 %v3109, %v3132
      %v3153 = vmul.f32 %v3110, %v3132
      %v3154 = vmul.f32 %v3111, %v3132
      %v3155 = vmul.f32 %v3112, %v3132
      %v3156 = vmul.f32 %v3113, %v3132
      %v3157 = vmul.f32 %v3114, %v3132
      %v3158 = vmul.f32 %v3115, %v3132
      %v3159 = vmul.f32 %v3116, %v3132
      %v3160 = vmul.f32 %v3117, %v3132
      %v3161 = vmul.f32 %v3118, %v3132
      %v3162 = vmul.f32 %v3119, %v3132
      %v3163 = vmul.f32 %v3120, %v3132
      %v3164 = vmul.f32 %v3121, %v3132
      %v3165 = vmul.f32 %v3122, %v3132
      %v3166 = vmul.f32 %v3123, %v3132
      %v3167 = vmul.f32 %v3124, %v3132
      %v3168 = vmul.f32 %v3125, %v3132
      %v3169 = vmul.f32 %v3126, %v3132
      %v3170 = vld [vmem:[%s254] sm:$0x1]
      %v3172 = vlaneseq
      %v3173 = vshrl.u32 %v3172, 7
      %v3174 = vsub.s32 0, %v3173
      %v3175 = vrot.slane %v3170, %v3174
      %v3177 = vadd.f32 %v3134, %v3175
      %v3178 = vadd.f32 %v3135, %v3175
      %v3179 = vadd.f32 %v3136, %v3175
      %v3180 = vadd.f32 %v3137, %v3175
      %v3181 = vadd.f32 %v3138, %v3175
      %v3182 = vadd.f32 %v3139, %v3175
      %v3183 = vadd.f32 %v3140, %v3175
      %v3184 = vadd.f32 %v3141, %v3175
      %v3185 = vadd.f32 %v3142, %v3175
      %v3186 = vadd.f32 %v3143, %v3175
      %v3187 = vadd.f32 %v3144, %v3175
      %v3188 = vadd.f32 %v3145, %v3175
      %v3189 = vadd.f32 %v3146, %v3175
      %v3190 = vadd.f32 %v3147, %v3175
      %v3191 = vadd.f32 %v3148, %v3175
      %v3192 = vadd.f32 %v3149, %v3175
      %v3193 = vadd.f32 %v3150, %v3175
      %v3194 = vadd.f32 %v3151, %v3175
      %v3195 = vadd.f32 %v3152, %v3175
      %v3196 = vadd.f32 %v3153, %v3175
      %v3197 = vadd.f32 %v3154, %v3175
      %v3198 = vadd.f32 %v3155, %v3175
      %v3199 = vadd.f32 %v3156, %v3175
      %v3200 = vadd.f32 %v3157, %v3175
      %v3201 = vadd.f32 %v3158, %v3175
      %v3202 = vadd.f32 %v3159, %v3175
      %v3203 = vadd.f32 %v3160, %v3175
      %v3204 = vadd.f32 %v3161, %v3175
      %v3205 = vadd.f32 %v3162, %v3175
      %v3206 = vadd.f32 %v3163, %v3175
      %v3207 = vadd.f32 %v3164, %v3175
      %v3208 = vadd.f32 %v3165, %v3175
      %v3209 = vadd.f32 %v3166, %v3175
      %v3210 = vadd.f32 %v3167, %v3175
      %v3211 = vadd.f32 %v3168, %v3175
      %v3212 = vadd.f32 %v3169, %v3175
      %v3213 = vxor.u32 %v3177, 2147483648
      %v3214 = vxor.u32 %v3178, 2147483648
      %v3215 = vxor.u32 %v3179, 2147483648
      %v3216 = vxor.u32 %v3180, 2147483648
      %v3217 = vxor.u32 %v3181, 2147483648
      %v3218 = vxor.u32 %v3182, 2147483648
      %v3219 = vxor.u32 %v3183, 2147483648
      %v3220 = vxor.u32 %v3184, 2147483648
      %v3221 = vxor.u32 %v3185, 2147483648
      %v3222 = vxor.u32 %v3186, 2147483648
      %v3223 = vxor.u32 %v3187, 2147483648
      %v3224 = vxor.u32 %v3188, 2147483648
      %v3225 = vxor.u32 %v3189, 2147483648
      %v3226 = vxor.u32 %v3190, 2147483648
      %v3227 = vxor.u32 %v3191, 2147483648
      %v3228 = vxor.u32 %v3192, 2147483648
      %v3229 = vxor.u32 %v3193, 2147483648
      %v3230 = vxor.u32 %v3194, 2147483648
      %v3231 = vxor.u32 %v3195, 2147483648
      %v3232 = vxor.u32 %v3196, 2147483648
      %v3233 = vxor.u32 %v3197, 2147483648
      %v3234 = vxor.u32 %v3198, 2147483648
      %v3235 = vxor.u32 %v3199, 2147483648
      %v3236 = vxor.u32 %v3200, 2147483648
      %v3237 = vxor.u32 %v3201, 2147483648
      %v3238 = vxor.u32 %v3202, 2147483648
      %v3239 = vxor.u32 %v3203, 2147483648
      %v3240 = vxor.u32 %v3204, 2147483648
      %v3241 = vxor.u32 %v3205, 2147483648
      %v3242 = vxor.u32 %v3206, 2147483648
      %v3243 = vxor.u32 %v3207, 2147483648
      %v3244 = vxor.u32 %v3208, 2147483648
      %v3245 = vxor.u32 %v3209, 2147483648
      %v3246 = vxor.u32 %v3210, 2147483648
      %v3247 = vxor.u32 %v3211, 2147483648
      %v3248 = vxor.u32 %v3212, 2147483648
      %v3249 = vmul.f32 %v3213, 1.442695
      %v3250 = vpow.pop %v3249
      %v3251 = vmul.f32 %v3214, 1.442695
      %v3252 = vpow.pop %v3251
      %v3253 = vmul.f32 %v3215, 1.442695
      %v3254 = vpow.pop %v3253
      %v3255 = vmul.f32 %v3216, 1.442695
      %v3256 = vpow.pop %v3255
      %v3257 = vmul.f32 %v3217, 1.442695
      %v3258 = vpow.pop %v3257
      %v3259 = vmul.f32 %v3218, 1.442695
      %v3260 = vpow.pop %v3259
      %v3261 = vmul.f32 %v3219, 1.442695
      %v3262 = vpow.pop %v3261
      %v3263 = vmul.f32 %v3220, 1.442695
      %v3264 = vpow.pop %v3263
      %v3265 = vmul.f32 %v3221, 1.442695
      %v3266 = vpow.pop %v3265
      %v3267 = vmul.f32 %v3222, 1.442695
      %v3268 = vpow.pop %v3267
      %v3269 = vmul.f32 %v3223, 1.442695
      %v3270 = vpow.pop %v3269
      %v3271 = vmul.f32 %v3224, 1.442695
      %v3272 = vpow.pop %v3271
      %v3273 = vmul.f32 %v3225, 1.442695
      %v3274 = vpow.pop %v3273
      %v3275 = vmul.f32 %v3226, 1.442695
      %v3276 = vpow.pop %v3275
      %v3277 = vmul.f32 %v3227, 1.442695
      %v3278 = vpow.pop %v3277
      %v3279 = vmul.f32 %v3228, 1.442695
      %v3280 = vpow.pop %v3279
      %v3281 = vmul.f32 %v3229, 1.442695
      %v3282 = vpow.pop %v3281
      %v3283 = vmul.f32 %v3230, 1.442695
      %v3284 = vpow.pop %v3283
      %v3285 = vmul.f32 %v3231, 1.442695
      %v3286 = vpow.pop %v3285
      %v3287 = vmul.f32 %v3232, 1.442695
      %v3288 = vpow.pop %v3287
      %v3289 = vmul.f32 %v3233, 1.442695
      %v3290 = vpow.pop %v3289
      %v3291 = vmul.f32 %v3234, 1.442695
      %v3292 = vpow.pop %v3291
      %v3293 = vmul.f32 %v3235, 1.442695
      %v3294 = vpow.pop %v3293
      %v3295 = vmul.f32 %v3236, 1.442695
      %v3296 = vpow.pop %v3295
      %v3297 = vmul.f32 %v3237, 1.442695
      %v3298 = vpow.pop %v3297
      %v3299 = vmul.f32 %v3238, 1.442695
      %v3300 = vpow.pop %v3299
      %v3301 = vmul.f32 %v3239, 1.442695
      %v3302 = vpow.pop %v3301
      %v3303 = vmul.f32 %v3240, 1.442695
      %v3304 = vpow.pop %v3303
      %v3305 = vmul.f32 %v3241, 1.442695
      %v3306 = vpow.pop %v3305
      %v3307 = vmul.f32 %v3242, 1.442695
      %v3308 = vpow.pop %v3307
      %v3309 = vmul.f32 %v3243, 1.442695
      %v3310 = vpow.pop %v3309
      %v3311 = vmul.f32 %v3244, 1.442695
      %v3312 = vpow.pop %v3311
      %v3313 = vmul.f32 %v3245, 1.442695
      %v3314 = vpow.pop %v3313
      %v3315 = vmul.f32 %v3246, 1.442695
      %v3316 = vpow.pop %v3315
      %v3317 = vmul.f32 %v3247, 1.442695
      %v3318 = vpow.pop %v3317
      %v3319 = vmul.f32 %v3248, 1.442695
      %v3320 = vpow.pop %v3319
      %v3321 = vadd.f32 %v3250, 1.0
      %v3322 = vadd.f32 %v3252, 1.0
      %v3323 = vadd.f32 %v3254, 1.0
      %v3324 = vadd.f32 %v3256, 1.0
      %v3325 = vadd.f32 %v3258, 1.0
      %v3326 = vadd.f32 %v3260, 1.0
      %v3327 = vadd.f32 %v3262, 1.0
      %v3328 = vadd.f32 %v3264, 1.0
      %v3329 = vadd.f32 %v3266, 1.0
      %v3330 = vadd.f32 %v3268, 1.0
      %v3331 = vadd.f32 %v3270, 1.0
      %v3332 = vadd.f32 %v3272, 1.0
      %v3333 = vadd.f32 %v3274, 1.0
      %v3334 = vadd.f32 %v3276, 1.0
      %v3335 = vadd.f32 %v3278, 1.0
      %v3336 = vadd.f32 %v3280, 1.0
      %v3337 = vadd.f32 %v3282, 1.0
      %v3338 = vadd.f32 %v3284, 1.0
      %v3339 = vadd.f32 %v3286, 1.0
      %v3340 = vadd.f32 %v3288, 1.0
      %v3341 = vadd.f32 %v3290, 1.0
      %v3342 = vadd.f32 %v3292, 1.0
      %v3343 = vadd.f32 %v3294, 1.0
      %v3344 = vadd.f32 %v3296, 1.0
      %v3345 = vadd.f32 %v3298, 1.0
      %v3346 = vadd.f32 %v3300, 1.0
      %v3347 = vadd.f32 %v3302, 1.0
      %v3348 = vadd.f32 %v3304, 1.0
      %v3349 = vadd.f32 %v3306, 1.0
      %v3350 = vadd.f32 %v3308, 1.0
      %v3351 = vadd.f32 %v3310, 1.0
      %v3352 = vadd.f32 %v3312, 1.0
      %v3353 = vadd.f32 %v3314, 1.0
      %v3354 = vadd.f32 %v3316, 1.0
      %v3355 = vadd.f32 %v3318, 1.0
      %v3356 = vadd.f32 %v3320, 1.0
      %v3357 = vrcp.pop %v3321
      %v3358 = vmul.f32 1.0, %v3357
      %v3359 = vrcp.pop %v3322
      %v3360 = vmul.f32 1.0, %v3359
      %v3361 = vrcp.pop %v3323
      %v3362 = vmul.f32 1.0, %v3361
      %v3363 = vrcp.pop %v3324
      %v3364 = vmul.f32 1.0, %v3363
      %v3365 = vrcp.pop %v3325
      %v3366 = vmul.f32 1.0, %v3365
      %v3367 = vrcp.pop %v3326
      %v3368 = vmul.f32 1.0, %v3367
      %v3369 = vrcp.pop %v3327
      %v3370 = vmul.f32 1.0, %v3369
      %v3371 = vrcp.pop %v3328
      %v3372 = vmul.f32 1.0, %v3371
      %v3373 = vrcp.pop %v3329
      %v3374 = vmul.f32 1.0, %v3373
      %v3375 = vrcp.pop %v3330
      %v3376 = vmul.f32 1.0, %v3375
      %v3377 = vrcp.pop %v3331
      %v3378 = vmul.f32 1.0, %v3377
      %v3379 = vrcp.pop %v3332
      %v3380 = vmul.f32 1.0, %v3379
      %v3381 = vrcp.pop %v3333
      %v3382 = vmul.f32 1.0, %v3381
      %v3383 = vrcp.pop %v3334
      %v3384 = vmul.f32 1.0, %v3383
      %v3385 = vrcp.pop %v3335
      %v3386 = vmul.f32 1.0, %v3385
      %v3387 = vrcp.pop %v3336
      %v3388 = vmul.f32 1.0, %v3387
      %v3389 = vrcp.pop %v3337
      %v3390 = vmul.f32 1.0, %v3389
      %v3391 = vrcp.pop %v3338
      %v3392 = vmul.f32 1.0, %v3391
      %v3393 = vrcp.pop %v3339
      %v3394 = vmul.f32 1.0, %v3393
      %v3395 = vrcp.pop %v3340
      %v3396 = vmul.f32 1.0, %v3395
      %v3397 = vrcp.pop %v3341
      %v3398 = vmul.f32 1.0, %v3397
      %v3399 = vrcp.pop %v3342
      %v3400 = vmul.f32 1.0, %v3399
      %v3401 = vrcp.pop %v3343
      %v3402 = vmul.f32 1.0, %v3401
      %v3403 = vrcp.pop %v3344
      %v3404 = vmul.f32 1.0, %v3403
      %v3405 = vrcp.pop %v3345
      %v3406 = vmul.f32 1.0, %v3405
      %v3407 = vrcp.pop %v3346
      %v3408 = vmul.f32 1.0, %v3407
      %v3409 = vrcp.pop %v3347
      %v3410 = vmul.f32 1.0, %v3409
      %v3411 = vrcp.pop %v3348
      %v3412 = vmul.f32 1.0, %v3411
      %v3413 = vrcp.pop %v3349
      %v3414 = vmul.f32 1.0, %v3413
      %v3415 = vrcp.pop %v3350
      %v3416 = vmul.f32 1.0, %v3415
      %v3417 = vrcp.pop %v3351
      %v3418 = vmul.f32 1.0, %v3417
      %v3419 = vrcp.pop %v3352
      %v3420 = vmul.f32 1.0, %v3419
      %v3421 = vrcp.pop %v3353
      %v3422 = vmul.f32 1.0, %v3421
      %v3423 = vrcp.pop %v3354
      %v3424 = vmul.f32 1.0, %v3423
      %v3425 = vrcp.pop %v3355
      %v3426 = vmul.f32 1.0, %v3425
      %v3427 = vrcp.pop %v3356
      %v3428 = vmul.f32 1.0, %v3427
      %v3429 = vmul.f32 %v3177, %v3358
      %v3430 = vmul.f32 %v3178, %v3360
      %v3431 = vmul.f32 %v3179, %v3362
      %v3432 = vmul.f32 %v3180, %v3364
      %v3433 = vmul.f32 %v3181, %v3366
      %v3434 = vmul.f32 %v3182, %v3368
      %v3435 = vmul.f32 %v3183, %v3370
      %v3436 = vmul.f32 %v3184, %v3372
      %v3437 = vmul.f32 %v3185, %v3374
      %v3438 = vmul.f32 %v3186, %v3376
      %v3439 = vmul.f32 %v3187, %v3378
      %v3440 = vmul.f32 %v3188, %v3380
      %v3441 = vmul.f32 %v3189, %v3382
      %v3442 = vmul.f32 %v3190, %v3384
      %v3443 = vmul.f32 %v3191, %v3386
      %v3444 = vmul.f32 %v3192, %v3388
      %v3445 = vmul.f32 %v3193, %v3390
      %v3446 = vmul.f32 %v3194, %v3392
      %v3447 = vmul.f32 %v3195, %v3394
      %v3448 = vmul.f32 %v3196, %v3396
      %v3449 = vmul.f32 %v3197, %v3398
      %v3450 = vmul.f32 %v3198, %v3400
      %v3451 = vmul.f32 %v3199, %v3402
      %v3452 = vmul.f32 %v3200, %v3404
      %v3453 = vmul.f32 %v3201, %v3406
      %v3454 = vmul.f32 %v3202, %v3408
      %v3455 = vmul.f32 %v3203, %v3410
      %v3456 = vmul.f32 %v3204, %v3412
      %v3457 = vmul.f32 %v3205, %v3414
      %v3458 = vmul.f32 %v3206, %v3416
      %v3459 = vmul.f32 %v3207, %v3418
      %v3460 = vmul.f32 %v3208, %v3420
      %v3461 = vmul.f32 %v3209, %v3422
      %v3462 = vmul.f32 %v3210, %v3424
      %v3463 = vmul.f32 %v3211, %v3426
      %v3464 = vmul.f32 %v3212, %v3428
      %v3465 = vpack.c.bf16 %v3430, %v3429
      %v3466 = vpack.c.bf16 %v3432, %v3431
      %v3467 = vpack.c.bf16 %v3434, %v3433
      %v3468 = vpack.c.bf16 %v3436, %v3435
      %v3469 = vpack.c.bf16 %v3438, %v3437
      %v3470 = vpack.c.bf16 %v3440, %v3439
      %v3471 = vpack.c.bf16 %v3442, %v3441
      %v3472 = vpack.c.bf16 %v3444, %v3443
      %v3473 = vpack.c.bf16 %v3446, %v3445
      %v3474 = vpack.c.bf16 %v3448, %v3447
      %v3475 = vpack.c.bf16 %v3450, %v3449
      %v3476 = vpack.c.bf16 %v3452, %v3451
      %v3477 = vpack.c.bf16 %v3454, %v3453
      %v3478 = vpack.c.bf16 %v3456, %v3455
      %v3479 = vpack.c.bf16 %v3458, %v3457
      %v3480 = vpack.c.bf16 %v3460, %v3459
      %v3481 = vpack.c.bf16 %v3462, %v3461
      %v3482 = vpack.c.bf16 %v3464, %v3463
      %v3501 = vunpack.c.l.b16 %v3465
      %v3502 = vunpack.c.h.b16 %v3465
      %v3503 = vunpack.c.l.b16 %v3466
      %v3504 = vunpack.c.h.b16 %v3466
      %v3505 = vunpack.c.l.b16 %v3467
      %v3506 = vunpack.c.h.b16 %v3467
      %v3507 = vunpack.c.l.b16 %v3468
      %v3508 = vunpack.c.h.b16 %v3468
      %v3509 = vunpack.c.l.b16 %v3469
      %v3510 = vunpack.c.h.b16 %v3469
      %v3511 = vunpack.c.l.b16 %v3470
      %v3512 = vunpack.c.h.b16 %v3470
      %v3513 = vunpack.c.l.b16 %v3471
      %v3514 = vunpack.c.h.b16 %v3471
      %v3515 = vunpack.c.l.b16 %v3472
      %v3516 = vunpack.c.h.b16 %v3472
      %v3517 = vunpack.c.l.b16 %v3473
      %v3518 = vunpack.c.h.b16 %v3473
      %v3519 = vunpack.c.l.b16 %v3474
      %v3520 = vunpack.c.h.b16 %v3474
      %v3521 = vunpack.c.l.b16 %v3475
      %v3522 = vunpack.c.h.b16 %v3475
      %v3523 = vunpack.c.l.b16 %v3476
      %v3524 = vunpack.c.h.b16 %v3476
      %v3525 = vunpack.c.l.b16 %v3477
      %v3526 = vunpack.c.h.b16 %v3477
      %v3527 = vunpack.c.l.b16 %v3478
      %v3528 = vunpack.c.h.b16 %v3478
      %v3529 = vunpack.c.l.b16 %v3479
      %v3530 = vunpack.c.h.b16 %v3479
      %v3531 = vunpack.c.l.b16 %v3480
      %v3532 = vunpack.c.h.b16 %v3480
      %v3533 = vunpack.c.l.b16 %v3481
      %v3534 = vunpack.c.h.b16 %v3481
      %v3535 = vunpack.c.l.b16 %v3482
      %v3536 = vunpack.c.h.b16 %v3482
      %v3537 = vpack.c.b16 %v3501, %v3501
      %v3538 = vpack.c.b16 %v3502, %v3502
      %v3539 = vpack.c.b16 %v3503, %v3503
      %v3540 = vpack.c.b16 %v3504, %v3504
      %v3541 = vpack.c.b16 %v3505, %v3505
      %v3542 = vpack.c.b16 %v3506, %v3506
      %v3543 = vpack.c.b16 %v3507, %v3507
      %v3544 = vpack.c.b16 %v3508, %v3508
      %v3545 = vpack.c.b16 %v3509, %v3509
      %v3546 = vpack.c.b16 %v3510, %v3510
      %v3547 = vpack.c.b16 %v3511, %v3511
      %v3548 = vpack.c.b16 %v3512, %v3512
      %v3549 = vpack.c.b16 %v3513, %v3513
      %v3550 = vpack.c.b16 %v3514, %v3514
      %v3551 = vpack.c.b16 %v3515, %v3515
      %v3552 = vpack.c.b16 %v3516, %v3516
      %v3553 = vpack.c.b16 %v3517, %v3517
      %v3554 = vpack.c.b16 %v3518, %v3518
      %v3555 = vpack.c.b16 %v3519, %v3519
      %v3556 = vpack.c.b16 %v3520, %v3520
      %v3557 = vpack.c.b16 %v3521, %v3521
      %v3558 = vpack.c.b16 %v3522, %v3522
      %v3559 = vpack.c.b16 %v3523, %v3523
      %v3560 = vpack.c.b16 %v3524, %v3524
      %v3561 = vpack.c.b16 %v3525, %v3525
      %v3562 = vpack.c.b16 %v3526, %v3526
      %v3563 = vpack.c.b16 %v3527, %v3527
      %v3564 = vpack.c.b16 %v3528, %v3528
      %v3565 = vpack.c.b16 %v3529, %v3529
      %v3566 = vpack.c.b16 %v3530, %v3530
      %v3567 = vpack.c.b16 %v3531, %v3531
      %v3568 = vpack.c.b16 %v3532, %v3532
      %v3569 = vpack.c.b16 %v3533, %v3533
      %v3570 = vpack.c.b16 %v3534, %v3534
      %v3571 = vpack.c.b16 %v3535, %v3535
      %v3572 = vpack.c.b16 %v3536, %v3536
      %vm3609 = vcmask 125952
      %3610 = vst.msk [vmem:[%s262] sm:$0xf] %vm3609, %v3537
      %3611 = vst.msk [vmem:[%s262 + $0x4] sm:$0xf] %vm3609, %v3538
      %3612 = vst.msk [vmem:[%s262 + $0x8] sm:$0xf] %vm3609, %v3539
      %3613 = vst.msk [vmem:[%s262 + $0xc] sm:$0xf] %vm3609, %v3540
      %3614 = vst.msk [vmem:[%s262 + $0x10] sm:$0xf] %vm3609, %v3541
      %3615 = vst.msk [vmem:[%s262 + $0x14] sm:$0xf] %vm3609, %v3542
      %3616 = vst.msk [vmem:[%s262 + $0x18] sm:$0xf] %vm3609, %v3543
      %3617 = vst.msk [vmem:[%s262 + $0x1c] sm:$0xf] %vm3609, %v3544
      %3618 = vst.msk [vmem:[%s262 + $0x20] sm:$0xf] %vm3609, %v3545
      %3619 = vst.msk [vmem:[%s262 + $0x24] sm:$0xf] %vm3609, %v3546
      %3620 = vst.msk [vmem:[%s262 + $0x28] sm:$0xf] %vm3609, %v3547
      %3621 = vst.msk [vmem:[%s262 + $0x2c] sm:$0xf] %vm3609, %v3548
      %3622 = vst.msk [vmem:[%s262 + $0x30] sm:$0xf] %vm3609, %v3549
      %3623 = vst.msk [vmem:[%s262 + $0x34] sm:$0xf] %vm3609, %v3550
      %3624 = vst.msk [vmem:[%s262 + $0x38] sm:$0xf] %vm3609, %v3551
      %3625 = vst.msk [vmem:[%s262 + $0x3c] sm:$0xf] %vm3609, %v3552
      %3626 = vst.msk [vmem:[%s262 + $0x40] sm:$0xf] %vm3609, %v3553
      %3627 = vst.msk [vmem:[%s262 + $0x44] sm:$0xf] %vm3609, %v3554
      %3628 = vst.msk [vmem:[%s262 + $0x48] sm:$0xf] %vm3609, %v3555
      %3629 = vst.msk [vmem:[%s262 + $0x4c] sm:$0xf] %vm3609, %v3556
      %3630 = vst.msk [vmem:[%s262 + $0x50] sm:$0xf] %vm3609, %v3557
      %3631 = vst.msk [vmem:[%s262 + $0x54] sm:$0xf] %vm3609, %v3558
      %3632 = vst.msk [vmem:[%s262 + $0x58] sm:$0xf] %vm3609, %v3559
      %3633 = vst.msk [vmem:[%s262 + $0x5c] sm:$0xf] %vm3609, %v3560
      %3634 = vst.msk [vmem:[%s262 + $0x60] sm:$0xf] %vm3609, %v3561
      %3635 = vst.msk [vmem:[%s262 + $0x64] sm:$0xf] %vm3609, %v3562
      %3636 = vst.msk [vmem:[%s262 + $0x68] sm:$0xf] %vm3609, %v3563
      %3637 = vst.msk [vmem:[%s262 + $0x6c] sm:$0xf] %vm3609, %v3564
      %3638 = vst.msk [vmem:[%s262 + $0x70] sm:$0xf] %vm3609, %v3565
      %3639 = vst.msk [vmem:[%s262 + $0x74] sm:$0xf] %vm3609, %v3566
      %3640 = vst.msk [vmem:[%s262 + $0x78] sm:$0xf] %vm3609, %v3567
      %3641 = vst.msk [vmem:[%s262 + $0x7c] sm:$0xf] %vm3609, %v3568
      %3642 = vst.msk [vmem:[%s262 + $0x80] sm:$0xf] %vm3609, %v3569
      %3643 = vst.msk [vmem:[%s262 + $0x84] sm:$0xf] %vm3609, %v3570
      %3644 = vst.msk [vmem:[%s262 + $0x88] sm:$0xf] %vm3609, %v3571
      %3645 = vst.msk [vmem:[%s262 + $0x8c] sm:$0xf] %vm3609, %v3572
      %p3646 = scmp.lt.s32.totalorder %s19, 1
      %s3647 = scalar_select %p3646, %s19, 1
      %p3648 = scmp.lt.s32.totalorder %s20, 0
      %s3649 = scalar_select %p3648, %s20, 0
      %s3650 = smul.addr %s3647, 36
      %s3651 = sadd.s32 %s3649, %s3650
      %s3652 = smul.addr %s3651, 4
      %s3653 = scalar_lea.vmem %s4, %s3652
      // Predicated region
      $region37: #{tpu_custom_call.1} parent=35 // pred_check
        %p3654 = pneg %p151
      $region38: #{tpu_custom_call.1} parent=35 // pred_check_branch
        %3656 = sbr.rel (%p3654) target = $region40
      $region39: #{tpu_custom_call.1} parent=35 // pred_region
        _
      $region40: #{tpu_custom_call.1} parent=35 // pred_fallthru
        _
    $region36: #{tpu_custom_call.1} parent=5 // pred_fallthru
      _
    %p3657 = scmp.le.s32.totalorder 2, %s10
    // Predicated region
    $region41: #{tpu_custom_call.1} parent=5 // pred_check
      %p3658 = pneg %p3657
    $region42: #{tpu_custom_call.1} parent=5 // pred_check_branch
      %3660 = sbr.rel (%p3658) target = $region44
    $region43: #{tpu_custom_call.1} parent=5 // pred_region
      %s3661 = ssub.s32 %s10, 2
      // Predicated region
      $region45: #{tpu_custom_call.1} parent=43 // pred_check
        %p3662 = pneg %p157
      $region46: #{tpu_custom_call.1} parent=43 // pred_check_branch
        %3664 = sbr.rel (%p3662) target = $region48
      $region47: #{tpu_custom_call.1} parent=43 // pred_region
        %p3665 = scmp.lt.s32.totalorder %s21, 1
        %s3666 = scalar_select %p3665, %s21, 1
        %p3667 = scmp.lt.s32.totalorder %s22, 0
        %s3668 = scalar_select %p3667, %s22, 0
        %s3669 = smul.addr %s3666, 36
        %s3670 = sadd.s32 %s3668, %s3669
        %s3671 = smul.addr %s3670, 4
        %s3672 = scalar_lea.vmem %s4, %s3671
      $region48: #{tpu_custom_call.1} parent=43 // pred_fallthru
        _
    $region44: #{tpu_custom_call.1} parent=5 // pred_fallthru
      _
  $region6: #{tpu_custom_call.1} parent=0 // loop_footer
    %s14 = sadd.s32 1, %s10
  $region7: #{tpu_custom_call.1} parent=0 // loop_footer_branch
    %9 = sbr.rel target = $region3
  $region8: #{tpu_custom_call.1} parent=0 // loop_exit
    _

</llo_original>
